<compile_context>
chip_gen: v6e
topology: v6e:2x2x1
jax: 0.10.0
libtpu: 0.0.40
codegen_flags: <defaults>
</compile_context>

<pallas_src>
import math

import jax
import jax.numpy as jnp
from jax.experimental import pallas as pl
from jax.experimental.pallas import tpu as pltpu


def _complex_score_kernel(h_idx_ref, r_idx_ref, t_idx_ref,   # (1, 1, B_TILE) int32
                          ent_t_ref,                          # (2D, E) f32, VMEM-resident
                          rel_t_ref,                          # (2D, R) f32, VMEM-resident
                          out_ref):                           # (1, 1, B_TILE) f32
    two_d, E = ent_t_ref.shape
    _, R = rel_t_ref.shape
    D = two_d // 2
    b_tile = out_ref.shape[-1]

    h_idx = h_idx_ref[...].reshape(1, b_tile)
    r_idx = r_idx_ref[...].reshape(1, b_tile)
    t_idx = t_idx_ref[...].reshape(1, b_tile)

    ent_iota = jax.lax.broadcasted_iota(jnp.int32, (E, b_tile), 0)
    rel_iota = jax.lax.broadcasted_iota(jnp.int32, (R, b_tile), 0)

    # One-hot selection matrices for the MXU gather (VPU compare + cast).
    oh_h = (ent_iota == h_idx).astype(jnp.float32)            # (E, B_TILE)
    oh_t = (ent_iota == t_idx).astype(jnp.float32)            # (E, B_TILE)
    oh_r = (rel_iota == r_idx).astype(jnp.float32)            # (R, B_TILE)

    ent_t = ent_t_ref[...]                                    # (2D, E)
    rel_t = rel_t_ref[...]                                    # (2D, R)

    # Gather on the MXU: (2D, E) @ (E, B_TILE) -> (2D, B_TILE); real rows are
    # [0:D], imag rows are [D:2D]. HIGHEST precision keeps the f32 gather exact.
    hp = jax.lax.Precision.HIGHEST
    head = jnp.dot(ent_t, oh_h, preferred_element_type=jnp.float32, precision=hp)
    tail = jnp.dot(ent_t, oh_t, preferred_element_type=jnp.float32, precision=hp)
    rel = jnp.dot(rel_t, oh_r, preferred_element_type=jnp.float32, precision=hp)

    hr, hi = head[:D, :], head[D:, :]
    tr, ti = tail[:D, :], tail[D:, :]
    rr, ri = rel[:D, :], rel[D:, :]

    # Factored ComplEx score (VPU) then sublane reduce over D (XLU) so the
    # per-tile store is a lane-dense (1, B_TILE) slab.
    s = tr * (hr * rr + hi * ri) + ti * (hr * ri - hi * rr)   # (D, B_TILE)
    out_ref[...] = jnp.sum(s, axis=0, keepdims=True).reshape(out_ref.shape)


def complex_score(entity_real, entity_imag, relation_real, relation_imag,
                  head, relation, tail, *, b_tile=256):
    """Fused gather + ComplEx score.

    entity_* : [E, D] float32, relation_* : [R, D] float32,
    head/relation/tail : [B] integer indices.  Returns [B] float32 scores.
    """
    B = int(head.shape[0])
    E, D = entity_real.shape
    R, _ = relation_real.shape

    # Transposed + real/imag-interleaved tables, kept VMEM-resident in-kernel.
    ent_t = jnp.concatenate([entity_real.T, entity_imag.T], axis=0)      # (2D, E)
    rel_t = jnp.concatenate([relation_real.T, relation_imag.T], axis=0)  # (2D, R)

    table_bytes = (ent_t.size + rel_t.size) * 4
    if table_bytes > 32 * 1024 * 1024:
        # TODO(synk): add an HBM-side (scalar-prefetch / manual-DMA) gather path
        # for embedding tables too large to keep VMEM-resident (>32 MiB).
        raise NotImplementedError(
            "embedding tables too large for the VMEM-resident one-hot gather path")

    # Lane-dense output slab: at least 128 scores per grid step.
    b_tile = max(128, min(int(b_tile), pl.cdiv(max(B, 1), 128) * 128))
    num_tiles = pl.cdiv(B, b_tile)
    b_pad = num_tiles * b_tile

    def prep_idx(idx):
        idx = idx.astype(jnp.int32).reshape(-1)
        if b_pad != B:
            idx = jnp.pad(idx, (0, b_pad - B))                # padded rows gather row 0
        return idx.reshape(num_tiles, 1, b_tile)

    h = prep_idx(head)
    r = prep_idx(relation)
    t = prep_idx(tail)

    idx_spec = pl.BlockSpec((1, 1, b_tile), lambda i: (i, 0, 0))

    # Advisory cost: 3 one-hot matmuls + elementwise/reduce; bandwidth-light.
    flops = int(2 * b_pad * 2 * D * (2 * E + R) + 9 * b_pad * D)
    bytes_accessed = int(table_bytes + 4 * b_pad * 4)

    # Per-call VMEM budget: resident tables + one-hots + gathered tiles +
    # double-buffered idx/out blocks, with headroom; sized for v7x (64 MiB).
    work_bytes = table_bytes + 4 * b_tile * (6 * D + 2 * E + 2 * R + 8) * 4 + (4 << 20)
    vmem_limit = int(min(48 * 1024 * 1024, max(32 * 1024 * 1024, work_bytes)))

    out = pl.pallas_call(
        _complex_score_kernel,
        out_shape=jax.ShapeDtypeStruct((num_tiles, 1, b_tile), jnp.float32),
        grid=(num_tiles,),
        in_specs=[
            idx_spec,                                          # head indices
            idx_spec,                                          # relation indices
            idx_spec,                                          # tail indices
            pl.BlockSpec((2 * D, E), lambda i: (0, 0)),        # entity table (resident)
            pl.BlockSpec((2 * D, R), lambda i: (0, 0)),        # relation table (resident)
        ],
        out_specs=pl.BlockSpec((1, 1, b_tile), lambda i: (i, 0, 0)),
        compiler_params=pltpu.CompilerParams(
            dimension_semantics=("parallel",),                 # batch tiles are independent
            vmem_limit_bytes=vmem_limit,
        ),
        cost_estimate=pl.CostEstimate(
            flops=flops, transcendentals=0, bytes_accessed=bytes_accessed),
    )(h, r, t, ent_t, rel_t)

    return out.reshape(b_pad)[:B]


class ComplExPallas:
    """JAX/Pallas port of the PyTorch ComplEx module."""

    def __init__(self, entity_count, relation_count, embedding_dim, key):
        self.embedding_dim = embedding_dim
        k1, k2, k3, k4 = jax.random.split(key, 4)

        def xavier_uniform(k, shape):
            bound = math.sqrt(6.0 / (shape[0] + shape[1]))
            return jax.random.uniform(k, shape, jnp.float32, -bound, bound)

        self.entity_real = xavier_uniform(k1, (entity_count, embedding_dim))
        self.entity_imag = xavier_uniform(k2, (entity_count, embedding_dim))
        self.relation_real = xavier_uniform(k3, (relation_count, embedding_dim))
        self.relation_imag = xavier_uniform(k4, (relation_count, embedding_dim))

    def __call__(self, head, relation, tail):
        # Entire forward (gather + score + reduce) runs inside the Pallas kernel.
        return complex_score(self.entity_real, self.entity_imag,
                             self.relation_real, self.relation_imag,
                             head, relation, tail)


def _reference_score(model, head, relation, tail):
    hr = jnp.take(model.entity_real, head, axis=0)
    hi = jnp.take(model.entity_imag, head, axis=0)
    tr = jnp.take(model.entity_real, tail, axis=0)
    ti = jnp.take(model.entity_imag, tail, axis=0)
    rr = jnp.take(model.relation_real, relation, axis=0)
    ri = jnp.take(model.relation_imag, relation, axis=0)
    return jnp.sum(hr * rr * tr + hi * ri * tr + hr * ri * ti - hi * rr * ti,
                   axis=-1)


if __name__ == "__main__":
    key = jax.random.PRNGKey(0)
    k_params, k_h, k_r, k_t = jax.random.split(key, 4)

    entity_count = 64
    relation_count = 16
    embedding_dim = 128
    batch = 8

    model = ComplExPallas(entity_count, relation_count, embedding_dim, k_params)

    head = jax.random.randint(k_h, (batch,), 0, entity_count, dtype=jnp.int32)
    relation = jax.random.randint(k_r, (batch,), 0, relation_count, dtype=jnp.int32)
    tail = jax.random.randint(k_t, (batch,), 0, entity_count, dtype=jnp.int32)

    scores = jax.block_until_ready(model(head, relation, tail))
    ref = jax.block_until_ready(_reference_score(model, head, relation, tail))

    assert scores.shape == (batch,)
    # Factored formula + one-hot MXU gather reassociate FP ops vs the reference.
    assert jnp.allclose(scores, ref, atol=1e-4, rtol=1e-4), (scores, ref)
    print("KERNEL_OK")
</pallas_src>

<mosaic_0001>
module attributes {stable_mosaic.version = 11 : i64} {
  func.func @_complex_score_kernel(%arg0: i32, %arg1: memref<1x1x128xi32, #tpu.memory_space<vmem>>, %arg2: memref<1x1x128xi32, #tpu.memory_space<vmem>>, %arg3: memref<1x1x128xi32, #tpu.memory_space<vmem>>, %arg4: memref<256x64xf32, #tpu.memory_space<vmem>>, %arg5: memref<256x16xf32, #tpu.memory_space<vmem>>, %arg6: memref<1x1x128xf32, #tpu.memory_space<vmem>>) attributes {dimension_semantics = [#tpu.dimension_semantics<parallel>], iteration_bounds = array<i64: 1>, scalar_prefetch = 0 : i64, scratch_operands = 0 : i64, tpu.core_type = #tpu.core_type<tc>, window_params = [{transform_indices = @transform_0, window_bounds = array<i64: 1, 1, 128>}, {transform_indices = @transform_1, window_bounds = array<i64: 1, 1, 128>}, {transform_indices = @transform_2, window_bounds = array<i64: 1, 1, 128>}, {pipeline_mode = #tpu.pipeline_mode<synchronous>, transform_indices = @transform_3, window_bounds = array<i64: 256, 64>}, {pipeline_mode = #tpu.pipeline_mode<synchronous>, transform_indices = @transform_4, window_bounds = array<i64: 256, 16>}, {transform_indices = @transform_5, window_bounds = array<i64: 1, 1, 128>}]} {
    %c0 = arith.constant 0 : index
    %c0_0 = arith.constant 0 : index
    %c0_1 = arith.constant 0 : index
    %0 = vector.load %arg1[%c0, %c0_0, %c0_1] : memref<1x1x128xi32, #tpu.memory_space<vmem>>, vector<1x1x128xi32>
    %1 = vector.shape_cast %0 : vector<1x1x128xi32> to vector<1x128xi32>
    %c0_2 = arith.constant 0 : index
    %c0_3 = arith.constant 0 : index
    %c0_4 = arith.constant 0 : index
    %2 = vector.load %arg2[%c0_2, %c0_3, %c0_4] : memref<1x1x128xi32, #tpu.memory_space<vmem>>, vector<1x1x128xi32>
    %3 = vector.shape_cast %2 : vector<1x1x128xi32> to vector<1x128xi32>
    %c0_5 = arith.constant 0 : index
    %c0_6 = arith.constant 0 : index
    %c0_7 = arith.constant 0 : index
    %4 = vector.load %arg3[%c0_5, %c0_6, %c0_7] : memref<1x1x128xi32, #tpu.memory_space<vmem>>, vector<1x1x128xi32>
    %5 = vector.shape_cast %4 : vector<1x1x128xi32> to vector<1x128xi32>
    %6 = tpu.iota {dimensions = array<i32: 0>} : vector<64x128xi32>
    %7 = tpu.iota {dimensions = array<i32: 0>} : vector<16x128xi32>
    %8 = vector.broadcast %1 : vector<1x128xi32> to vector<64x128xi32>
    %9 = arith.cmpi eq, %6, %8 : vector<64x128xi32>
    %10 = arith.extui %9 : vector<64x128xi1> to vector<64x128xi32>
    %11 = arith.sitofp %10 : vector<64x128xi32> to vector<64x128xf32>
    %12 = vector.broadcast %5 : vector<1x128xi32> to vector<64x128xi32>
    %13 = arith.cmpi eq, %6, %12 : vector<64x128xi32>
    %14 = arith.extui %13 : vector<64x128xi1> to vector<64x128xi32>
    %15 = arith.sitofp %14 : vector<64x128xi32> to vector<64x128xf32>
    %16 = vector.broadcast %3 : vector<1x128xi32> to vector<16x128xi32>
    %17 = arith.cmpi eq, %7, %16 : vector<16x128xi32>
    %18 = arith.extui %17 : vector<16x128xi1> to vector<16x128xi32>
    %19 = arith.sitofp %18 : vector<16x128xi32> to vector<16x128xf32>
    %c0_8 = arith.constant 0 : index
    %c0_9 = arith.constant 0 : index
    %20 = vector.load %arg4[%c0_8, %c0_9] : memref<256x64xf32, #tpu.memory_space<vmem>>, vector<256x64xf32>
    %c0_10 = arith.constant 0 : index
    %c0_11 = arith.constant 0 : index
    %21 = vector.load %arg5[%c0_10, %c0_11] : memref<256x16xf32, #tpu.memory_space<vmem>>, vector<256x16xf32>
    %cst = arith.constant dense<0.000000e+00> : vector<256x128xf32>
    %22 = tpu.matmul %20, %11, %cst {dimension_numbers = #tpu.dot_dimension_numbers<[1], [0], [0], [1], [0, 0, 1, 1], [], []>, precision = #tpu.contract_precision<fp32>} : vector<256x64xf32>, vector<64x128xf32>, vector<256x128xf32> -> vector<256x128xf32>
    %cst_12 = arith.constant dense<0.000000e+00> : vector<256x128xf32>
    %23 = tpu.matmul %20, %15, %cst_12 {dimension_numbers = #tpu.dot_dimension_numbers<[1], [0], [0], [1], [0, 0, 1, 1], [], []>, precision = #tpu.contract_precision<fp32>} : vector<256x64xf32>, vector<64x128xf32>, vector<256x128xf32> -> vector<256x128xf32>
    %cst_13 = arith.constant dense<0.000000e+00> : vector<256x128xf32>
    %24 = tpu.matmul %21, %19, %cst_13 {dimension_numbers = #tpu.dot_dimension_numbers<[1], [0], [0], [1], [0, 0, 1, 1], [], []>, precision = #tpu.contract_precision<fp32>} : vector<256x16xf32>, vector<16x128xf32>, vector<256x128xf32> -> vector<256x128xf32>
    %25 = vector.extract_strided_slice %22 {offsets = [0, 0], sizes = [128, 128], strides = [1, 1]} : vector<256x128xf32> to vector<128x128xf32>
    %26 = vector.extract_strided_slice %22 {offsets = [128, 0], sizes = [128, 128], strides = [1, 1]} : vector<256x128xf32> to vector<128x128xf32>
    %27 = vector.extract_strided_slice %23 {offsets = [0, 0], sizes = [128, 128], strides = [1, 1]} : vector<256x128xf32> to vector<128x128xf32>
    %28 = vector.extract_strided_slice %23 {offsets = [128, 0], sizes = [128, 128], strides = [1, 1]} : vector<256x128xf32> to vector<128x128xf32>
    %29 = vector.extract_strided_slice %24 {offsets = [0, 0], sizes = [128, 128], strides = [1, 1]} : vector<256x128xf32> to vector<128x128xf32>
    %30 = vector.extract_strided_slice %24 {offsets = [128, 0], sizes = [128, 128], strides = [1, 1]} : vector<256x128xf32> to vector<128x128xf32>
    %31 = arith.mulf %25, %29 : vector<128x128xf32>
    %32 = arith.mulf %26, %30 : vector<128x128xf32>
    %33 = arith.addf %31, %32 : vector<128x128xf32>
    %34 = arith.mulf %27, %33 : vector<128x128xf32>
    %35 = arith.mulf %25, %30 : vector<128x128xf32>
    %36 = arith.mulf %26, %29 : vector<128x128xf32>
    %37 = arith.subf %35, %36 : vector<128x128xf32>
    %38 = arith.mulf %28, %37 : vector<128x128xf32>
    %39 = arith.addf %34, %38 : vector<128x128xf32>
    %cst_14 = arith.constant dense<0.000000e+00> : vector<128xf32>
    %40 = vector.multi_reduction <add>, %39, %cst_14 [0] : vector<128x128xf32> to vector<128xf32>
    %41 = vector.shape_cast %40 : vector<128xf32> to vector<1x128xf32>
    %42 = vector.shape_cast %41 : vector<1x128xf32> to vector<1x1x128xf32>
    %c0_15 = arith.constant 0 : index
    %c0_16 = arith.constant 0 : index
    %c0_17 = arith.constant 0 : index
    %43 = vector.load %arg6[%c0_15, %c0_16, %c0_17] : memref<1x1x128xf32, #tpu.memory_space<vmem>>, vector<1x1x128xf32>
    tpu.vector_store %arg6[%c0_15, %c0_16, %c0_17], %42 {strides = array<i32>} : memref<1x1x128xf32, #tpu.memory_space<vmem>>, vector<1x1x128xf32>,
    return
  }
  func.func @transform_0(%arg0: i32) -> (i32, i32, i32) {
    %c0_i32 = arith.constant 0 : i32
    %c0_i32_0 = arith.constant 0 : i32
    %c0_i32_1 = arith.constant 0 : i32
    return %arg0, %c0_i32, %c0_i32_0 : i32, i32, i32
  }
  func.func @transform_1(%arg0: i32) -> (i32, i32, i32) {
    %c0_i32 = arith.constant 0 : i32
    %c0_i32_0 = arith.constant 0 : i32
    %c0_i32_1 = arith.constant 0 : i32
    return %arg0, %c0_i32, %c0_i32_0 : i32, i32, i32
  }
  func.func @transform_2(%arg0: i32) -> (i32, i32, i32) {
    %c0_i32 = arith.constant 0 : i32
    %c0_i32_0 = arith.constant 0 : i32
    %c0_i32_1 = arith.constant 0 : i32
    return %arg0, %c0_i32, %c0_i32_0 : i32, i32, i32
  }
  func.func @transform_3(%arg0: i32) -> (i32, i32) {
    %c0_i32 = arith.constant 0 : i32
    %c0_i32_0 = arith.constant 0 : i32
    %c0_i32_1 = arith.constant 0 : i32
    return %c0_i32, %c0_i32_0 : i32, i32
  }
  func.func @transform_4(%arg0: i32) -> (i32, i32) {
    %c0_i32 = arith.constant 0 : i32
    %c0_i32_0 = arith.constant 0 : i32
    %c0_i32_1 = arith.constant 0 : i32
    return %c0_i32, %c0_i32_0 : i32, i32
  }
  func.func @transform_5(%arg0: i32) -> (i32, i32, i32) {
    %c0_i32 = arith.constant 0 : i32
    %c0_i32_0 = arith.constant 0 : i32
    %c0_i32_1 = arith.constant 0 : i32
    return %arg0, %c0_i32, %c0_i32_0 : i32, i32, i32
  }
}

</mosaic_0001>

<llo_original>
// kernel: tpu_custom_call.1
$region0: #{tpu_custom_call.1}
  #allocation0 [shape = 'u32[]', space=smem, size = 0x4, offset = 0x4, fixed_abs, tag = 'smem constant byte address 0x4 - core index']
  #allocation1 [shape = 'u32[144,128]{1,0:T(1,128)}', space=vmem, size = 0x12000, scoped, tag = 'internal scratch']
  %s0 = inlined_call_operand.vmem [shape: s32[1,1,128], index: 0, kind: input, shape index: {}]
  %s1 = inlined_call_operand.vmem [shape: s32[1,1,128], index: 1, kind: input, shape index: {}]
  %s2 = inlined_call_operand.vmem [shape: s32[1,1,128], index: 2, kind: input, shape index: {}]
  %s3 = inlined_call_operand.vmem [shape: f32[256,64], index: 3, kind: input, shape index: {}]
  %s4 = inlined_call_operand.vmem [shape: f32[256,16], index: 4, kind: input, shape index: {}]
  %s5 = inlined_call_operand.hbm [shape: f32[1,1,128], index: 5, kind: output, shape index: {}]
  %s6 = sld [smem:[#allocation0]]
  $region30: #{tpu_custom_call.1} parent=0
    _
  %s8 = ssub.s32 1, %s6
  %s9 = scalar_select 0, %s8, %s6
  $region1: #{tpu_custom_call.1} parent=0
    #allocation2 [shape = 'u8[512]{0}', space=vmem, size = 0x400, scoped, tag = 'output window, operand 0, single buffered']
    #allocation3 [shape = 's32[1]{0}', space=sflag, size = 0x4, scoped, tag = 'scoped memory for tpu_custom_call.1']
    %10 = vsyncpa [#allocation3], 0
    // Predicated region
    $region2: #{tpu_custom_call.1} parent=1 // pred_check
      _
    $region3: #{tpu_custom_call.1} parent=1 // pred_check_branch
      %12 = sbr.rel (0) target = $region5
    $region4: #{tpu_custom_call.1} parent=1 // pred_region
      _
    $region5: #{tpu_custom_call.1} parent=1 // pred_fallthru
      _
    // Predicated region
    $region6: #{tpu_custom_call.1} parent=1 // pred_check
      _
    $region7: #{tpu_custom_call.1} parent=1 // pred_check_branch
      %14 = sbr.rel (0) target = $region9
    $region8: #{tpu_custom_call.1} parent=1 // pred_region
      _
    $region9: #{tpu_custom_call.1} parent=1 // pred_fallthru
      _
    // Predicated region
    $region10: #{tpu_custom_call.1} parent=1 // pred_check
      _
    $region11: #{tpu_custom_call.1} parent=1 // pred_check_branch
      %16 = sbr.rel (0) target = $region13
    $region12: #{tpu_custom_call.1} parent=1 // pred_region
      _
    $region13: #{tpu_custom_call.1} parent=1 // pred_fallthru
      _
    // Predicated region
    $region14: #{tpu_custom_call.1} parent=1 // pred_check
      _
    $region15: #{tpu_custom_call.1} parent=1 // pred_check_branch
      %18 = sbr.rel (0) target = $region17
    $region16: #{tpu_custom_call.1} parent=1 // pred_region
      _
    $region17: #{tpu_custom_call.1} parent=1 // pred_fallthru
      _
    // Predicated region
    $region18: #{tpu_custom_call.1} parent=1 // pred_check
      _
    $region19: #{tpu_custom_call.1} parent=1 // pred_check_branch
      %20 = sbr.rel (0) target = $region21
    $region20: #{tpu_custom_call.1} parent=1 // pred_region
      _
    $region21: #{tpu_custom_call.1} parent=1 // pred_fallthru
      _
    %v21 = vld [vmem:[%s0] sm:$0x1]
    %v22 = vld [vmem:[%s1] sm:$0x1]
    %v23 = vld [vmem:[%s2] sm:$0x1]
    %v24 = vlaneseq
    %v25 = vshrl.u32 %v24, 7
    %v26 = vadd.s32 %v25, 8
    %v27 = vadd.s32 %v25, 16
    %v28 = vadd.s32 %v25, 24
    %v29 = vadd.s32 %v25, 32
    %v30 = vadd.s32 %v25, 40
    %v31 = vadd.s32 %v25, 48
    %v32 = vadd.s32 %v25, 56
    %v33 = vlaneseq
    %v34 = vshrl.u32 %v33, 7
    %v35 = vsub.s32 0, %v34
    %v36 = vrot.slane %v21, %v35
    %vm37 = vcmp.eq.s32.totalorder %v25, %v36
    %vm38 = vcmp.eq.s32.totalorder %v26, %v36
    %vm39 = vcmp.eq.s32.totalorder %v27, %v36
    %vm40 = vcmp.eq.s32.totalorder %v28, %v36
    %vm41 = vcmp.eq.s32.totalorder %v29, %v36
    %vm42 = vcmp.eq.s32.totalorder %v30, %v36
    %vm43 = vcmp.eq.s32.totalorder %v31, %v36
    %vm44 = vcmp.eq.s32.totalorder %v32, %v36
    %v45 = vsel %vm37, 1, 0
    %v46 = vsel %vm38, 1, 0
    %v47 = vsel %vm39, 1, 0
    %v48 = vsel %vm40, 1, 0
    %v49 = vsel %vm41, 1, 0
    %v50 = vsel %vm42, 1, 0
    %v51 = vsel %vm43, 1, 0
    %v52 = vsel %vm44, 1, 0
    %v53 = vcvt.s32.f32 %v45
    %v54 = vcvt.s32.f32 %v46
    %v55 = vcvt.s32.f32 %v47
    %v56 = vcvt.s32.f32 %v48
    %v57 = vcvt.s32.f32 %v49
    %v58 = vcvt.s32.f32 %v50
    %v59 = vcvt.s32.f32 %v51
    %v60 = vcvt.s32.f32 %v52
    %v61 = vlaneseq
    %v62 = vshrl.u32 %v61, 7
    %v63 = vsub.s32 0, %v62
    %v64 = vrot.slane %v23, %v63
    %vm65 = vcmp.eq.s32.totalorder %v25, %v64
    %vm66 = vcmp.eq.s32.totalorder %v26, %v64
    %vm67 = vcmp.eq.s32.totalorder %v27, %v64
    %vm68 = vcmp.eq.s32.totalorder %v28, %v64
    %vm69 = vcmp.eq.s32.totalorder %v29, %v64
    %vm70 = vcmp.eq.s32.totalorder %v30, %v64
    %vm71 = vcmp.eq.s32.totalorder %v31, %v64
    %vm72 = vcmp.eq.s32.totalorder %v32, %v64
    %v73 = vsel %vm65, 1, 0
    %v74 = vsel %vm66, 1, 0
    %v75 = vsel %vm67, 1, 0
    %v76 = vsel %vm68, 1, 0
    %v77 = vsel %vm69, 1, 0
    %v78 = vsel %vm70, 1, 0
    %v79 = vsel %vm71, 1, 0
    %v80 = vsel %vm72, 1, 0
    %v81 = vcvt.s32.f32 %v73
    %v82 = vcvt.s32.f32 %v74
    %v83 = vcvt.s32.f32 %v75
    %v84 = vcvt.s32.f32 %v76
    %v85 = vcvt.s32.f32 %v77
    %v86 = vcvt.s32.f32 %v78
    %v87 = vcvt.s32.f32 %v79
    %v88 = vcvt.s32.f32 %v80
    %v89 = vlaneseq
    %v90 = vshrl.u32 %v89, 7
    %v91 = vsub.s32 0, %v90
    %v92 = vrot.slane %v22, %v91
    %vm93 = vcmp.eq.s32.totalorder %v25, %v92
    %vm94 = vcmp.eq.s32.totalorder %v26, %v92
    %v95 = vsel %vm93, 1, 0
    %v96 = vsel %vm94, 1, 0
    %v97 = vcvt.s32.f32 %v95
    %v98 = vcvt.s32.f32 %v96
    %v99 = vld [vmem:[%s3] sm:$0xff]
    %v100 = vld [vmem:[%s3 + $0x8] sm:$0xff]
    %v101 = vld [vmem:[%s3 + $0x10] sm:$0xff]
    %v102 = vld [vmem:[%s3 + $0x18] sm:$0xff]
    %v103 = vld [vmem:[%s3 + $0x20] sm:$0xff]
    %v104 = vld [vmem:[%s3 + $0x28] sm:$0xff]
    %v105 = vld [vmem:[%s3 + $0x30] sm:$0xff]
    %v106 = vld [vmem:[%s3 + $0x38] sm:$0xff]
    %v107 = vld [vmem:[%s3 + $0x40] sm:$0xff]
    %v108 = vld [vmem:[%s3 + $0x48] sm:$0xff]
    %v109 = vld [vmem:[%s3 + $0x50] sm:$0xff]
    %v110 = vld [vmem:[%s3 + $0x58] sm:$0xff]
    %v111 = vld [vmem:[%s3 + $0x60] sm:$0xff]
    %v112 = vld [vmem:[%s3 + $0x68] sm:$0xff]
    %v113 = vld [vmem:[%s3 + $0x70] sm:$0xff]
    %v114 = vld [vmem:[%s3 + $0x78] sm:$0xff]
    %v115 = vld [vmem:[%s3 + $0x80] sm:$0xff]
    %v116 = vld [vmem:[%s3 + $0x88] sm:$0xff]
    %v117 = vld [vmem:[%s3 + $0x90] sm:$0xff]
    %v118 = vld [vmem:[%s3 + $0x98] sm:$0xff]
    %v119 = vld [vmem:[%s3 + $0xa0] sm:$0xff]
    %v120 = vld [vmem:[%s3 + $0xa8] sm:$0xff]
    %v121 = vld [vmem:[%s3 + $0xb0] sm:$0xff]
    %v122 = vld [vmem:[%s3 + $0xb8] sm:$0xff]
    %v123 = vld [vmem:[%s3 + $0xc0] sm:$0xff]
    %v124 = vld [vmem:[%s3 + $0xc8] sm:$0xff]
    %v125 = vld [vmem:[%s3 + $0xd0] sm:$0xff]
    %v126 = vld [vmem:[%s3 + $0xd8] sm:$0xff]
    %v127 = vld [vmem:[%s3 + $0xe0] sm:$0xff]
    %v128 = vld [vmem:[%s3 + $0xe8] sm:$0xff]
    %v129 = vld [vmem:[%s3 + $0xf0] sm:$0xff]
    %v130 = vld [vmem:[%s3 + $0xf8] sm:$0xff]
    %v131 = vld [vmem:[%s4] sm:$0xff]
    %v132 = vld [vmem:[%s4 + $0x8] sm:$0xff]
    %v133 = vld [vmem:[%s4 + $0x10] sm:$0xff]
    %v134 = vld [vmem:[%s4 + $0x18] sm:$0xff]
    %v135 = vld [vmem:[%s4 + $0x20] sm:$0xff]
    %v136 = vld [vmem:[%s4 + $0x28] sm:$0xff]
    %v137 = vld [vmem:[%s4 + $0x30] sm:$0xff]
    %v138 = vld [vmem:[%s4 + $0x38] sm:$0xff]
    %v139 = vld [vmem:[%s4 + $0x40] sm:$0xff]
    %v140 = vld [vmem:[%s4 + $0x48] sm:$0xff]
    %v141 = vld [vmem:[%s4 + $0x50] sm:$0xff]
    %v142 = vld [vmem:[%s4 + $0x58] sm:$0xff]
    %v143 = vld [vmem:[%s4 + $0x60] sm:$0xff]
    %v144 = vld [vmem:[%s4 + $0x68] sm:$0xff]
    %v145 = vld [vmem:[%s4 + $0x70] sm:$0xff]
    %v146 = vld [vmem:[%s4 + $0x78] sm:$0xff]
    %v147 = vld [vmem:[%s4 + $0x80] sm:$0xff]
    %v148 = vld [vmem:[%s4 + $0x88] sm:$0xff]
    %v149 = vld [vmem:[%s4 + $0x90] sm:$0xff]
    %v150 = vld [vmem:[%s4 + $0x98] sm:$0xff]
    %v151 = vld [vmem:[%s4 + $0xa0] sm:$0xff]
    %v152 = vld [vmem:[%s4 + $0xa8] sm:$0xff]
    %v153 = vld [vmem:[%s4 + $0xb0] sm:$0xff]
    %v154 = vld [vmem:[%s4 + $0xb8] sm:$0xff]
    %v155 = vld [vmem:[%s4 + $0xc0] sm:$0xff]
    %v156 = vld [vmem:[%s4 + $0xc8] sm:$0xff]
    %v157 = vld [vmem:[%s4 + $0xd0] sm:$0xff]
    %v158 = vld [vmem:[%s4 + $0xd8] sm:$0xff]
    %v159 = vld [vmem:[%s4 + $0xe0] sm:$0xff]
    %v160 = vld [vmem:[%s4 + $0xe8] sm:$0xff]
    %v161 = vld [vmem:[%s4 + $0xf0] sm:$0xff]
    %v162 = vld [vmem:[%s4 + $0xf8] sm:$0xff]
    %vm163 = vcmask 523264
    %v165 = vsel %vm163, %v99, 0
    %v168 = vsel %vm163, %v100, 0
    %v171 = vsel %vm163, %v101, 0
    %v174 = vsel %vm163, %v102, 0
    %v177 = vsel %vm163, %v103, 0
    %v180 = vsel %vm163, %v104, 0
    %v183 = vsel %vm163, %v105, 0
    %v186 = vsel %vm163, %v106, 0
    %v189 = vsel %vm163, %v107, 0
    %v192 = vsel %vm163, %v108, 0
    %v195 = vsel %vm163, %v109, 0
    %v198 = vsel %vm163, %v110, 0
    %v201 = vsel %vm163, %v111, 0
    %v204 = vsel %vm163, %v112, 0
    %v207 = vsel %vm163, %v113, 0
    %v210 = vsel %vm163, %v114, 0
    %v213 = vsel %vm163, %v115, 0
    %v216 = vsel %vm163, %v116, 0
    %v219 = vsel %vm163, %v117, 0
    %v222 = vsel %vm163, %v118, 0
    %v225 = vsel %vm163, %v119, 0
    %v228 = vsel %vm163, %v120, 0
    %v231 = vsel %vm163, %v121, 0
    %v234 = vsel %vm163, %v122, 0
    %v237 = vsel %vm163, %v123, 0
    %v240 = vsel %vm163, %v124, 0
    %v243 = vsel %vm163, %v125, 0
    %v246 = vsel %vm163, %v126, 0
    %v249 = vsel %vm163, %v127, 0
    %v252 = vsel %vm163, %v128, 0
    %v255 = vsel %vm163, %v129, 0
    %v258 = vsel %vm163, %v130, 0
    %260 = vmatprep.subr.mxu0 0.0
    %261 = vmatpush1.msra.mxu0 0.0
    %262 = vmatprep.subr.mxu0 0.0
    %263 = vmatpush1.msra.mxu0 0.0
    %264 = vmatprep.subr.mxu0 0.0
    %265 = vmatpush1.msra.mxu0 0.0
    %266 = vmatprep.subr.mxu0 0.0
    %267 = vmatpush1.msra.mxu0 0.0
    %268 = vmatprep.subr.mxu0 0.0
    %269 = vmatpush1.msra.mxu0 0.0
    %270 = vmatprep.subr.mxu0 0.0
    %271 = vmatpush1.msra.mxu0 0.0
    %272 = vmatprep.subr.mxu0 0.0
    %273 = vmatpush1.msra.mxu0 0.0
    %274 = vmatprep.subr.mxu0 0.0
    %275 = vmatpush1.msra.mxu0 0.0
    %276 = vmatprep.subr.mxu0 0.0
    %v277 = vand.u32 %v60, 4294901760
    %278 = vmatpush1.msra.mxu0 %v277
    %279 = vmatprep.subr.mxu0 0.0
    %v280 = vand.u32 %v59, 4294901760
    %281 = vmatpush1.msra.mxu0 %v280
    %282 = vmatprep.subr.mxu0 0.0
    %v283 = vand.u32 %v58, 4294901760
    %284 = vmatpush1.msra.mxu0 %v283
    %285 = vmatprep.subr.mxu0 0.0
    %v286 = vand.u32 %v57, 4294901760
    %287 = vmatpush1.msra.mxu0 %v286
    %288 = vmatprep.subr.mxu0 0.0
    %v289 = vand.u32 %v56, 4294901760
    %290 = vmatpush1.msra.mxu0 %v289
    %291 = vmatprep.subr.mxu0 0.0
    %v292 = vand.u32 %v55, 4294901760
    %293 = vmatpush1.msra.mxu0 %v292
    %294 = vmatprep.subr.mxu0 0.0
    %v295 = vand.u32 %v54, 4294901760
    %296 = vmatpush1.msra.mxu0 %v295
    %297 = vmatprep.subr.mxu0 0.0
    %v298 = vand.u32 %v53, 4294901760
    %299 = vmatpush1.msra.mxu0 %v298
    %300 = vmatprep.subr.mxu0 0.0
    %301 = vmatpush2.msra.mxu0 0.0
    %302 = vmatprep.subr.mxu0 0.0
    %303 = vmatpush2.msra.mxu0 0.0
    %304 = vmatprep.subr.mxu0 0.0
    %305 = vmatpush2.msra.mxu0 0.0
    %306 = vmatprep.subr.mxu0 0.0
    %307 = vmatpush2.msra.mxu0 0.0
    %308 = vmatprep.subr.mxu0 0.0
    %309 = vmatpush2.msra.mxu0 0.0
    %310 = vmatprep.subr.mxu0 0.0
    %311 = vmatpush2.msra.mxu0 0.0
    %312 = vmatprep.subr.mxu0 0.0
    %313 = vmatpush2.msra.mxu0 0.0
    %314 = vmatprep.subr.mxu0 0.0
    %315 = vmatpush2.msra.mxu0 0.0
    %316 = vmatprep.subr.mxu0 0.0
    %317 = vmatpush2.msra.mxu0 0.0
    %318 = vmatprep.subr.mxu0 0.0
    %319 = vmatpush2.msra.mxu0 0.0
    %320 = vmatprep.subr.mxu0 0.0
    %321 = vmatpush2.msra.mxu0 0.0
    %322 = vmatprep.subr.mxu0 0.0
    %323 = vmatpush2.msra.mxu0 0.0
    %324 = vmatprep.subr.mxu0 0.0
    %325 = vmatpush2.msra.mxu0 0.0
    %326 = vmatprep.subr.mxu0 0.0
    %327 = vmatpush2.msra.mxu0 0.0
    %328 = vmatprep.subr.mxu0 0.0
    %329 = vmatpush2.msra.mxu0 0.0
    %330 = vmatprep.subr.mxu0 0.0
    %331 = vmatpush2.msra.mxu0 0.0
    %332 = vmatprep.mubr.f32.mxu0 0.0
    %v333 = vand.u32 %v165, 4294901760
    %v334 = vsub.f32 %v165, %v333
    %v335 = vand.u32 %v334, 4294901760
    %v336 = vsub.f32 %v334, %v335
    %v337 = vand.u32 %v336, 4294901760
    %338 = vmatmul.mubr.f32.gmra.mxu0 %v337
    %v339 = vpop.f32.mrf.mxu0
    %v340 = vadd.f32 0.0, %v339
    %v341 = vpop.f32.mrf.mxu0
    %342 = vmatprep.mubr.f32.mxu0 0.0
    %v343 = vand.u32 %v168, 4294901760
    %v344 = vsub.f32 %v168, %v343
    %v345 = vand.u32 %v344, 4294901760
    %v346 = vsub.f32 %v344, %v345
    %v347 = vand.u32 %v346, 4294901760
    %348 = vmatmul.mubr.f32.gmra.mxu0 %v347
    %v349 = vpop.f32.mrf.mxu0
    %v350 = vadd.f32 0.0, %v349
    %v351 = vpop.f32.mrf.mxu0
    %352 = vmatprep.mubr.f32.mxu0 0.0
    %v353 = vand.u32 %v171, 4294901760
    %v354 = vsub.f32 %v171, %v353
    %v355 = vand.u32 %v354, 4294901760
    %v356 = vsub.f32 %v354, %v355
    %v357 = vand.u32 %v356, 4294901760
    %358 = vmatmul.mubr.f32.gmra.mxu0 %v357
    %v359 = vpop.f32.mrf.mxu0
    %v360 = vadd.f32 0.0, %v359
    %v361 = vpop.f32.mrf.mxu0
    %362 = vmatprep.mubr.f32.mxu0 0.0
    %v363 = vand.u32 %v174, 4294901760
    %v364 = vsub.f32 %v174, %v363
    %v365 = vand.u32 %v364, 4294901760
    %v366 = vsub.f32 %v364, %v365
    %v367 = vand.u32 %v366, 4294901760
    %368 = vmatmul.mubr.f32.gmra.mxu0 %v367
    %v369 = vpop.f32.mrf.mxu0
    %v370 = vadd.f32 0.0, %v369
    %v371 = vpop.f32.mrf.mxu0
    %372 = vmatprep.mubr.f32.mxu0 0.0
    %v373 = vand.u32 %v177, 4294901760
    %v374 = vsub.f32 %v177, %v373
    %v375 = vand.u32 %v374, 4294901760
    %v376 = vsub.f32 %v374, %v375
    %v377 = vand.u32 %v376, 4294901760
    %378 = vmatmul.mubr.f32.gmra.mxu0 %v377
    %v379 = vpop.f32.mrf.mxu0
    %v380 = vadd.f32 0.0, %v379
    %v381 = vpop.f32.mrf.mxu0
    %382 = vmatprep.mubr.f32.mxu0 0.0
    %v383 = vand.u32 %v180, 4294901760
    %v384 = vsub.f32 %v180, %v383
    %v385 = vand.u32 %v384, 4294901760
    %v386 = vsub.f32 %v384, %v385
    %v387 = vand.u32 %v386, 4294901760
    %388 = vmatmul.mubr.f32.gmra.mxu0 %v387
    %v389 = vpop.f32.mrf.mxu0
    %v390 = vadd.f32 0.0, %v389
    %v391 = vpop.f32.mrf.mxu0
    %392 = vmatprep.mubr.f32.mxu0 0.0
    %v393 = vand.u32 %v183, 4294901760
    %v394 = vsub.f32 %v183, %v393
    %v395 = vand.u32 %v394, 4294901760
    %v396 = vsub.f32 %v394, %v395
    %v397 = vand.u32 %v396, 4294901760
    %398 = vmatmul.mubr.f32.gmra.mxu0 %v397
    %v399 = vpop.f32.mrf.mxu0
    %v400 = vadd.f32 0.0, %v399
    %v401 = vpop.f32.mrf.mxu0
    %402 = vmatprep.mubr.f32.mxu0 0.0
    %v403 = vand.u32 %v186, 4294901760
    %v404 = vsub.f32 %v186, %v403
    %v405 = vand.u32 %v404, 4294901760
    %v406 = vsub.f32 %v404, %v405
    %v407 = vand.u32 %v406, 4294901760
    %408 = vmatmul.mubr.f32.gmra.mxu0 %v407
    %v409 = vpop.f32.mrf.mxu0
    %v410 = vadd.f32 0.0, %v409
    %v411 = vpop.f32.mrf.mxu0
    %412 = vmatprep.mubr.f32.mxu0 0.0
    %v413 = vand.u32 %v189, 4294901760
    %v414 = vsub.f32 %v189, %v413
    %v415 = vand.u32 %v414, 4294901760
    %v416 = vsub.f32 %v414, %v415
    %v417 = vand.u32 %v416, 4294901760
    %418 = vmatmul.mubr.f32.gmra.mxu0 %v417
    %v419 = vpop.f32.mrf.mxu0
    %v420 = vadd.f32 0.0, %v419
    %v421 = vpop.f32.mrf.mxu0
    %422 = vmatprep.mubr.f32.mxu0 0.0
    %v423 = vand.u32 %v192, 4294901760
    %v424 = vsub.f32 %v192, %v423
    %v425 = vand.u32 %v424, 4294901760
    %v426 = vsub.f32 %v424, %v425
    %v427 = vand.u32 %v426, 4294901760
    %428 = vmatmul.mubr.f32.gmra.mxu0 %v427
    %v429 = vpop.f32.mrf.mxu0
    %v430 = vadd.f32 0.0, %v429
    %v431 = vpop.f32.mrf.mxu0
    %432 = vmatprep.mubr.f32.mxu0 0.0
    %v433 = vand.u32 %v195, 4294901760
    %v434 = vsub.f32 %v195, %v433
    %v435 = vand.u32 %v434, 4294901760
    %v436 = vsub.f32 %v434, %v435
    %v437 = vand.u32 %v436, 4294901760
    %438 = vmatmul.mubr.f32.gmra.mxu0 %v437
    %v439 = vpop.f32.mrf.mxu0
    %v440 = vadd.f32 0.0, %v439
    %v441 = vpop.f32.mrf.mxu0
    %442 = vmatprep.mubr.f32.mxu0 0.0
    %v443 = vand.u32 %v198, 4294901760
    %v444 = vsub.f32 %v198, %v443
    %v445 = vand.u32 %v444, 4294901760
    %v446 = vsub.f32 %v444, %v445
    %v447 = vand.u32 %v446, 4294901760
    %448 = vmatmul.mubr.f32.gmra.mxu0 %v447
    %v449 = vpop.f32.mrf.mxu0
    %v450 = vadd.f32 0.0, %v449
    %v451 = vpop.f32.mrf.mxu0
    %452 = vmatprep.mubr.f32.mxu0 0.0
    %v453 = vand.u32 %v201, 4294901760
    %v454 = vsub.f32 %v201, %v453
    %v455 = vand.u32 %v454, 4294901760
    %v456 = vsub.f32 %v454, %v455
    %v457 = vand.u32 %v456, 4294901760
    %458 = vmatmul.mubr.f32.gmra.mxu0 %v457
    %v459 = vpop.f32.mrf.mxu0
    %v460 = vadd.f32 0.0, %v459
    %v461 = vpop.f32.mrf.mxu0
    %462 = vmatprep.mubr.f32.mxu0 0.0
    %v463 = vand.u32 %v204, 4294901760
    %v464 = vsub.f32 %v204, %v463
    %v465 = vand.u32 %v464, 4294901760
    %v466 = vsub.f32 %v464, %v465
    %v467 = vand.u32 %v466, 4294901760
    %468 = vmatmul.mubr.f32.gmra.mxu0 %v467
    %v469 = vpop.f32.mrf.mxu0
    %v470 = vadd.f32 0.0, %v469
    %v471 = vpop.f32.mrf.mxu0
    %472 = vmatprep.mubr.f32.mxu0 0.0
    %v473 = vand.u32 %v207, 4294901760
    %v474 = vsub.f32 %v207, %v473
    %v475 = vand.u32 %v474, 4294901760
    %v476 = vsub.f32 %v474, %v475
    %v477 = vand.u32 %v476, 4294901760
    %478 = vmatmul.mubr.f32.gmra.mxu0 %v477
    %v479 = vpop.f32.mrf.mxu0
    %v480 = vadd.f32 0.0, %v479
    %v481 = vpop.f32.mrf.mxu0
    %482 = vmatprep.mubr.f32.mxu0 0.0
    %v483 = vand.u32 %v210, 4294901760
    %v484 = vsub.f32 %v210, %v483
    %v485 = vand.u32 %v484, 4294901760
    %v486 = vsub.f32 %v484, %v485
    %v487 = vand.u32 %v486, 4294901760
    %488 = vmatmul.mubr.f32.gmra.mxu0 %v487
    %v489 = vpop.f32.mrf.mxu0
    %v490 = vadd.f32 0.0, %v489
    %v491 = vpop.f32.mrf.mxu0
    %492 = vmatprep.mubr.f32.mxu0 0.0
    %v493 = vand.u32 %v213, 4294901760
    %v494 = vsub.f32 %v213, %v493
    %v495 = vand.u32 %v494, 4294901760
    %v496 = vsub.f32 %v494, %v495
    %v497 = vand.u32 %v496, 4294901760
    %498 = vmatmul.mubr.f32.gmra.mxu0 %v497
    %v499 = vpop.f32.mrf.mxu0
    %v500 = vadd.f32 0.0, %v499
    %v501 = vpop.f32.mrf.mxu0
    %502 = vmatprep.mubr.f32.mxu0 0.0
    %v503 = vand.u32 %v216, 4294901760
    %v504 = vsub.f32 %v216, %v503
    %v505 = vand.u32 %v504, 4294901760
    %v506 = vsub.f32 %v504, %v505
    %v507 = vand.u32 %v506, 4294901760
    %508 = vmatmul.mubr.f32.gmra.mxu0 %v507
    %v509 = vpop.f32.mrf.mxu0
    %v510 = vadd.f32 0.0, %v509
    %v511 = vpop.f32.mrf.mxu0
    %512 = vmatprep.mubr.f32.mxu0 0.0
    %v513 = vand.u32 %v219, 4294901760
    %v514 = vsub.f32 %v219, %v513
    %v515 = vand.u32 %v514, 4294901760
    %v516 = vsub.f32 %v514, %v515
    %v517 = vand.u32 %v516, 4294901760
    %518 = vmatmul.mubr.f32.gmra.mxu0 %v517
    %v519 = vpop.f32.mrf.mxu0
    %v520 = vadd.f32 0.0, %v519
    %v521 = vpop.f32.mrf.mxu0
    %522 = vmatprep.mubr.f32.mxu0 0.0
    %v523 = vand.u32 %v222, 4294901760
    %v524 = vsub.f32 %v222, %v523
    %v525 = vand.u32 %v524, 4294901760
    %v526 = vsub.f32 %v524, %v525
    %v527 = vand.u32 %v526, 4294901760
    %528 = vmatmul.mubr.f32.gmra.mxu0 %v527
    %v529 = vpop.f32.mrf.mxu0
    %v530 = vadd.f32 0.0, %v529
    %v531 = vpop.f32.mrf.mxu0
    %532 = vmatprep.mubr.f32.mxu0 0.0
    %v533 = vand.u32 %v225, 4294901760
    %v534 = vsub.f32 %v225, %v533
    %v535 = vand.u32 %v534, 4294901760
    %v536 = vsub.f32 %v534, %v535
    %v537 = vand.u32 %v536, 4294901760
    %538 = vmatmul.mubr.f32.gmra.mxu0 %v537
    %v539 = vpop.f32.mrf.mxu0
    %v540 = vadd.f32 0.0, %v539
    %v541 = vpop.f32.mrf.mxu0
    %542 = vmatprep.mubr.f32.mxu0 0.0
    %v543 = vand.u32 %v228, 4294901760
    %v544 = vsub.f32 %v228, %v543
    %v545 = vand.u32 %v544, 4294901760
    %v546 = vsub.f32 %v544, %v545
    %v547 = vand.u32 %v546, 4294901760
    %548 = vmatmul.mubr.f32.gmra.mxu0 %v547
    %v549 = vpop.f32.mrf.mxu0
    %v550 = vadd.f32 0.0, %v549
    %v551 = vpop.f32.mrf.mxu0
    %552 = vmatprep.mubr.f32.mxu0 0.0
    %v553 = vand.u32 %v231, 4294901760
    %v554 = vsub.f32 %v231, %v553
    %v555 = vand.u32 %v554, 4294901760
    %v556 = vsub.f32 %v554, %v555
    %v557 = vand.u32 %v556, 4294901760
    %558 = vmatmul.mubr.f32.gmra.mxu0 %v557
    %v559 = vpop.f32.mrf.mxu0
    %v560 = vadd.f32 0.0, %v559
    %v561 = vpop.f32.mrf.mxu0
    %562 = vmatprep.mubr.f32.mxu0 0.0
    %v563 = vand.u32 %v234, 4294901760
    %v564 = vsub.f32 %v234, %v563
    %v565 = vand.u32 %v564, 4294901760
    %v566 = vsub.f32 %v564, %v565
    %v567 = vand.u32 %v566, 4294901760
    %568 = vmatmul.mubr.f32.gmra.mxu0 %v567
    %v569 = vpop.f32.mrf.mxu0
    %v570 = vadd.f32 0.0, %v569
    %v571 = vpop.f32.mrf.mxu0
    %572 = vmatprep.mubr.f32.mxu0 0.0
    %v573 = vand.u32 %v237, 4294901760
    %v574 = vsub.f32 %v237, %v573
    %v575 = vand.u32 %v574, 4294901760
    %v576 = vsub.f32 %v574, %v575
    %v577 = vand.u32 %v576, 4294901760
    %578 = vmatmul.mubr.f32.gmra.mxu0 %v577
    %v579 = vpop.f32.mrf.mxu0
    %v580 = vadd.f32 0.0, %v579
    %v581 = vpop.f32.mrf.mxu0
    %582 = vmatprep.mubr.f32.mxu0 0.0
    %v583 = vand.u32 %v240, 4294901760
    %v584 = vsub.f32 %v240, %v583
    %v585 = vand.u32 %v584, 4294901760
    %v586 = vsub.f32 %v584, %v585
    %v587 = vand.u32 %v586, 4294901760
    %588 = vmatmul.mubr.f32.gmra.mxu0 %v587
    %v589 = vpop.f32.mrf.mxu0
    %v590 = vadd.f32 0.0, %v589
    %v591 = vpop.f32.mrf.mxu0
    %592 = vmatprep.mubr.f32.mxu0 0.0
    %v593 = vand.u32 %v243, 4294901760
    %v594 = vsub.f32 %v243, %v593
    %v595 = vand.u32 %v594, 4294901760
    %v596 = vsub.f32 %v594, %v595
    %v597 = vand.u32 %v596, 4294901760
    %598 = vmatmul.mubr.f32.gmra.mxu0 %v597
    %v599 = vpop.f32.mrf.mxu0
    %v600 = vadd.f32 0.0, %v599
    %v601 = vpop.f32.mrf.mxu0
    %602 = vmatprep.mubr.f32.mxu0 0.0
    %v603 = vand.u32 %v246, 4294901760
    %v604 = vsub.f32 %v246, %v603
    %v605 = vand.u32 %v604, 4294901760
    %v606 = vsub.f32 %v604, %v605
    %v607 = vand.u32 %v606, 4294901760
    %608 = vmatmul.mubr.f32.gmra.mxu0 %v607
    %v609 = vpop.f32.mrf.mxu0
    %v610 = vadd.f32 0.0, %v609
    %v611 = vpop.f32.mrf.mxu0
    %612 = vmatprep.mubr.f32.mxu0 0.0
    %v613 = vand.u32 %v249, 4294901760
    %v614 = vsub.f32 %v249, %v613
    %v615 = vand.u32 %v614, 4294901760
    %v616 = vsub.f32 %v614, %v615
    %v617 = vand.u32 %v616, 4294901760
    %618 = vmatmul.mubr.f32.gmra.mxu0 %v617
    %v619 = vpop.f32.mrf.mxu0
    %v620 = vadd.f32 0.0, %v619
    %v621 = vpop.f32.mrf.mxu0
    %622 = vmatprep.mubr.f32.mxu0 0.0
    %v623 = vand.u32 %v252, 4294901760
    %v624 = vsub.f32 %v252, %v623
    %v625 = vand.u32 %v624, 4294901760
    %v626 = vsub.f32 %v624, %v625
    %v627 = vand.u32 %v626, 4294901760
    %628 = vmatmul.mubr.f32.gmra.mxu0 %v627
    %v629 = vpop.f32.mrf.mxu0
    %v630 = vadd.f32 0.0, %v629
    %v631 = vpop.f32.mrf.mxu0
    %632 = vmatprep.mubr.f32.mxu0 0.0
    %v633 = vand.u32 %v255, 4294901760
    %v634 = vsub.f32 %v255, %v633
    %v635 = vand.u32 %v634, 4294901760
    %v636 = vsub.f32 %v634, %v635
    %v637 = vand.u32 %v636, 4294901760
    %638 = vmatmul.mubr.f32.gmra.mxu0 %v637
    %v639 = vpop.f32.mrf.mxu0
    %v640 = vadd.f32 0.0, %v639
    %v641 = vpop.f32.mrf.mxu0
    %642 = vmatprep.mubr.f32.mxu0 0.0
    %v643 = vand.u32 %v258, 4294901760
    %v644 = vsub.f32 %v258, %v643
    %v645 = vand.u32 %v644, 4294901760
    %v646 = vsub.f32 %v644, %v645
    %v647 = vand.u32 %v646, 4294901760
    %648 = vmatmul.mubr.f32.gmra.mxu0 %v647
    %v649 = vpop.f32.mrf.mxu0
    %v650 = vadd.f32 0.0, %v649
    %v651 = vpop.f32.mrf.mxu0
    %652 = vdwg.mxu0
    %653 = vmatprep.subr.mxu0 0.0
    %654 = vmatpush1.msra.mxu0 0.0
    %655 = vmatprep.subr.mxu0 0.0
    %656 = vmatpush1.msra.mxu0 0.0
    %657 = vmatprep.subr.mxu0 0.0
    %658 = vmatpush1.msra.mxu0 0.0
    %659 = vmatprep.subr.mxu0 0.0
    %660 = vmatpush1.msra.mxu0 0.0
    %661 = vmatprep.subr.mxu0 0.0
    %662 = vmatpush1.msra.mxu0 0.0
    %663 = vmatprep.subr.mxu0 0.0
    %664 = vmatpush1.msra.mxu0 0.0
    %665 = vmatprep.subr.mxu0 0.0
    %666 = vmatpush1.msra.mxu0 0.0
    %667 = vmatprep.subr.mxu0 0.0
    %668 = vmatpush1.msra.mxu0 0.0
    %669 = vmatprep.subr.mxu0 0.0
    %v670 = vand.u32 %v60, 4294901760
    %v671 = vsub.f32 %v60, %v670
    %v672 = vand.u32 %v671, 4294901760
    %v673 = vsub.f32 %v671, %v672
    %v674 = vand.u32 %v673, 4294901760
    %675 = vmatpush1.msra.mxu0 %v674
    %676 = vmatprep.subr.mxu0 0.0
    %v677 = vand.u32 %v59, 4294901760
    %v678 = vsub.f32 %v59, %v677
    %v679 = vand.u32 %v678, 4294901760
    %v680 = vsub.f32 %v678, %v679
    %v681 = vand.u32 %v680, 4294901760
    %682 = vmatpush1.msra.mxu0 %v681
    %683 = vmatprep.subr.mxu0 0.0
    %v684 = vand.u32 %v58, 4294901760
    %v685 = vsub.f32 %v58, %v684
    %v686 = vand.u32 %v685, 4294901760
    %v687 = vsub.f32 %v685, %v686
    %v688 = vand.u32 %v687, 4294901760
    %689 = vmatpush1.msra.mxu0 %v688
    %690 = vmatprep.subr.mxu0 0.0
    %v691 = vand.u32 %v57, 4294901760
    %v692 = vsub.f32 %v57, %v691
    %v693 = vand.u32 %v692, 4294901760
    %v694 = vsub.f32 %v692, %v693
    %v695 = vand.u32 %v694, 4294901760
    %696 = vmatpush1.msra.mxu0 %v695
    %697 = vmatprep.subr.mxu0 0.0
    %v698 = vand.u32 %v56, 4294901760
    %v699 = vsub.f32 %v56, %v698
    %v700 = vand.u32 %v699, 4294901760
    %v701 = vsub.f32 %v699, %v700
    %v702 = vand.u32 %v701, 4294901760
    %703 = vmatpush1.msra.mxu0 %v702
    %704 = vmatprep.subr.mxu0 0.0
    %v705 = vand.u32 %v55, 4294901760
    %v706 = vsub.f32 %v55, %v705
    %v707 = vand.u32 %v706, 4294901760
    %v708 = vsub.f32 %v706, %v707
    %v709 = vand.u32 %v708, 4294901760
    %710 = vmatpush1.msra.mxu0 %v709
    %711 = vmatprep.subr.mxu0 0.0
    %v712 = vand.u32 %v54, 4294901760
    %v713 = vsub.f32 %v54, %v712
    %v714 = vand.u32 %v713, 4294901760
    %v715 = vsub.f32 %v713, %v714
    %v716 = vand.u32 %v715, 4294901760
    %717 = vmatpush1.msra.mxu0 %v716
    %718 = vmatprep.subr.mxu0 0.0
    %v719 = vand.u32 %v53, 4294901760
    %v720 = vsub.f32 %v53, %v719
    %v721 = vand.u32 %v720, 4294901760
    %v722 = vsub.f32 %v720, %v721
    %v723 = vand.u32 %v722, 4294901760
    %724 = vmatpush1.msra.mxu0 %v723
    %725 = vmatprep.subr.mxu0 0.0
    %726 = vmatpush2.msra.mxu0 0.0
    %727 = vmatprep.subr.mxu0 0.0
    %728 = vmatpush2.msra.mxu0 0.0
    %729 = vmatprep.subr.mxu0 0.0
    %730 = vmatpush2.msra.mxu0 0.0
    %731 = vmatprep.subr.mxu0 0.0
    %732 = vmatpush2.msra.mxu0 0.0
    %733 = vmatprep.subr.mxu0 0.0
    %734 = vmatpush2.msra.mxu0 0.0
    %735 = vmatprep.subr.mxu0 0.0
    %736 = vmatpush2.msra.mxu0 0.0
    %737 = vmatprep.subr.mxu0 0.0
    %738 = vmatpush2.msra.mxu0 0.0
    %739 = vmatprep.subr.mxu0 0.0
    %740 = vmatpush2.msra.mxu0 0.0
    %741 = vmatprep.subr.mxu0 0.0
    %742 = vmatpush2.msra.mxu0 0.0
    %743 = vmatprep.subr.mxu0 0.0
    %744 = vmatpush2.msra.mxu0 0.0
    %745 = vmatprep.subr.mxu0 0.0
    %746 = vmatpush2.msra.mxu0 0.0
    %747 = vmatprep.subr.mxu0 0.0
    %748 = vmatpush2.msra.mxu0 0.0
    %749 = vmatprep.subr.mxu0 0.0
    %750 = vmatpush2.msra.mxu0 0.0
    %751 = vmatprep.subr.mxu0 0.0
    %752 = vmatpush2.msra.mxu0 0.0
    %753 = vmatprep.subr.mxu0 0.0
    %754 = vmatpush2.msra.mxu0 0.0
    %755 = vmatprep.subr.mxu0 0.0
    %756 = vmatpush2.msra.mxu0 0.0
    %757 = vmatprep.mubr.f32.mxu0 0.0
    %v758 = vand.u32 %v165, 4294901760
    %759 = vmatmul.mubr.f32.gmra.mxu0 %v758
    %v760 = vpop.f32.mrf.mxu0
    %v761 = vadd.f32 %v340, %v760
    %v762 = vpop.f32.mrf.mxu0
    %763 = vmatprep.mubr.f32.mxu0 0.0
    %v764 = vand.u32 %v168, 4294901760
    %765 = vmatmul.mubr.f32.gmra.mxu0 %v764
    %v766 = vpop.f32.mrf.mxu0
    %v767 = vadd.f32 %v350, %v766
    %v768 = vpop.f32.mrf.mxu0
    %769 = vmatprep.mubr.f32.mxu0 0.0
    %v770 = vand.u32 %v171, 4294901760
    %771 = vmatmul.mubr.f32.gmra.mxu0 %v770
    %v772 = vpop.f32.mrf.mxu0
    %v773 = vadd.f32 %v360, %v772
    %v774 = vpop.f32.mrf.mxu0
    %775 = vmatprep.mubr.f32.mxu0 0.0
    %v776 = vand.u32 %v174, 4294901760
    %777 = vmatmul.mubr.f32.gmra.mxu0 %v776
    %v778 = vpop.f32.mrf.mxu0
    %v779 = vadd.f32 %v370, %v778
    %v780 = vpop.f32.mrf.mxu0
    %781 = vmatprep.mubr.f32.mxu0 0.0
    %v782 = vand.u32 %v177, 4294901760
    %783 = vmatmul.mubr.f32.gmra.mxu0 %v782
    %v784 = vpop.f32.mrf.mxu0
    %v785 = vadd.f32 %v380, %v784
    %v786 = vpop.f32.mrf.mxu0
    %787 = vmatprep.mubr.f32.mxu0 0.0
    %v788 = vand.u32 %v180, 4294901760
    %789 = vmatmul.mubr.f32.gmra.mxu0 %v788
    %v790 = vpop.f32.mrf.mxu0
    %v791 = vadd.f32 %v390, %v790
    %v792 = vpop.f32.mrf.mxu0
    %793 = vmatprep.mubr.f32.mxu0 0.0
    %v794 = vand.u32 %v183, 4294901760
    %795 = vmatmul.mubr.f32.gmra.mxu0 %v794
    %v796 = vpop.f32.mrf.mxu0
    %v797 = vadd.f32 %v400, %v796
    %v798 = vpop.f32.mrf.mxu0
    %799 = vmatprep.mubr.f32.mxu0 0.0
    %v800 = vand.u32 %v186, 4294901760
    %801 = vmatmul.mubr.f32.gmra.mxu0 %v800
    %v802 = vpop.f32.mrf.mxu0
    %v803 = vadd.f32 %v410, %v802
    %v804 = vpop.f32.mrf.mxu0
    %805 = vmatprep.mubr.f32.mxu0 0.0
    %v806 = vand.u32 %v189, 4294901760
    %807 = vmatmul.mubr.f32.gmra.mxu0 %v806
    %v808 = vpop.f32.mrf.mxu0
    %v809 = vadd.f32 %v420, %v808
    %v810 = vpop.f32.mrf.mxu0
    %811 = vmatprep.mubr.f32.mxu0 0.0
    %v812 = vand.u32 %v192, 4294901760
    %813 = vmatmul.mubr.f32.gmra.mxu0 %v812
    %v814 = vpop.f32.mrf.mxu0
    %v815 = vadd.f32 %v430, %v814
    %v816 = vpop.f32.mrf.mxu0
    %817 = vmatprep.mubr.f32.mxu0 0.0
    %v818 = vand.u32 %v195, 4294901760
    %819 = vmatmul.mubr.f32.gmra.mxu0 %v818
    %v820 = vpop.f32.mrf.mxu0
    %v821 = vadd.f32 %v440, %v820
    %v822 = vpop.f32.mrf.mxu0
    %823 = vmatprep.mubr.f32.mxu0 0.0
    %v824 = vand.u32 %v198, 4294901760
    %825 = vmatmul.mubr.f32.gmra.mxu0 %v824
    %v826 = vpop.f32.mrf.mxu0
    %v827 = vadd.f32 %v450, %v826
    %v828 = vpop.f32.mrf.mxu0
    %829 = vmatprep.mubr.f32.mxu0 0.0
    %v830 = vand.u32 %v201, 4294901760
    %831 = vmatmul.mubr.f32.gmra.mxu0 %v830
    %v832 = vpop.f32.mrf.mxu0
    %v833 = vadd.f32 %v460, %v832
    %v834 = vpop.f32.mrf.mxu0
    %835 = vmatprep.mubr.f32.mxu0 0.0
    %v836 = vand.u32 %v204, 4294901760
    %837 = vmatmul.mubr.f32.gmra.mxu0 %v836
    %v838 = vpop.f32.mrf.mxu0
    %v839 = vadd.f32 %v470, %v838
    %v840 = vpop.f32.mrf.mxu0
    %841 = vmatprep.mubr.f32.mxu0 0.0
    %v842 = vand.u32 %v207, 4294901760
    %843 = vmatmul.mubr.f32.gmra.mxu0 %v842
    %v844 = vpop.f32.mrf.mxu0
    %v845 = vadd.f32 %v480, %v844
    %v846 = vpop.f32.mrf.mxu0
    %847 = vmatprep.mubr.f32.mxu0 0.0
    %v848 = vand.u32 %v210, 4294901760
    %849 = vmatmul.mubr.f32.gmra.mxu0 %v848
    %v850 = vpop.f32.mrf.mxu0
    %v851 = vadd.f32 %v490, %v850
    %v852 = vpop.f32.mrf.mxu0
    %853 = vmatprep.mubr.f32.mxu0 0.0
    %v854 = vand.u32 %v213, 4294901760
    %855 = vmatmul.mubr.f32.gmra.mxu0 %v854
    %v856 = vpop.f32.mrf.mxu0
    %v857 = vadd.f32 %v500, %v856
    %v858 = vpop.f32.mrf.mxu0
    %859 = vmatprep.mubr.f32.mxu0 0.0
    %v860 = vand.u32 %v216, 4294901760
    %861 = vmatmul.mubr.f32.gmra.mxu0 %v860
    %v862 = vpop.f32.mrf.mxu0
    %v863 = vadd.f32 %v510, %v862
    %v864 = vpop.f32.mrf.mxu0
    %865 = vmatprep.mubr.f32.mxu0 0.0
    %v866 = vand.u32 %v219, 4294901760
    %867 = vmatmul.mubr.f32.gmra.mxu0 %v866
    %v868 = vpop.f32.mrf.mxu0
    %v869 = vadd.f32 %v520, %v868
    %v870 = vpop.f32.mrf.mxu0
    %871 = vmatprep.mubr.f32.mxu0 0.0
    %v872 = vand.u32 %v222, 4294901760
    %873 = vmatmul.mubr.f32.gmra.mxu0 %v872
    %v874 = vpop.f32.mrf.mxu0
    %v875 = vadd.f32 %v530, %v874
    %v876 = vpop.f32.mrf.mxu0
    %877 = vmatprep.mubr.f32.mxu0 0.0
    %v878 = vand.u32 %v225, 4294901760
    %879 = vmatmul.mubr.f32.gmra.mxu0 %v878
    %v880 = vpop.f32.mrf.mxu0
    %v881 = vadd.f32 %v540, %v880
    %v882 = vpop.f32.mrf.mxu0
    %883 = vmatprep.mubr.f32.mxu0 0.0
    %v884 = vand.u32 %v228, 4294901760
    %885 = vmatmul.mubr.f32.gmra.mxu0 %v884
    %v886 = vpop.f32.mrf.mxu0
    %v887 = vadd.f32 %v550, %v886
    %v888 = vpop.f32.mrf.mxu0
    %889 = vmatprep.mubr.f32.mxu0 0.0
    %v890 = vand.u32 %v231, 4294901760
    %891 = vmatmul.mubr.f32.gmra.mxu0 %v890
    %v892 = vpop.f32.mrf.mxu0
    %v893 = vadd.f32 %v560, %v892
    %v894 = vpop.f32.mrf.mxu0
    %895 = vmatprep.mubr.f32.mxu0 0.0
    %v896 = vand.u32 %v234, 4294901760
    %897 = vmatmul.mubr.f32.gmra.mxu0 %v896
    %v898 = vpop.f32.mrf.mxu0
    %v899 = vadd.f32 %v570, %v898
    %v900 = vpop.f32.mrf.mxu0
    %901 = vmatprep.mubr.f32.mxu0 0.0
    %v902 = vand.u32 %v237, 4294901760
    %903 = vmatmul.mubr.f32.gmra.mxu0 %v902
    %v904 = vpop.f32.mrf.mxu0
    %v905 = vadd.f32 %v580, %v904
    %v906 = vpop.f32.mrf.mxu0
    %907 = vmatprep.mubr.f32.mxu0 0.0
    %v908 = vand.u32 %v240, 4294901760
    %909 = vmatmul.mubr.f32.gmra.mxu0 %v908
    %v910 = vpop.f32.mrf.mxu0
    %v911 = vadd.f32 %v590, %v910
    %v912 = vpop.f32.mrf.mxu0
    %913 = vmatprep.mubr.f32.mxu0 0.0
    %v914 = vand.u32 %v243, 4294901760
    %915 = vmatmul.mubr.f32.gmra.mxu0 %v914
    %v916 = vpop.f32.mrf.mxu0
    %v917 = vadd.f32 %v600, %v916
    %v918 = vpop.f32.mrf.mxu0
    %919 = vmatprep.mubr.f32.mxu0 0.0
    %v920 = vand.u32 %v246, 4294901760
    %921 = vmatmul.mubr.f32.gmra.mxu0 %v920
    %v922 = vpop.f32.mrf.mxu0
    %v923 = vadd.f32 %v610, %v922
    %v924 = vpop.f32.mrf.mxu0
    %925 = vmatprep.mubr.f32.mxu0 0.0
    %v926 = vand.u32 %v249, 4294901760
    %927 = vmatmul.mubr.f32.gmra.mxu0 %v926
    %v928 = vpop.f32.mrf.mxu0
    %v929 = vadd.f32 %v620, %v928
    %v930 = vpop.f32.mrf.mxu0
    %931 = vmatprep.mubr.f32.mxu0 0.0
    %v932 = vand.u32 %v252, 4294901760
    %933 = vmatmul.mubr.f32.gmra.mxu0 %v932
    %v934 = vpop.f32.mrf.mxu0
    %v935 = vadd.f32 %v630, %v934
    %v936 = vpop.f32.mrf.mxu0
    %937 = vmatprep.mubr.f32.mxu0 0.0
    %v938 = vand.u32 %v255, 4294901760
    %939 = vmatmul.mubr.f32.gmra.mxu0 %v938
    %v940 = vpop.f32.mrf.mxu0
    %v941 = vadd.f32 %v640, %v940
    %v942 = vpop.f32.mrf.mxu0
    %943 = vmatprep.mubr.f32.mxu0 0.0
    %v944 = vand.u32 %v258, 4294901760
    %945 = vmatmul.mubr.f32.gmra.mxu0 %v944
    %v946 = vpop.f32.mrf.mxu0
    %v947 = vadd.f32 %v650, %v946
    %v948 = vpop.f32.mrf.mxu0
    %949 = vdwg.mxu0
    %950 = vmatprep.subr.mxu0 0.0
    %951 = vmatpush1.msra.mxu0 0.0
    %952 = vmatprep.subr.mxu0 0.0
    %953 = vmatpush1.msra.mxu0 0.0
    %954 = vmatprep.subr.mxu0 0.0
    %955 = vmatpush1.msra.mxu0 0.0
    %956 = vmatprep.subr.mxu0 0.0
    %957 = vmatpush1.msra.mxu0 0.0
    %958 = vmatprep.subr.mxu0 0.0
    %959 = vmatpush1.msra.mxu0 0.0
    %960 = vmatprep.subr.mxu0 0.0
    %961 = vmatpush1.msra.mxu0 0.0
    %962 = vmatprep.subr.mxu0 0.0
    %963 = vmatpush1.msra.mxu0 0.0
    %964 = vmatprep.subr.mxu0 0.0
    %965 = vmatpush1.msra.mxu0 0.0
    %966 = vmatprep.subr.mxu0 0.0
    %v967 = vand.u32 %v60, 4294901760
    %v968 = vsub.f32 %v60, %v967
    %969 = vmatpush1.msra.mxu0 %v968
    %970 = vmatprep.subr.mxu0 0.0
    %v971 = vand.u32 %v59, 4294901760
    %v972 = vsub.f32 %v59, %v971
    %973 = vmatpush1.msra.mxu0 %v972
    %974 = vmatprep.subr.mxu0 0.0
    %v975 = vand.u32 %v58, 4294901760
    %v976 = vsub.f32 %v58, %v975
    %977 = vmatpush1.msra.mxu0 %v976
    %978 = vmatprep.subr.mxu0 0.0
    %v979 = vand.u32 %v57, 4294901760
    %v980 = vsub.f32 %v57, %v979
    %981 = vmatpush1.msra.mxu0 %v980
    %982 = vmatprep.subr.mxu0 0.0
    %v983 = vand.u32 %v56, 4294901760
    %v984 = vsub.f32 %v56, %v983
    %985 = vmatpush1.msra.mxu0 %v984
    %986 = vmatprep.subr.mxu0 0.0
    %v987 = vand.u32 %v55, 4294901760
    %v988 = vsub.f32 %v55, %v987
    %989 = vmatpush1.msra.mxu0 %v988
    %990 = vmatprep.subr.mxu0 0.0
    %v991 = vand.u32 %v54, 4294901760
    %v992 = vsub.f32 %v54, %v991
    %993 = vmatpush1.msra.mxu0 %v992
    %994 = vmatprep.subr.mxu0 0.0
    %v995 = vand.u32 %v53, 4294901760
    %v996 = vsub.f32 %v53, %v995
    %997 = vmatpush1.msra.mxu0 %v996
    %998 = vmatprep.subr.mxu0 0.0
    %999 = vmatpush2.msra.mxu0 0.0
    %1000 = vmatprep.subr.mxu0 0.0
    %1001 = vmatpush2.msra.mxu0 0.0
    %1002 = vmatprep.subr.mxu0 0.0
    %1003 = vmatpush2.msra.mxu0 0.0
    %1004 = vmatprep.subr.mxu0 0.0
    %1005 = vmatpush2.msra.mxu0 0.0
    %1006 = vmatprep.subr.mxu0 0.0
    %1007 = vmatpush2.msra.mxu0 0.0
    %1008 = vmatprep.subr.mxu0 0.0
    %1009 = vmatpush2.msra.mxu0 0.0
    %1010 = vmatprep.subr.mxu0 0.0
    %1011 = vmatpush2.msra.mxu0 0.0
    %1012 = vmatprep.subr.mxu0 0.0
    %1013 = vmatpush2.msra.mxu0 0.0
    %1014 = vmatprep.subr.mxu0 0.0
    %1015 = vmatpush2.msra.mxu0 0.0
    %1016 = vmatprep.subr.mxu0 0.0
    %1017 = vmatpush2.msra.mxu0 0.0
    %1018 = vmatprep.subr.mxu0 0.0
    %1019 = vmatpush2.msra.mxu0 0.0
    %1020 = vmatprep.subr.mxu0 0.0
    %1021 = vmatpush2.msra.mxu0 0.0
    %1022 = vmatprep.subr.mxu0 0.0
    %1023 = vmatpush2.msra.mxu0 0.0
    %1024 = vmatprep.subr.mxu0 0.0
    %1025 = vmatpush2.msra.mxu0 0.0
    %1026 = vmatprep.subr.mxu0 0.0
    %1027 = vmatpush2.msra.mxu0 0.0
    %1028 = vmatprep.subr.mxu0 0.0
    %1029 = vmatpush2.msra.mxu0 0.0
    %1030 = vmatprep.mubr.f32.mxu0 0.0
    %v1031 = vand.u32 %v165, 4294901760
    %v1032 = vsub.f32 %v165, %v1031
    %1033 = vmatmul.mubr.f32.gmra.mxu0 %v1032
    %v1034 = vpop.f32.mrf.mxu0
    %v1035 = vadd.f32 %v761, %v1034
    %v1036 = vpop.f32.mrf.mxu0
    %1037 = vmatprep.mubr.f32.mxu0 0.0
    %v1038 = vand.u32 %v168, 4294901760
    %v1039 = vsub.f32 %v168, %v1038
    %1040 = vmatmul.mubr.f32.gmra.mxu0 %v1039
    %v1041 = vpop.f32.mrf.mxu0
    %v1042 = vadd.f32 %v767, %v1041
    %v1043 = vpop.f32.mrf.mxu0
    %1044 = vmatprep.mubr.f32.mxu0 0.0
    %v1045 = vand.u32 %v171, 4294901760
    %v1046 = vsub.f32 %v171, %v1045
    %1047 = vmatmul.mubr.f32.gmra.mxu0 %v1046
    %v1048 = vpop.f32.mrf.mxu0
    %v1049 = vadd.f32 %v773, %v1048
    %v1050 = vpop.f32.mrf.mxu0
    %1051 = vmatprep.mubr.f32.mxu0 0.0
    %v1052 = vand.u32 %v174, 4294901760
    %v1053 = vsub.f32 %v174, %v1052
    %1054 = vmatmul.mubr.f32.gmra.mxu0 %v1053
    %v1055 = vpop.f32.mrf.mxu0
    %v1056 = vadd.f32 %v779, %v1055
    %v1057 = vpop.f32.mrf.mxu0
    %1058 = vmatprep.mubr.f32.mxu0 0.0
    %v1059 = vand.u32 %v177, 4294901760
    %v1060 = vsub.f32 %v177, %v1059
    %1061 = vmatmul.mubr.f32.gmra.mxu0 %v1060
    %v1062 = vpop.f32.mrf.mxu0
    %v1063 = vadd.f32 %v785, %v1062
    %v1064 = vpop.f32.mrf.mxu0
    %1065 = vmatprep.mubr.f32.mxu0 0.0
    %v1066 = vand.u32 %v180, 4294901760
    %v1067 = vsub.f32 %v180, %v1066
    %1068 = vmatmul.mubr.f32.gmra.mxu0 %v1067
    %v1069 = vpop.f32.mrf.mxu0
    %v1070 = vadd.f32 %v791, %v1069
    %v1071 = vpop.f32.mrf.mxu0
    %1072 = vmatprep.mubr.f32.mxu0 0.0
    %v1073 = vand.u32 %v183, 4294901760
    %v1074 = vsub.f32 %v183, %v1073
    %1075 = vmatmul.mubr.f32.gmra.mxu0 %v1074
    %v1076 = vpop.f32.mrf.mxu0
    %v1077 = vadd.f32 %v797, %v1076
    %v1078 = vpop.f32.mrf.mxu0
    %1079 = vmatprep.mubr.f32.mxu0 0.0
    %v1080 = vand.u32 %v186, 4294901760
    %v1081 = vsub.f32 %v186, %v1080
    %1082 = vmatmul.mubr.f32.gmra.mxu0 %v1081
    %v1083 = vpop.f32.mrf.mxu0
    %v1084 = vadd.f32 %v803, %v1083
    %v1085 = vpop.f32.mrf.mxu0
    %1086 = vmatprep.mubr.f32.mxu0 0.0
    %v1087 = vand.u32 %v189, 4294901760
    %v1088 = vsub.f32 %v189, %v1087
    %1089 = vmatmul.mubr.f32.gmra.mxu0 %v1088
    %v1090 = vpop.f32.mrf.mxu0
    %v1091 = vadd.f32 %v809, %v1090
    %v1092 = vpop.f32.mrf.mxu0
    %1093 = vmatprep.mubr.f32.mxu0 0.0
    %v1094 = vand.u32 %v192, 4294901760
    %v1095 = vsub.f32 %v192, %v1094
    %1096 = vmatmul.mubr.f32.gmra.mxu0 %v1095
    %v1097 = vpop.f32.mrf.mxu0
    %v1098 = vadd.f32 %v815, %v1097
    %v1099 = vpop.f32.mrf.mxu0
    %1100 = vmatprep.mubr.f32.mxu0 0.0
    %v1101 = vand.u32 %v195, 4294901760
    %v1102 = vsub.f32 %v195, %v1101
    %1103 = vmatmul.mubr.f32.gmra.mxu0 %v1102
    %v1104 = vpop.f32.mrf.mxu0
    %v1105 = vadd.f32 %v821, %v1104
    %v1106 = vpop.f32.mrf.mxu0
    %1107 = vmatprep.mubr.f32.mxu0 0.0
    %v1108 = vand.u32 %v198, 4294901760
    %v1109 = vsub.f32 %v198, %v1108
    %1110 = vmatmul.mubr.f32.gmra.mxu0 %v1109
    %v1111 = vpop.f32.mrf.mxu0
    %v1112 = vadd.f32 %v827, %v1111
    %v1113 = vpop.f32.mrf.mxu0
    %1114 = vmatprep.mubr.f32.mxu0 0.0
    %v1115 = vand.u32 %v201, 4294901760
    %v1116 = vsub.f32 %v201, %v1115
    %1117 = vmatmul.mubr.f32.gmra.mxu0 %v1116
    %v1118 = vpop.f32.mrf.mxu0
    %v1119 = vadd.f32 %v833, %v1118
    %v1120 = vpop.f32.mrf.mxu0
    %1121 = vmatprep.mubr.f32.mxu0 0.0
    %v1122 = vand.u32 %v204, 4294901760
    %v1123 = vsub.f32 %v204, %v1122
    %1124 = vmatmul.mubr.f32.gmra.mxu0 %v1123
    %v1125 = vpop.f32.mrf.mxu0
    %v1126 = vadd.f32 %v839, %v1125
    %v1127 = vpop.f32.mrf.mxu0
    %1128 = vmatprep.mubr.f32.mxu0 0.0
    %v1129 = vand.u32 %v207, 4294901760
    %v1130 = vsub.f32 %v207, %v1129
    %1131 = vmatmul.mubr.f32.gmra.mxu0 %v1130
    %v1132 = vpop.f32.mrf.mxu0
    %v1133 = vadd.f32 %v845, %v1132
    %v1134 = vpop.f32.mrf.mxu0
    %1135 = vmatprep.mubr.f32.mxu0 0.0
    %v1136 = vand.u32 %v210, 4294901760
    %v1137 = vsub.f32 %v210, %v1136
    %1138 = vmatmul.mubr.f32.gmra.mxu0 %v1137
    %v1139 = vpop.f32.mrf.mxu0
    %v1140 = vadd.f32 %v851, %v1139
    %v1141 = vpop.f32.mrf.mxu0
    %1142 = vmatprep.mubr.f32.mxu0 0.0
    %v1143 = vand.u32 %v213, 4294901760
    %v1144 = vsub.f32 %v213, %v1143
    %1145 = vmatmul.mubr.f32.gmra.mxu0 %v1144
    %v1146 = vpop.f32.mrf.mxu0
    %v1147 = vadd.f32 %v857, %v1146
    %v1148 = vpop.f32.mrf.mxu0
    %1149 = vmatprep.mubr.f32.mxu0 0.0
    %v1150 = vand.u32 %v216, 4294901760
    %v1151 = vsub.f32 %v216, %v1150
    %1152 = vmatmul.mubr.f32.gmra.mxu0 %v1151
    %v1153 = vpop.f32.mrf.mxu0
    %v1154 = vadd.f32 %v863, %v1153
    %v1155 = vpop.f32.mrf.mxu0
    %1156 = vmatprep.mubr.f32.mxu0 0.0
    %v1157 = vand.u32 %v219, 4294901760
    %v1158 = vsub.f32 %v219, %v1157
    %1159 = vmatmul.mubr.f32.gmra.mxu0 %v1158
    %v1160 = vpop.f32.mrf.mxu0
    %v1161 = vadd.f32 %v869, %v1160
    %v1162 = vpop.f32.mrf.mxu0
    %1163 = vmatprep.mubr.f32.mxu0 0.0
    %v1164 = vand.u32 %v222, 4294901760
    %v1165 = vsub.f32 %v222, %v1164
    %1166 = vmatmul.mubr.f32.gmra.mxu0 %v1165
    %v1167 = vpop.f32.mrf.mxu0
    %v1168 = vadd.f32 %v875, %v1167
    %v1169 = vpop.f32.mrf.mxu0
    %1170 = vmatprep.mubr.f32.mxu0 0.0
    %v1171 = vand.u32 %v225, 4294901760
    %v1172 = vsub.f32 %v225, %v1171
    %1173 = vmatmul.mubr.f32.gmra.mxu0 %v1172
    %v1174 = vpop.f32.mrf.mxu0
    %v1175 = vadd.f32 %v881, %v1174
    %v1176 = vpop.f32.mrf.mxu0
    %1177 = vmatprep.mubr.f32.mxu0 0.0
    %v1178 = vand.u32 %v228, 4294901760
    %v1179 = vsub.f32 %v228, %v1178
    %1180 = vmatmul.mubr.f32.gmra.mxu0 %v1179
    %v1181 = vpop.f32.mrf.mxu0
    %v1182 = vadd.f32 %v887, %v1181
    %v1183 = vpop.f32.mrf.mxu0
    %1184 = vmatprep.mubr.f32.mxu0 0.0
    %v1185 = vand.u32 %v231, 4294901760
    %v1186 = vsub.f32 %v231, %v1185
    %1187 = vmatmul.mubr.f32.gmra.mxu0 %v1186
    %v1188 = vpop.f32.mrf.mxu0
    %v1189 = vadd.f32 %v893, %v1188
    %v1190 = vpop.f32.mrf.mxu0
    %1191 = vmatprep.mubr.f32.mxu0 0.0
    %v1192 = vand.u32 %v234, 4294901760
    %v1193 = vsub.f32 %v234, %v1192
    %1194 = vmatmul.mubr.f32.gmra.mxu0 %v1193
    %v1195 = vpop.f32.mrf.mxu0
    %v1196 = vadd.f32 %v899, %v1195
    %v1197 = vpop.f32.mrf.mxu0
    %1198 = vmatprep.mubr.f32.mxu0 0.0
    %v1199 = vand.u32 %v237, 4294901760
    %v1200 = vsub.f32 %v237, %v1199
    %1201 = vmatmul.mubr.f32.gmra.mxu0 %v1200
    %v1202 = vpop.f32.mrf.mxu0
    %v1203 = vadd.f32 %v905, %v1202
    %v1204 = vpop.f32.mrf.mxu0
    %1205 = vmatprep.mubr.f32.mxu0 0.0
    %v1206 = vand.u32 %v240, 4294901760
    %v1207 = vsub.f32 %v240, %v1206
    %1208 = vmatmul.mubr.f32.gmra.mxu0 %v1207
    %v1209 = vpop.f32.mrf.mxu0
    %v1210 = vadd.f32 %v911, %v1209
    %v1211 = vpop.f32.mrf.mxu0
    %1212 = vmatprep.mubr.f32.mxu0 0.0
    %v1213 = vand.u32 %v243, 4294901760
    %v1214 = vsub.f32 %v243, %v1213
    %1215 = vmatmul.mubr.f32.gmra.mxu0 %v1214
    %v1216 = vpop.f32.mrf.mxu0
    %v1217 = vadd.f32 %v917, %v1216
    %v1218 = vpop.f32.mrf.mxu0
    %1219 = vmatprep.mubr.f32.mxu0 0.0
    %v1220 = vand.u32 %v246, 4294901760
    %v1221 = vsub.f32 %v246, %v1220
    %1222 = vmatmul.mubr.f32.gmra.mxu0 %v1221
    %v1223 = vpop.f32.mrf.mxu0
    %v1224 = vadd.f32 %v923, %v1223
    %v1225 = vpop.f32.mrf.mxu0
    %1226 = vmatprep.mubr.f32.mxu0 0.0
    %v1227 = vand.u32 %v249, 4294901760
    %v1228 = vsub.f32 %v249, %v1227
    %1229 = vmatmul.mubr.f32.gmra.mxu0 %v1228
    %v1230 = vpop.f32.mrf.mxu0
    %v1231 = vadd.f32 %v929, %v1230
    %v1232 = vpop.f32.mrf.mxu0
    %1233 = vmatprep.mubr.f32.mxu0 0.0
    %v1234 = vand.u32 %v252, 4294901760
    %v1235 = vsub.f32 %v252, %v1234
    %1236 = vmatmul.mubr.f32.gmra.mxu0 %v1235
    %v1237 = vpop.f32.mrf.mxu0
    %v1238 = vadd.f32 %v935, %v1237
    %v1239 = vpop.f32.mrf.mxu0
    %1240 = vmatprep.mubr.f32.mxu0 0.0
    %v1241 = vand.u32 %v255, 4294901760
    %v1242 = vsub.f32 %v255, %v1241
    %1243 = vmatmul.mubr.f32.gmra.mxu0 %v1242
    %v1244 = vpop.f32.mrf.mxu0
    %v1245 = vadd.f32 %v941, %v1244
    %v1246 = vpop.f32.mrf.mxu0
    %1247 = vmatprep.mubr.f32.mxu0 0.0
    %v1248 = vand.u32 %v258, 4294901760
    %v1249 = vsub.f32 %v258, %v1248
    %1250 = vmatmul.mubr.f32.gmra.mxu0 %v1249
    %v1251 = vpop.f32.mrf.mxu0
    %v1252 = vadd.f32 %v947, %v1251
    %v1253 = vpop.f32.mrf.mxu0
    %1254 = vdwg.mxu0
    %1255 = vmatprep.subr.mxu0 0.0
    %1256 = vmatpush1.msra.mxu0 0.0
    %1257 = vmatprep.subr.mxu0 0.0
    %1258 = vmatpush1.msra.mxu0 0.0
    %1259 = vmatprep.subr.mxu0 0.0
    %1260 = vmatpush1.msra.mxu0 0.0
    %1261 = vmatprep.subr.mxu0 0.0
    %1262 = vmatpush1.msra.mxu0 0.0
    %1263 = vmatprep.subr.mxu0 0.0
    %1264 = vmatpush1.msra.mxu0 0.0
    %1265 = vmatprep.subr.mxu0 0.0
    %1266 = vmatpush1.msra.mxu0 0.0
    %1267 = vmatprep.subr.mxu0 0.0
    %1268 = vmatpush1.msra.mxu0 0.0
    %1269 = vmatprep.subr.mxu0 0.0
    %1270 = vmatpush1.msra.mxu0 0.0
    %1271 = vmatprep.subr.mxu0 0.0
    %v1272 = vand.u32 %v60, 4294901760
    %1273 = vmatpush1.msra.mxu0 %v1272
    %1274 = vmatprep.subr.mxu0 0.0
    %v1275 = vand.u32 %v59, 4294901760
    %1276 = vmatpush1.msra.mxu0 %v1275
    %1277 = vmatprep.subr.mxu0 0.0
    %v1278 = vand.u32 %v58, 4294901760
    %1279 = vmatpush1.msra.mxu0 %v1278
    %1280 = vmatprep.subr.mxu0 0.0
    %v1281 = vand.u32 %v57, 4294901760
    %1282 = vmatpush1.msra.mxu0 %v1281
    %1283 = vmatprep.subr.mxu0 0.0
    %v1284 = vand.u32 %v56, 4294901760
    %1285 = vmatpush1.msra.mxu0 %v1284
    %1286 = vmatprep.subr.mxu0 0.0
    %v1287 = vand.u32 %v55, 4294901760
    %1288 = vmatpush1.msra.mxu0 %v1287
    %1289 = vmatprep.subr.mxu0 0.0
    %v1290 = vand.u32 %v54, 4294901760
    %1291 = vmatpush1.msra.mxu0 %v1290
    %1292 = vmatprep.subr.mxu0 0.0
    %v1293 = vand.u32 %v53, 4294901760
    %1294 = vmatpush1.msra.mxu0 %v1293
    %1295 = vmatprep.subr.mxu0 0.0
    %1296 = vmatpush2.msra.mxu0 0.0
    %1297 = vmatprep.subr.mxu0 0.0
    %1298 = vmatpush2.msra.mxu0 0.0
    %1299 = vmatprep.subr.mxu0 0.0
    %1300 = vmatpush2.msra.mxu0 0.0
    %1301 = vmatprep.subr.mxu0 0.0
    %1302 = vmatpush2.msra.mxu0 0.0
    %1303 = vmatprep.subr.mxu0 0.0
    %1304 = vmatpush2.msra.mxu0 0.0
    %1305 = vmatprep.subr.mxu0 0.0
    %1306 = vmatpush2.msra.mxu0 0.0
    %1307 = vmatprep.subr.mxu0 0.0
    %1308 = vmatpush2.msra.mxu0 0.0
    %1309 = vmatprep.subr.mxu0 0.0
    %1310 = vmatpush2.msra.mxu0 0.0
    %1311 = vmatprep.subr.mxu0 0.0
    %1312 = vmatpush2.msra.mxu0 0.0
    %1313 = vmatprep.subr.mxu0 0.0
    %1314 = vmatpush2.msra.mxu0 0.0
    %1315 = vmatprep.subr.mxu0 0.0
    %1316 = vmatpush2.msra.mxu0 0.0
    %1317 = vmatprep.subr.mxu0 0.0
    %1318 = vmatpush2.msra.mxu0 0.0
    %1319 = vmatprep.subr.mxu0 0.0
    %1320 = vmatpush2.msra.mxu0 0.0
    %1321 = vmatprep.subr.mxu0 0.0
    %1322 = vmatpush2.msra.mxu0 0.0
    %1323 = vmatprep.subr.mxu0 0.0
    %1324 = vmatpush2.msra.mxu0 0.0
    %1325 = vmatprep.subr.mxu0 0.0
    %1326 = vmatpush2.msra.mxu0 0.0
    %1327 = vmatprep.mubr.f32.mxu0 0.0
    %v1328 = vand.u32 %v165, 4294901760
    %v1329 = vsub.f32 %v165, %v1328
    %v1330 = vand.u32 %v1329, 4294901760
    %1331 = vmatmul.mubr.f32.gmra.mxu0 %v1330
    %v1332 = vpop.f32.mrf.mxu0
    %v1333 = vadd.f32 %v1035, %v1332
    %v1334 = vpop.f32.mrf.mxu0
    %1335 = vmatprep.mubr.f32.mxu0 0.0
    %v1336 = vand.u32 %v168, 4294901760
    %v1337 = vsub.f32 %v168, %v1336
    %v1338 = vand.u32 %v1337, 4294901760
    %1339 = vmatmul.mubr.f32.gmra.mxu0 %v1338
    %v1340 = vpop.f32.mrf.mxu0
    %v1341 = vadd.f32 %v1042, %v1340
    %v1342 = vpop.f32.mrf.mxu0
    %1343 = vmatprep.mubr.f32.mxu0 0.0
    %v1344 = vand.u32 %v171, 4294901760
    %v1345 = vsub.f32 %v171, %v1344
    %v1346 = vand.u32 %v1345, 4294901760
    %1347 = vmatmul.mubr.f32.gmra.mxu0 %v1346
    %v1348 = vpop.f32.mrf.mxu0
    %v1349 = vadd.f32 %v1049, %v1348
    %v1350 = vpop.f32.mrf.mxu0
    %1351 = vmatprep.mubr.f32.mxu0 0.0
    %v1352 = vand.u32 %v174, 4294901760
    %v1353 = vsub.f32 %v174, %v1352
    %v1354 = vand.u32 %v1353, 4294901760
    %1355 = vmatmul.mubr.f32.gmra.mxu0 %v1354
    %v1356 = vpop.f32.mrf.mxu0
    %v1357 = vadd.f32 %v1056, %v1356
    %v1358 = vpop.f32.mrf.mxu0
    %1359 = vmatprep.mubr.f32.mxu0 0.0
    %v1360 = vand.u32 %v177, 4294901760
    %v1361 = vsub.f32 %v177, %v1360
    %v1362 = vand.u32 %v1361, 4294901760
    %1363 = vmatmul.mubr.f32.gmra.mxu0 %v1362
    %v1364 = vpop.f32.mrf.mxu0
    %v1365 = vadd.f32 %v1063, %v1364
    %v1366 = vpop.f32.mrf.mxu0
    %1367 = vmatprep.mubr.f32.mxu0 0.0
    %v1368 = vand.u32 %v180, 4294901760
    %v1369 = vsub.f32 %v180, %v1368
    %v1370 = vand.u32 %v1369, 4294901760
    %1371 = vmatmul.mubr.f32.gmra.mxu0 %v1370
    %v1372 = vpop.f32.mrf.mxu0
    %v1373 = vadd.f32 %v1070, %v1372
    %v1374 = vpop.f32.mrf.mxu0
    %1375 = vmatprep.mubr.f32.mxu0 0.0
    %v1376 = vand.u32 %v183, 4294901760
    %v1377 = vsub.f32 %v183, %v1376
    %v1378 = vand.u32 %v1377, 4294901760
    %1379 = vmatmul.mubr.f32.gmra.mxu0 %v1378
    %v1380 = vpop.f32.mrf.mxu0
    %v1381 = vadd.f32 %v1077, %v1380
    %v1382 = vpop.f32.mrf.mxu0
    %1383 = vmatprep.mubr.f32.mxu0 0.0
    %v1384 = vand.u32 %v186, 4294901760
    %v1385 = vsub.f32 %v186, %v1384
    %v1386 = vand.u32 %v1385, 4294901760
    %1387 = vmatmul.mubr.f32.gmra.mxu0 %v1386
    %v1388 = vpop.f32.mrf.mxu0
    %v1389 = vadd.f32 %v1084, %v1388
    %v1390 = vpop.f32.mrf.mxu0
    %1391 = vmatprep.mubr.f32.mxu0 0.0
    %v1392 = vand.u32 %v189, 4294901760
    %v1393 = vsub.f32 %v189, %v1392
    %v1394 = vand.u32 %v1393, 4294901760
    %1395 = vmatmul.mubr.f32.gmra.mxu0 %v1394
    %v1396 = vpop.f32.mrf.mxu0
    %v1397 = vadd.f32 %v1091, %v1396
    %v1398 = vpop.f32.mrf.mxu0
    %1399 = vmatprep.mubr.f32.mxu0 0.0
    %v1400 = vand.u32 %v192, 4294901760
    %v1401 = vsub.f32 %v192, %v1400
    %v1402 = vand.u32 %v1401, 4294901760
    %1403 = vmatmul.mubr.f32.gmra.mxu0 %v1402
    %v1404 = vpop.f32.mrf.mxu0
    %v1405 = vadd.f32 %v1098, %v1404
    %v1406 = vpop.f32.mrf.mxu0
    %1407 = vmatprep.mubr.f32.mxu0 0.0
    %v1408 = vand.u32 %v195, 4294901760
    %v1409 = vsub.f32 %v195, %v1408
    %v1410 = vand.u32 %v1409, 4294901760
    %1411 = vmatmul.mubr.f32.gmra.mxu0 %v1410
    %v1412 = vpop.f32.mrf.mxu0
    %v1413 = vadd.f32 %v1105, %v1412
    %v1414 = vpop.f32.mrf.mxu0
    %1415 = vmatprep.mubr.f32.mxu0 0.0
    %v1416 = vand.u32 %v198, 4294901760
    %v1417 = vsub.f32 %v198, %v1416
    %v1418 = vand.u32 %v1417, 4294901760
    %1419 = vmatmul.mubr.f32.gmra.mxu0 %v1418
    %v1420 = vpop.f32.mrf.mxu0
    %v1421 = vadd.f32 %v1112, %v1420
    %v1422 = vpop.f32.mrf.mxu0
    %1423 = vmatprep.mubr.f32.mxu0 0.0
    %v1424 = vand.u32 %v201, 4294901760
    %v1425 = vsub.f32 %v201, %v1424
    %v1426 = vand.u32 %v1425, 4294901760
    %1427 = vmatmul.mubr.f32.gmra.mxu0 %v1426
    %v1428 = vpop.f32.mrf.mxu0
    %v1429 = vadd.f32 %v1119, %v1428
    %v1430 = vpop.f32.mrf.mxu0
    %1431 = vmatprep.mubr.f32.mxu0 0.0
    %v1432 = vand.u32 %v204, 4294901760
    %v1433 = vsub.f32 %v204, %v1432
    %v1434 = vand.u32 %v1433, 4294901760
    %1435 = vmatmul.mubr.f32.gmra.mxu0 %v1434
    %v1436 = vpop.f32.mrf.mxu0
    %v1437 = vadd.f32 %v1126, %v1436
    %v1438 = vpop.f32.mrf.mxu0
    %1439 = vmatprep.mubr.f32.mxu0 0.0
    %v1440 = vand.u32 %v207, 4294901760
    %v1441 = vsub.f32 %v207, %v1440
    %v1442 = vand.u32 %v1441, 4294901760
    %1443 = vmatmul.mubr.f32.gmra.mxu0 %v1442
    %v1444 = vpop.f32.mrf.mxu0
    %v1445 = vadd.f32 %v1133, %v1444
    %v1446 = vpop.f32.mrf.mxu0
    %1447 = vmatprep.mubr.f32.mxu0 0.0
    %v1448 = vand.u32 %v210, 4294901760
    %v1449 = vsub.f32 %v210, %v1448
    %v1450 = vand.u32 %v1449, 4294901760
    %1451 = vmatmul.mubr.f32.gmra.mxu0 %v1450
    %v1452 = vpop.f32.mrf.mxu0
    %v1453 = vadd.f32 %v1140, %v1452
    %v1454 = vpop.f32.mrf.mxu0
    %1455 = vmatprep.mubr.f32.mxu0 0.0
    %v1456 = vand.u32 %v213, 4294901760
    %v1457 = vsub.f32 %v213, %v1456
    %v1458 = vand.u32 %v1457, 4294901760
    %1459 = vmatmul.mubr.f32.gmra.mxu0 %v1458
    %v1460 = vpop.f32.mrf.mxu0
    %v1461 = vadd.f32 %v1147, %v1460
    %v1462 = vpop.f32.mrf.mxu0
    %1463 = vmatprep.mubr.f32.mxu0 0.0
    %v1464 = vand.u32 %v216, 4294901760
    %v1465 = vsub.f32 %v216, %v1464
    %v1466 = vand.u32 %v1465, 4294901760
    %1467 = vmatmul.mubr.f32.gmra.mxu0 %v1466
    %v1468 = vpop.f32.mrf.mxu0
    %v1469 = vadd.f32 %v1154, %v1468
    %v1470 = vpop.f32.mrf.mxu0
    %1471 = vmatprep.mubr.f32.mxu0 0.0
    %v1472 = vand.u32 %v219, 4294901760
    %v1473 = vsub.f32 %v219, %v1472
    %v1474 = vand.u32 %v1473, 4294901760
    %1475 = vmatmul.mubr.f32.gmra.mxu0 %v1474
    %v1476 = vpop.f32.mrf.mxu0
    %v1477 = vadd.f32 %v1161, %v1476
    %v1478 = vpop.f32.mrf.mxu0
    %1479 = vmatprep.mubr.f32.mxu0 0.0
    %v1480 = vand.u32 %v222, 4294901760
    %v1481 = vsub.f32 %v222, %v1480
    %v1482 = vand.u32 %v1481, 4294901760
    %1483 = vmatmul.mubr.f32.gmra.mxu0 %v1482
    %v1484 = vpop.f32.mrf.mxu0
    %v1485 = vadd.f32 %v1168, %v1484
    %v1486 = vpop.f32.mrf.mxu0
    %1487 = vmatprep.mubr.f32.mxu0 0.0
    %v1488 = vand.u32 %v225, 4294901760
    %v1489 = vsub.f32 %v225, %v1488
    %v1490 = vand.u32 %v1489, 4294901760
    %1491 = vmatmul.mubr.f32.gmra.mxu0 %v1490
    %v1492 = vpop.f32.mrf.mxu0
    %v1493 = vadd.f32 %v1175, %v1492
    %v1494 = vpop.f32.mrf.mxu0
    %1495 = vmatprep.mubr.f32.mxu0 0.0
    %v1496 = vand.u32 %v228, 4294901760
    %v1497 = vsub.f32 %v228, %v1496
    %v1498 = vand.u32 %v1497, 4294901760
    %1499 = vmatmul.mubr.f32.gmra.mxu0 %v1498
    %v1500 = vpop.f32.mrf.mxu0
    %v1501 = vadd.f32 %v1182, %v1500
    %v1502 = vpop.f32.mrf.mxu0
    %1503 = vmatprep.mubr.f32.mxu0 0.0
    %v1504 = vand.u32 %v231, 4294901760
    %v1505 = vsub.f32 %v231, %v1504
    %v1506 = vand.u32 %v1505, 4294901760
    %1507 = vmatmul.mubr.f32.gmra.mxu0 %v1506
    %v1508 = vpop.f32.mrf.mxu0
    %v1509 = vadd.f32 %v1189, %v1508
    %v1510 = vpop.f32.mrf.mxu0
    %1511 = vmatprep.mubr.f32.mxu0 0.0
    %v1512 = vand.u32 %v234, 4294901760
    %v1513 = vsub.f32 %v234, %v1512
    %v1514 = vand.u32 %v1513, 4294901760
    %1515 = vmatmul.mubr.f32.gmra.mxu0 %v1514
    %v1516 = vpop.f32.mrf.mxu0
    %v1517 = vadd.f32 %v1196, %v1516
    %v1518 = vpop.f32.mrf.mxu0
    %1519 = vmatprep.mubr.f32.mxu0 0.0
    %v1520 = vand.u32 %v237, 4294901760
    %v1521 = vsub.f32 %v237, %v1520
    %v1522 = vand.u32 %v1521, 4294901760
    %1523 = vmatmul.mubr.f32.gmra.mxu0 %v1522
    %v1524 = vpop.f32.mrf.mxu0
    %v1525 = vadd.f32 %v1203, %v1524
    %v1526 = vpop.f32.mrf.mxu0
    %1527 = vmatprep.mubr.f32.mxu0 0.0
    %v1528 = vand.u32 %v240, 4294901760
    %v1529 = vsub.f32 %v240, %v1528
    %v1530 = vand.u32 %v1529, 4294901760
    %1531 = vmatmul.mubr.f32.gmra.mxu0 %v1530
    %v1532 = vpop.f32.mrf.mxu0
    %v1533 = vadd.f32 %v1210, %v1532
    %v1534 = vpop.f32.mrf.mxu0
    %1535 = vmatprep.mubr.f32.mxu0 0.0
    %v1536 = vand.u32 %v243, 4294901760
    %v1537 = vsub.f32 %v243, %v1536
    %v1538 = vand.u32 %v1537, 4294901760
    %1539 = vmatmul.mubr.f32.gmra.mxu0 %v1538
    %v1540 = vpop.f32.mrf.mxu0
    %v1541 = vadd.f32 %v1217, %v1540
    %v1542 = vpop.f32.mrf.mxu0
    %1543 = vmatprep.mubr.f32.mxu0 0.0
    %v1544 = vand.u32 %v246, 4294901760
    %v1545 = vsub.f32 %v246, %v1544
    %v1546 = vand.u32 %v1545, 4294901760
    %1547 = vmatmul.mubr.f32.gmra.mxu0 %v1546
    %v1548 = vpop.f32.mrf.mxu0
    %v1549 = vadd.f32 %v1224, %v1548
    %v1550 = vpop.f32.mrf.mxu0
    %1551 = vmatprep.mubr.f32.mxu0 0.0
    %v1552 = vand.u32 %v249, 4294901760
    %v1553 = vsub.f32 %v249, %v1552
    %v1554 = vand.u32 %v1553, 4294901760
    %1555 = vmatmul.mubr.f32.gmra.mxu0 %v1554
    %v1556 = vpop.f32.mrf.mxu0
    %v1557 = vadd.f32 %v1231, %v1556
    %v1558 = vpop.f32.mrf.mxu0
    %1559 = vmatprep.mubr.f32.mxu0 0.0
    %v1560 = vand.u32 %v252, 4294901760
    %v1561 = vsub.f32 %v252, %v1560
    %v1562 = vand.u32 %v1561, 4294901760
    %1563 = vmatmul.mubr.f32.gmra.mxu0 %v1562
    %v1564 = vpop.f32.mrf.mxu0
    %v1565 = vadd.f32 %v1238, %v1564
    %v1566 = vpop.f32.mrf.mxu0
    %1567 = vmatprep.mubr.f32.mxu0 0.0
    %v1568 = vand.u32 %v255, 4294901760
    %v1569 = vsub.f32 %v255, %v1568
    %v1570 = vand.u32 %v1569, 4294901760
    %1571 = vmatmul.mubr.f32.gmra.mxu0 %v1570
    %v1572 = vpop.f32.mrf.mxu0
    %v1573 = vadd.f32 %v1245, %v1572
    %v1574 = vpop.f32.mrf.mxu0
    %1575 = vmatprep.mubr.f32.mxu0 0.0
    %v1576 = vand.u32 %v258, 4294901760
    %v1577 = vsub.f32 %v258, %v1576
    %v1578 = vand.u32 %v1577, 4294901760
    %1579 = vmatmul.mubr.f32.gmra.mxu0 %v1578
    %v1580 = vpop.f32.mrf.mxu0
    %v1581 = vadd.f32 %v1252, %v1580
    %v1582 = vpop.f32.mrf.mxu0
    %1583 = vdwg.mxu0
    %1584 = vmatprep.subr.mxu0 0.0
    %1585 = vmatpush1.msra.mxu0 0.0
    %1586 = vmatprep.subr.mxu0 0.0
    %1587 = vmatpush1.msra.mxu0 0.0
    %1588 = vmatprep.subr.mxu0 0.0
    %1589 = vmatpush1.msra.mxu0 0.0
    %1590 = vmatprep.subr.mxu0 0.0
    %1591 = vmatpush1.msra.mxu0 0.0
    %1592 = vmatprep.subr.mxu0 0.0
    %1593 = vmatpush1.msra.mxu0 0.0
    %1594 = vmatprep.subr.mxu0 0.0
    %1595 = vmatpush1.msra.mxu0 0.0
    %1596 = vmatprep.subr.mxu0 0.0
    %1597 = vmatpush1.msra.mxu0 0.0
    %1598 = vmatprep.subr.mxu0 0.0
    %1599 = vmatpush1.msra.mxu0 0.0
    %1600 = vmatprep.subr.mxu0 0.0
    %v1601 = vand.u32 %v60, 4294901760
    %v1602 = vsub.f32 %v60, %v1601
    %v1603 = vand.u32 %v1602, 4294901760
    %1604 = vmatpush1.msra.mxu0 %v1603
    %1605 = vmatprep.subr.mxu0 0.0
    %v1606 = vand.u32 %v59, 4294901760
    %v1607 = vsub.f32 %v59, %v1606
    %v1608 = vand.u32 %v1607, 4294901760
    %1609 = vmatpush1.msra.mxu0 %v1608
    %1610 = vmatprep.subr.mxu0 0.0
    %v1611 = vand.u32 %v58, 4294901760
    %v1612 = vsub.f32 %v58, %v1611
    %v1613 = vand.u32 %v1612, 4294901760
    %1614 = vmatpush1.msra.mxu0 %v1613
    %1615 = vmatprep.subr.mxu0 0.0
    %v1616 = vand.u32 %v57, 4294901760
    %v1617 = vsub.f32 %v57, %v1616
    %v1618 = vand.u32 %v1617, 4294901760
    %1619 = vmatpush1.msra.mxu0 %v1618
    %1620 = vmatprep.subr.mxu0 0.0
    %v1621 = vand.u32 %v56, 4294901760
    %v1622 = vsub.f32 %v56, %v1621
    %v1623 = vand.u32 %v1622, 4294901760
    %1624 = vmatpush1.msra.mxu0 %v1623
    %1625 = vmatprep.subr.mxu0 0.0
    %v1626 = vand.u32 %v55, 4294901760
    %v1627 = vsub.f32 %v55, %v1626
    %v1628 = vand.u32 %v1627, 4294901760
    %1629 = vmatpush1.msra.mxu0 %v1628
    %1630 = vmatprep.subr.mxu0 0.0
    %v1631 = vand.u32 %v54, 4294901760
    %v1632 = vsub.f32 %v54, %v1631
    %v1633 = vand.u32 %v1632, 4294901760
    %1634 = vmatpush1.msra.mxu0 %v1633
    %1635 = vmatprep.subr.mxu0 0.0
    %v1636 = vand.u32 %v53, 4294901760
    %v1637 = vsub.f32 %v53, %v1636
    %v1638 = vand.u32 %v1637, 4294901760
    %1639 = vmatpush1.msra.mxu0 %v1638
    %1640 = vmatprep.subr.mxu0 0.0
    %1641 = vmatpush2.msra.mxu0 0.0
    %1642 = vmatprep.subr.mxu0 0.0
    %1643 = vmatpush2.msra.mxu0 0.0
    %1644 = vmatprep.subr.mxu0 0.0
    %1645 = vmatpush2.msra.mxu0 0.0
    %1646 = vmatprep.subr.mxu0 0.0
    %1647 = vmatpush2.msra.mxu0 0.0
    %1648 = vmatprep.subr.mxu0 0.0
    %1649 = vmatpush2.msra.mxu0 0.0
    %1650 = vmatprep.subr.mxu0 0.0
    %1651 = vmatpush2.msra.mxu0 0.0
    %1652 = vmatprep.subr.mxu0 0.0
    %1653 = vmatpush2.msra.mxu0 0.0
    %1654 = vmatprep.subr.mxu0 0.0
    %1655 = vmatpush2.msra.mxu0 0.0
    %1656 = vmatprep.subr.mxu0 0.0
    %1657 = vmatpush2.msra.mxu0 0.0
    %1658 = vmatprep.subr.mxu0 0.0
    %1659 = vmatpush2.msra.mxu0 0.0
    %1660 = vmatprep.subr.mxu0 0.0
    %1661 = vmatpush2.msra.mxu0 0.0
    %1662 = vmatprep.subr.mxu0 0.0
    %1663 = vmatpush2.msra.mxu0 0.0
    %1664 = vmatprep.subr.mxu0 0.0
    %1665 = vmatpush2.msra.mxu0 0.0
    %1666 = vmatprep.subr.mxu0 0.0
    %1667 = vmatpush2.msra.mxu0 0.0
    %1668 = vmatprep.subr.mxu0 0.0
    %1669 = vmatpush2.msra.mxu0 0.0
    %1670 = vmatprep.subr.mxu0 0.0
    %1671 = vmatpush2.msra.mxu0 0.0
    %1672 = vmatprep.mubr.f32.mxu0 0.0
    %v1673 = vand.u32 %v165, 4294901760
    %1674 = vmatmul.mubr.f32.gmra.mxu0 %v1673
    %v1675 = vpop.f32.mrf.mxu0
    %v1676 = vadd.f32 %v1333, %v1675
    %v1677 = vpop.f32.mrf.mxu0
    %1678 = vmatprep.mubr.f32.mxu0 0.0
    %v1679 = vand.u32 %v168, 4294901760
    %1680 = vmatmul.mubr.f32.gmra.mxu0 %v1679
    %v1681 = vpop.f32.mrf.mxu0
    %v1682 = vadd.f32 %v1341, %v1681
    %v1683 = vpop.f32.mrf.mxu0
    %1684 = vmatprep.mubr.f32.mxu0 0.0
    %v1685 = vand.u32 %v171, 4294901760
    %1686 = vmatmul.mubr.f32.gmra.mxu0 %v1685
    %v1687 = vpop.f32.mrf.mxu0
    %v1688 = vadd.f32 %v1349, %v1687
    %v1689 = vpop.f32.mrf.mxu0
    %1690 = vmatprep.mubr.f32.mxu0 0.0
    %v1691 = vand.u32 %v174, 4294901760
    %1692 = vmatmul.mubr.f32.gmra.mxu0 %v1691
    %v1693 = vpop.f32.mrf.mxu0
    %v1694 = vadd.f32 %v1357, %v1693
    %v1695 = vpop.f32.mrf.mxu0
    %1696 = vmatprep.mubr.f32.mxu0 0.0
    %v1697 = vand.u32 %v177, 4294901760
    %1698 = vmatmul.mubr.f32.gmra.mxu0 %v1697
    %v1699 = vpop.f32.mrf.mxu0
    %v1700 = vadd.f32 %v1365, %v1699
    %v1701 = vpop.f32.mrf.mxu0
    %1702 = vmatprep.mubr.f32.mxu0 0.0
    %v1703 = vand.u32 %v180, 4294901760
    %1704 = vmatmul.mubr.f32.gmra.mxu0 %v1703
    %v1705 = vpop.f32.mrf.mxu0
    %v1706 = vadd.f32 %v1373, %v1705
    %v1707 = vpop.f32.mrf.mxu0
    %1708 = vmatprep.mubr.f32.mxu0 0.0
    %v1709 = vand.u32 %v183, 4294901760
    %1710 = vmatmul.mubr.f32.gmra.mxu0 %v1709
    %v1711 = vpop.f32.mrf.mxu0
    %v1712 = vadd.f32 %v1381, %v1711
    %v1713 = vpop.f32.mrf.mxu0
    %1714 = vmatprep.mubr.f32.mxu0 0.0
    %v1715 = vand.u32 %v186, 4294901760
    %1716 = vmatmul.mubr.f32.gmra.mxu0 %v1715
    %v1717 = vpop.f32.mrf.mxu0
    %v1718 = vadd.f32 %v1389, %v1717
    %v1719 = vpop.f32.mrf.mxu0
    %1720 = vmatprep.mubr.f32.mxu0 0.0
    %v1721 = vand.u32 %v189, 4294901760
    %1722 = vmatmul.mubr.f32.gmra.mxu0 %v1721
    %v1723 = vpop.f32.mrf.mxu0
    %v1724 = vadd.f32 %v1397, %v1723
    %v1725 = vpop.f32.mrf.mxu0
    %1726 = vmatprep.mubr.f32.mxu0 0.0
    %v1727 = vand.u32 %v192, 4294901760
    %1728 = vmatmul.mubr.f32.gmra.mxu0 %v1727
    %v1729 = vpop.f32.mrf.mxu0
    %v1730 = vadd.f32 %v1405, %v1729
    %v1731 = vpop.f32.mrf.mxu0
    %1732 = vmatprep.mubr.f32.mxu0 0.0
    %v1733 = vand.u32 %v195, 4294901760
    %1734 = vmatmul.mubr.f32.gmra.mxu0 %v1733
    %v1735 = vpop.f32.mrf.mxu0
    %v1736 = vadd.f32 %v1413, %v1735
    %v1737 = vpop.f32.mrf.mxu0
    %1738 = vmatprep.mubr.f32.mxu0 0.0
    %v1739 = vand.u32 %v198, 4294901760
    %1740 = vmatmul.mubr.f32.gmra.mxu0 %v1739
    %v1741 = vpop.f32.mrf.mxu0
    %v1742 = vadd.f32 %v1421, %v1741
    %v1743 = vpop.f32.mrf.mxu0
    %1744 = vmatprep.mubr.f32.mxu0 0.0
    %v1745 = vand.u32 %v201, 4294901760
    %1746 = vmatmul.mubr.f32.gmra.mxu0 %v1745
    %v1747 = vpop.f32.mrf.mxu0
    %v1748 = vadd.f32 %v1429, %v1747
    %v1749 = vpop.f32.mrf.mxu0
    %1750 = vmatprep.mubr.f32.mxu0 0.0
    %v1751 = vand.u32 %v204, 4294901760
    %1752 = vmatmul.mubr.f32.gmra.mxu0 %v1751
    %v1753 = vpop.f32.mrf.mxu0
    %v1754 = vadd.f32 %v1437, %v1753
    %v1755 = vpop.f32.mrf.mxu0
    %1756 = vmatprep.mubr.f32.mxu0 0.0
    %v1757 = vand.u32 %v207, 4294901760
    %1758 = vmatmul.mubr.f32.gmra.mxu0 %v1757
    %v1759 = vpop.f32.mrf.mxu0
    %v1760 = vadd.f32 %v1445, %v1759
    %v1761 = vpop.f32.mrf.mxu0
    %1762 = vmatprep.mubr.f32.mxu0 0.0
    %v1763 = vand.u32 %v210, 4294901760
    %1764 = vmatmul.mubr.f32.gmra.mxu0 %v1763
    %v1765 = vpop.f32.mrf.mxu0
    %v1766 = vadd.f32 %v1453, %v1765
    %v1767 = vpop.f32.mrf.mxu0
    %1768 = vmatprep.mubr.f32.mxu0 0.0
    %v1769 = vand.u32 %v213, 4294901760
    %1770 = vmatmul.mubr.f32.gmra.mxu0 %v1769
    %v1771 = vpop.f32.mrf.mxu0
    %v1772 = vadd.f32 %v1461, %v1771
    %v1773 = vpop.f32.mrf.mxu0
    %1774 = vmatprep.mubr.f32.mxu0 0.0
    %v1775 = vand.u32 %v216, 4294901760
    %1776 = vmatmul.mubr.f32.gmra.mxu0 %v1775
    %v1777 = vpop.f32.mrf.mxu0
    %v1778 = vadd.f32 %v1469, %v1777
    %v1779 = vpop.f32.mrf.mxu0
    %1780 = vmatprep.mubr.f32.mxu0 0.0
    %v1781 = vand.u32 %v219, 4294901760
    %1782 = vmatmul.mubr.f32.gmra.mxu0 %v1781
    %v1783 = vpop.f32.mrf.mxu0
    %v1784 = vadd.f32 %v1477, %v1783
    %v1785 = vpop.f32.mrf.mxu0
    %1786 = vmatprep.mubr.f32.mxu0 0.0
    %v1787 = vand.u32 %v222, 4294901760
    %1788 = vmatmul.mubr.f32.gmra.mxu0 %v1787
    %v1789 = vpop.f32.mrf.mxu0
    %v1790 = vadd.f32 %v1485, %v1789
    %v1791 = vpop.f32.mrf.mxu0
    %1792 = vmatprep.mubr.f32.mxu0 0.0
    %v1793 = vand.u32 %v225, 4294901760
    %1794 = vmatmul.mubr.f32.gmra.mxu0 %v1793
    %v1795 = vpop.f32.mrf.mxu0
    %v1796 = vadd.f32 %v1493, %v1795
    %v1797 = vpop.f32.mrf.mxu0
    %1798 = vmatprep.mubr.f32.mxu0 0.0
    %v1799 = vand.u32 %v228, 4294901760
    %1800 = vmatmul.mubr.f32.gmra.mxu0 %v1799
    %v1801 = vpop.f32.mrf.mxu0
    %v1802 = vadd.f32 %v1501, %v1801
    %v1803 = vpop.f32.mrf.mxu0
    %1804 = vmatprep.mubr.f32.mxu0 0.0
    %v1805 = vand.u32 %v231, 4294901760
    %1806 = vmatmul.mubr.f32.gmra.mxu0 %v1805
    %v1807 = vpop.f32.mrf.mxu0
    %v1808 = vadd.f32 %v1509, %v1807
    %v1809 = vpop.f32.mrf.mxu0
    %1810 = vmatprep.mubr.f32.mxu0 0.0
    %v1811 = vand.u32 %v234, 4294901760
    %1812 = vmatmul.mubr.f32.gmra.mxu0 %v1811
    %v1813 = vpop.f32.mrf.mxu0
    %v1814 = vadd.f32 %v1517, %v1813
    %v1815 = vpop.f32.mrf.mxu0
    %1816 = vmatprep.mubr.f32.mxu0 0.0
    %v1817 = vand.u32 %v237, 4294901760
    %1818 = vmatmul.mubr.f32.gmra.mxu0 %v1817
    %v1819 = vpop.f32.mrf.mxu0
    %v1820 = vadd.f32 %v1525, %v1819
    %v1821 = vpop.f32.mrf.mxu0
    %1822 = vmatprep.mubr.f32.mxu0 0.0
    %v1823 = vand.u32 %v240, 4294901760
    %1824 = vmatmul.mubr.f32.gmra.mxu0 %v1823
    %v1825 = vpop.f32.mrf.mxu0
    %v1826 = vadd.f32 %v1533, %v1825
    %v1827 = vpop.f32.mrf.mxu0
    %1828 = vmatprep.mubr.f32.mxu0 0.0
    %v1829 = vand.u32 %v243, 4294901760
    %1830 = vmatmul.mubr.f32.gmra.mxu0 %v1829
    %v1831 = vpop.f32.mrf.mxu0
    %v1832 = vadd.f32 %v1541, %v1831
    %v1833 = vpop.f32.mrf.mxu0
    %1834 = vmatprep.mubr.f32.mxu0 0.0
    %v1835 = vand.u32 %v246, 4294901760
    %1836 = vmatmul.mubr.f32.gmra.mxu0 %v1835
    %v1837 = vpop.f32.mrf.mxu0
    %v1838 = vadd.f32 %v1549, %v1837
    %v1839 = vpop.f32.mrf.mxu0
    %1840 = vmatprep.mubr.f32.mxu0 0.0
    %v1841 = vand.u32 %v249, 4294901760
    %1842 = vmatmul.mubr.f32.gmra.mxu0 %v1841
    %v1843 = vpop.f32.mrf.mxu0
    %v1844 = vadd.f32 %v1557, %v1843
    %v1845 = vpop.f32.mrf.mxu0
    %1846 = vmatprep.mubr.f32.mxu0 0.0
    %v1847 = vand.u32 %v252, 4294901760
    %1848 = vmatmul.mubr.f32.gmra.mxu0 %v1847
    %v1849 = vpop.f32.mrf.mxu0
    %v1850 = vadd.f32 %v1565, %v1849
    %v1851 = vpop.f32.mrf.mxu0
    %1852 = vmatprep.mubr.f32.mxu0 0.0
    %v1853 = vand.u32 %v255, 4294901760
    %1854 = vmatmul.mubr.f32.gmra.mxu0 %v1853
    %v1855 = vpop.f32.mrf.mxu0
    %v1856 = vadd.f32 %v1573, %v1855
    %v1857 = vpop.f32.mrf.mxu0
    %1858 = vmatprep.mubr.f32.mxu0 0.0
    %v1859 = vand.u32 %v258, 4294901760
    %1860 = vmatmul.mubr.f32.gmra.mxu0 %v1859
    %v1861 = vpop.f32.mrf.mxu0
    %v1862 = vadd.f32 %v1581, %v1861
    %v1863 = vpop.f32.mrf.mxu0
    %1864 = vdwg.mxu0
    %1865 = vmatprep.subr.mxu0 0.0
    %1866 = vmatpush1.msra.mxu0 0.0
    %1867 = vmatprep.subr.mxu0 0.0
    %1868 = vmatpush1.msra.mxu0 0.0
    %1869 = vmatprep.subr.mxu0 0.0
    %1870 = vmatpush1.msra.mxu0 0.0
    %1871 = vmatprep.subr.mxu0 0.0
    %1872 = vmatpush1.msra.mxu0 0.0
    %1873 = vmatprep.subr.mxu0 0.0
    %1874 = vmatpush1.msra.mxu0 0.0
    %1875 = vmatprep.subr.mxu0 0.0
    %1876 = vmatpush1.msra.mxu0 0.0
    %1877 = vmatprep.subr.mxu0 0.0
    %1878 = vmatpush1.msra.mxu0 0.0
    %1879 = vmatprep.subr.mxu0 0.0
    %1880 = vmatpush1.msra.mxu0 0.0
    %1881 = vmatprep.subr.mxu0 0.0
    %v1882 = vand.u32 %v60, 4294901760
    %1883 = vmatpush1.msra.mxu0 %v1882
    %1884 = vmatprep.subr.mxu0 0.0
    %v1885 = vand.u32 %v59, 4294901760
    %1886 = vmatpush1.msra.mxu0 %v1885
    %1887 = vmatprep.subr.mxu0 0.0
    %v1888 = vand.u32 %v58, 4294901760
    %1889 = vmatpush1.msra.mxu0 %v1888
    %1890 = vmatprep.subr.mxu0 0.0
    %v1891 = vand.u32 %v57, 4294901760
    %1892 = vmatpush1.msra.mxu0 %v1891
    %1893 = vmatprep.subr.mxu0 0.0
    %v1894 = vand.u32 %v56, 4294901760
    %1895 = vmatpush1.msra.mxu0 %v1894
    %1896 = vmatprep.subr.mxu0 0.0
    %v1897 = vand.u32 %v55, 4294901760
    %1898 = vmatpush1.msra.mxu0 %v1897
    %1899 = vmatprep.subr.mxu0 0.0
    %v1900 = vand.u32 %v54, 4294901760
    %1901 = vmatpush1.msra.mxu0 %v1900
    %1902 = vmatprep.subr.mxu0 0.0
    %v1903 = vand.u32 %v53, 4294901760
    %1904 = vmatpush1.msra.mxu0 %v1903
    %1905 = vmatprep.subr.mxu0 0.0
    %1906 = vmatpush2.msra.mxu0 0.0
    %1907 = vmatprep.subr.mxu0 0.0
    %1908 = vmatpush2.msra.mxu0 0.0
    %1909 = vmatprep.subr.mxu0 0.0
    %1910 = vmatpush2.msra.mxu0 0.0
    %1911 = vmatprep.subr.mxu0 0.0
    %1912 = vmatpush2.msra.mxu0 0.0
    %1913 = vmatprep.subr.mxu0 0.0
    %1914 = vmatpush2.msra.mxu0 0.0
    %1915 = vmatprep.subr.mxu0 0.0
    %1916 = vmatpush2.msra.mxu0 0.0
    %1917 = vmatprep.subr.mxu0 0.0
    %1918 = vmatpush2.msra.mxu0 0.0
    %1919 = vmatprep.subr.mxu0 0.0
    %1920 = vmatpush2.msra.mxu0 0.0
    %1921 = vmatprep.subr.mxu0 0.0
    %1922 = vmatpush2.msra.mxu0 0.0
    %1923 = vmatprep.subr.mxu0 0.0
    %1924 = vmatpush2.msra.mxu0 0.0
    %1925 = vmatprep.subr.mxu0 0.0
    %1926 = vmatpush2.msra.mxu0 0.0
    %1927 = vmatprep.subr.mxu0 0.0
    %1928 = vmatpush2.msra.mxu0 0.0
    %1929 = vmatprep.subr.mxu0 0.0
    %1930 = vmatpush2.msra.mxu0 0.0
    %1931 = vmatprep.subr.mxu0 0.0
    %1932 = vmatpush2.msra.mxu0 0.0
    %1933 = vmatprep.subr.mxu0 0.0
    %1934 = vmatpush2.msra.mxu0 0.0
    %1935 = vmatprep.subr.mxu0 0.0
    %1936 = vmatpush2.msra.mxu0 0.0
    %1937 = vmatprep.mubr.f32.mxu0 0.0
    %v1938 = vand.u32 %v165, 4294901760
    %1939 = vmatmul.mubr.f32.gmra.mxu0 %v1938
    %v1940 = vpop.f32.mrf.mxu0
    %v1941 = vadd.f32 %v1676, %v1940
    %v1942 = vpop.f32.mrf.mxu0
    %1943 = vmatprep.mubr.f32.mxu0 0.0
    %v1944 = vand.u32 %v168, 4294901760
    %1945 = vmatmul.mubr.f32.gmra.mxu0 %v1944
    %v1946 = vpop.f32.mrf.mxu0
    %v1947 = vadd.f32 %v1682, %v1946
    %v1948 = vpop.f32.mrf.mxu0
    %1949 = vmatprep.mubr.f32.mxu0 0.0
    %v1950 = vand.u32 %v171, 4294901760
    %1951 = vmatmul.mubr.f32.gmra.mxu0 %v1950
    %v1952 = vpop.f32.mrf.mxu0
    %v1953 = vadd.f32 %v1688, %v1952
    %v1954 = vpop.f32.mrf.mxu0
    %1955 = vmatprep.mubr.f32.mxu0 0.0
    %v1956 = vand.u32 %v174, 4294901760
    %1957 = vmatmul.mubr.f32.gmra.mxu0 %v1956
    %v1958 = vpop.f32.mrf.mxu0
    %v1959 = vadd.f32 %v1694, %v1958
    %v1960 = vpop.f32.mrf.mxu0
    %1961 = vmatprep.mubr.f32.mxu0 0.0
    %v1962 = vand.u32 %v177, 4294901760
    %1963 = vmatmul.mubr.f32.gmra.mxu0 %v1962
    %v1964 = vpop.f32.mrf.mxu0
    %v1965 = vadd.f32 %v1700, %v1964
    %v1966 = vpop.f32.mrf.mxu0
    %1967 = vmatprep.mubr.f32.mxu0 0.0
    %v1968 = vand.u32 %v180, 4294901760
    %1969 = vmatmul.mubr.f32.gmra.mxu0 %v1968
    %v1970 = vpop.f32.mrf.mxu0
    %v1971 = vadd.f32 %v1706, %v1970
    %v1972 = vpop.f32.mrf.mxu0
    %1973 = vmatprep.mubr.f32.mxu0 0.0
    %v1974 = vand.u32 %v183, 4294901760
    %1975 = vmatmul.mubr.f32.gmra.mxu0 %v1974
    %v1976 = vpop.f32.mrf.mxu0
    %v1977 = vadd.f32 %v1712, %v1976
    %v1978 = vpop.f32.mrf.mxu0
    %1979 = vmatprep.mubr.f32.mxu0 0.0
    %v1980 = vand.u32 %v186, 4294901760
    %1981 = vmatmul.mubr.f32.gmra.mxu0 %v1980
    %v1982 = vpop.f32.mrf.mxu0
    %v1983 = vadd.f32 %v1718, %v1982
    %v1984 = vpop.f32.mrf.mxu0
    %1985 = vmatprep.mubr.f32.mxu0 0.0
    %v1986 = vand.u32 %v189, 4294901760
    %1987 = vmatmul.mubr.f32.gmra.mxu0 %v1986
    %v1988 = vpop.f32.mrf.mxu0
    %v1989 = vadd.f32 %v1724, %v1988
    %v1990 = vpop.f32.mrf.mxu0
    %1991 = vmatprep.mubr.f32.mxu0 0.0
    %v1992 = vand.u32 %v192, 4294901760
    %1993 = vmatmul.mubr.f32.gmra.mxu0 %v1992
    %v1994 = vpop.f32.mrf.mxu0
    %v1995 = vadd.f32 %v1730, %v1994
    %v1996 = vpop.f32.mrf.mxu0
    %1997 = vmatprep.mubr.f32.mxu0 0.0
    %v1998 = vand.u32 %v195, 4294901760
    %1999 = vmatmul.mubr.f32.gmra.mxu0 %v1998
    %v2000 = vpop.f32.mrf.mxu0
    %v2001 = vadd.f32 %v1736, %v2000
    %v2002 = vpop.f32.mrf.mxu0
    %2003 = vmatprep.mubr.f32.mxu0 0.0
    %v2004 = vand.u32 %v198, 4294901760
    %2005 = vmatmul.mubr.f32.gmra.mxu0 %v2004
    %v2006 = vpop.f32.mrf.mxu0
    %v2007 = vadd.f32 %v1742, %v2006
    %v2008 = vpop.f32.mrf.mxu0
    %2009 = vmatprep.mubr.f32.mxu0 0.0
    %v2010 = vand.u32 %v201, 4294901760
    %2011 = vmatmul.mubr.f32.gmra.mxu0 %v2010
    %v2012 = vpop.f32.mrf.mxu0
    %v2013 = vadd.f32 %v1748, %v2012
    %v2014 = vpop.f32.mrf.mxu0
    %2015 = vmatprep.mubr.f32.mxu0 0.0
    %v2016 = vand.u32 %v204, 4294901760
    %2017 = vmatmul.mubr.f32.gmra.mxu0 %v2016
    %v2018 = vpop.f32.mrf.mxu0
    %v2019 = vadd.f32 %v1754, %v2018
    %v2020 = vpop.f32.mrf.mxu0
    %2021 = vmatprep.mubr.f32.mxu0 0.0
    %v2022 = vand.u32 %v207, 4294901760
    %2023 = vmatmul.mubr.f32.gmra.mxu0 %v2022
    %v2024 = vpop.f32.mrf.mxu0
    %v2025 = vadd.f32 %v1760, %v2024
    %v2026 = vpop.f32.mrf.mxu0
    %2027 = vmatprep.mubr.f32.mxu0 0.0
    %v2028 = vand.u32 %v210, 4294901760
    %2029 = vmatmul.mubr.f32.gmra.mxu0 %v2028
    %v2030 = vpop.f32.mrf.mxu0
    %v2031 = vadd.f32 %v1766, %v2030
    %v2032 = vpop.f32.mrf.mxu0
    %2033 = vmatprep.mubr.f32.mxu0 0.0
    %v2034 = vand.u32 %v213, 4294901760
    %2035 = vmatmul.mubr.f32.gmra.mxu0 %v2034
    %v2036 = vpop.f32.mrf.mxu0
    %v2037 = vadd.f32 %v1772, %v2036
    %v2038 = vpop.f32.mrf.mxu0
    %2039 = vmatprep.mubr.f32.mxu0 0.0
    %v2040 = vand.u32 %v216, 4294901760
    %2041 = vmatmul.mubr.f32.gmra.mxu0 %v2040
    %v2042 = vpop.f32.mrf.mxu0
    %v2043 = vadd.f32 %v1778, %v2042
    %v2044 = vpop.f32.mrf.mxu0
    %2045 = vmatprep.mubr.f32.mxu0 0.0
    %v2046 = vand.u32 %v219, 4294901760
    %2047 = vmatmul.mubr.f32.gmra.mxu0 %v2046
    %v2048 = vpop.f32.mrf.mxu0
    %v2049 = vadd.f32 %v1784, %v2048
    %v2050 = vpop.f32.mrf.mxu0
    %2051 = vmatprep.mubr.f32.mxu0 0.0
    %v2052 = vand.u32 %v222, 4294901760
    %2053 = vmatmul.mubr.f32.gmra.mxu0 %v2052
    %v2054 = vpop.f32.mrf.mxu0
    %v2055 = vadd.f32 %v1790, %v2054
    %v2056 = vpop.f32.mrf.mxu0
    %2057 = vmatprep.mubr.f32.mxu0 0.0
    %v2058 = vand.u32 %v225, 4294901760
    %2059 = vmatmul.mubr.f32.gmra.mxu0 %v2058
    %v2060 = vpop.f32.mrf.mxu0
    %v2061 = vadd.f32 %v1796, %v2060
    %v2062 = vpop.f32.mrf.mxu0
    %2063 = vmatprep.mubr.f32.mxu0 0.0
    %v2064 = vand.u32 %v228, 4294901760
    %2065 = vmatmul.mubr.f32.gmra.mxu0 %v2064
    %v2066 = vpop.f32.mrf.mxu0
    %v2067 = vadd.f32 %v1802, %v2066
    %v2068 = vpop.f32.mrf.mxu0
    %2069 = vmatprep.mubr.f32.mxu0 0.0
    %v2070 = vand.u32 %v231, 4294901760
    %2071 = vmatmul.mubr.f32.gmra.mxu0 %v2070
    %v2072 = vpop.f32.mrf.mxu0
    %v2073 = vadd.f32 %v1808, %v2072
    %v2074 = vpop.f32.mrf.mxu0
    %2075 = vmatprep.mubr.f32.mxu0 0.0
    %v2076 = vand.u32 %v234, 4294901760
    %2077 = vmatmul.mubr.f32.gmra.mxu0 %v2076
    %v2078 = vpop.f32.mrf.mxu0
    %v2079 = vadd.f32 %v1814, %v2078
    %v2080 = vpop.f32.mrf.mxu0
    %2081 = vmatprep.mubr.f32.mxu0 0.0
    %v2082 = vand.u32 %v237, 4294901760
    %2083 = vmatmul.mubr.f32.gmra.mxu0 %v2082
    %v2084 = vpop.f32.mrf.mxu0
    %v2085 = vadd.f32 %v1820, %v2084
    %v2086 = vpop.f32.mrf.mxu0
    %2087 = vmatprep.mubr.f32.mxu0 0.0
    %v2088 = vand.u32 %v240, 4294901760
    %2089 = vmatmul.mubr.f32.gmra.mxu0 %v2088
    %v2090 = vpop.f32.mrf.mxu0
    %v2091 = vadd.f32 %v1826, %v2090
    %v2092 = vpop.f32.mrf.mxu0
    %2093 = vmatprep.mubr.f32.mxu0 0.0
    %v2094 = vand.u32 %v243, 4294901760
    %2095 = vmatmul.mubr.f32.gmra.mxu0 %v2094
    %v2096 = vpop.f32.mrf.mxu0
    %v2097 = vadd.f32 %v1832, %v2096
    %v2098 = vpop.f32.mrf.mxu0
    %2099 = vmatprep.mubr.f32.mxu0 0.0
    %v2100 = vand.u32 %v246, 4294901760
    %2101 = vmatmul.mubr.f32.gmra.mxu0 %v2100
    %v2102 = vpop.f32.mrf.mxu0
    %v2103 = vadd.f32 %v1838, %v2102
    %v2104 = vpop.f32.mrf.mxu0
    %2105 = vmatprep.mubr.f32.mxu0 0.0
    %v2106 = vand.u32 %v249, 4294901760
    %2107 = vmatmul.mubr.f32.gmra.mxu0 %v2106
    %v2108 = vpop.f32.mrf.mxu0
    %v2109 = vadd.f32 %v1844, %v2108
    %v2110 = vpop.f32.mrf.mxu0
    %2111 = vmatprep.mubr.f32.mxu0 0.0
    %v2112 = vand.u32 %v252, 4294901760
    %2113 = vmatmul.mubr.f32.gmra.mxu0 %v2112
    %v2114 = vpop.f32.mrf.mxu0
    %v2115 = vadd.f32 %v1850, %v2114
    %v2116 = vpop.f32.mrf.mxu0
    %2117 = vmatprep.mubr.f32.mxu0 0.0
    %v2118 = vand.u32 %v255, 4294901760
    %2119 = vmatmul.mubr.f32.gmra.mxu0 %v2118
    %v2120 = vpop.f32.mrf.mxu0
    %v2121 = vadd.f32 %v1856, %v2120
    %v2122 = vpop.f32.mrf.mxu0
    %2123 = vmatprep.mubr.f32.mxu0 0.0
    %v2124 = vand.u32 %v258, 4294901760
    %2125 = vmatmul.mubr.f32.gmra.mxu0 %v2124
    %v2126 = vpop.f32.mrf.mxu0
    %v2127 = vadd.f32 %v1862, %v2126
    %v2128 = vpop.f32.mrf.mxu0
    %2129 = vdwg.mxu0
    %2130 = vmatprep.subr.mxu0 0.0
    %2131 = vmatpush1.msra.mxu0 0.0
    %2132 = vmatprep.subr.mxu0 0.0
    %2133 = vmatpush1.msra.mxu0 0.0
    %2134 = vmatprep.subr.mxu0 0.0
    %2135 = vmatpush1.msra.mxu0 0.0
    %2136 = vmatprep.subr.mxu0 0.0
    %2137 = vmatpush1.msra.mxu0 0.0
    %2138 = vmatprep.subr.mxu0 0.0
    %2139 = vmatpush1.msra.mxu0 0.0
    %2140 = vmatprep.subr.mxu0 0.0
    %2141 = vmatpush1.msra.mxu0 0.0
    %2142 = vmatprep.subr.mxu0 0.0
    %2143 = vmatpush1.msra.mxu0 0.0
    %2144 = vmatprep.subr.mxu0 0.0
    %2145 = vmatpush1.msra.mxu0 0.0
    %2146 = vmatprep.subr.mxu0 0.0
    %v2147 = vand.u32 %v88, 4294901760
    %2148 = vmatpush1.msra.mxu0 %v2147
    %2149 = vmatprep.subr.mxu0 0.0
    %v2150 = vand.u32 %v87, 4294901760
    %2151 = vmatpush1.msra.mxu0 %v2150
    %2152 = vmatprep.subr.mxu0 0.0
    %v2153 = vand.u32 %v86, 4294901760
    %2154 = vmatpush1.msra.mxu0 %v2153
    %2155 = vmatprep.subr.mxu0 0.0
    %v2156 = vand.u32 %v85, 4294901760
    %2157 = vmatpush1.msra.mxu0 %v2156
    %2158 = vmatprep.subr.mxu0 0.0
    %v2159 = vand.u32 %v84, 4294901760
    %2160 = vmatpush1.msra.mxu0 %v2159
    %2161 = vmatprep.subr.mxu0 0.0
    %v2162 = vand.u32 %v83, 4294901760
    %2163 = vmatpush1.msra.mxu0 %v2162
    %2164 = vmatprep.subr.mxu0 0.0
    %v2165 = vand.u32 %v82, 4294901760
    %2166 = vmatpush1.msra.mxu0 %v2165
    %2167 = vmatprep.subr.mxu0 0.0
    %v2168 = vand.u32 %v81, 4294901760
    %2169 = vmatpush1.msra.mxu0 %v2168
    %2170 = vmatprep.subr.mxu0 0.0
    %2171 = vmatpush2.msra.mxu0 0.0
    %2172 = vmatprep.subr.mxu0 0.0
    %2173 = vmatpush2.msra.mxu0 0.0
    %2174 = vmatprep.subr.mxu0 0.0
    %2175 = vmatpush2.msra.mxu0 0.0
    %2176 = vmatprep.subr.mxu0 0.0
    %2177 = vmatpush2.msra.mxu0 0.0
    %2178 = vmatprep.subr.mxu0 0.0
    %2179 = vmatpush2.msra.mxu0 0.0
    %2180 = vmatprep.subr.mxu0 0.0
    %2181 = vmatpush2.msra.mxu0 0.0
    %2182 = vmatprep.subr.mxu0 0.0
    %2183 = vmatpush2.msra.mxu0 0.0
    %2184 = vmatprep.subr.mxu0 0.0
    %2185 = vmatpush2.msra.mxu0 0.0
    %2186 = vmatprep.subr.mxu0 0.0
    %2187 = vmatpush2.msra.mxu0 0.0
    %2188 = vmatprep.subr.mxu0 0.0
    %2189 = vmatpush2.msra.mxu0 0.0
    %2190 = vmatprep.subr.mxu0 0.0
    %2191 = vmatpush2.msra.mxu0 0.0
    %2192 = vmatprep.subr.mxu0 0.0
    %2193 = vmatpush2.msra.mxu0 0.0
    %2194 = vmatprep.subr.mxu0 0.0
    %2195 = vmatpush2.msra.mxu0 0.0
    %2196 = vmatprep.subr.mxu0 0.0
    %2197 = vmatpush2.msra.mxu0 0.0
    %2198 = vmatprep.subr.mxu0 0.0
    %2199 = vmatpush2.msra.mxu0 0.0
    %2200 = vmatprep.subr.mxu0 0.0
    %2201 = vmatpush2.msra.mxu0 0.0
    %2202 = vmatprep.mubr.f32.mxu0 0.0
    %v2203 = vand.u32 %v165, 4294901760
    %v2204 = vsub.f32 %v165, %v2203
    %v2205 = vand.u32 %v2204, 4294901760
    %v2206 = vsub.f32 %v2204, %v2205
    %v2207 = vand.u32 %v2206, 4294901760
    %2208 = vmatmul.mubr.f32.gmra.mxu0 %v2207
    %v2209 = vpop.f32.mrf.mxu0
    %v2210 = vadd.f32 0.0, %v2209
    %v2211 = vpop.f32.mrf.mxu0
    %2212 = vmatprep.mubr.f32.mxu0 0.0
    %v2213 = vand.u32 %v168, 4294901760
    %v2214 = vsub.f32 %v168, %v2213
    %v2215 = vand.u32 %v2214, 4294901760
    %v2216 = vsub.f32 %v2214, %v2215
    %v2217 = vand.u32 %v2216, 4294901760
    %2218 = vmatmul.mubr.f32.gmra.mxu0 %v2217
    %v2219 = vpop.f32.mrf.mxu0
    %v2220 = vadd.f32 0.0, %v2219
    %v2221 = vpop.f32.mrf.mxu0
    %2222 = vmatprep.mubr.f32.mxu0 0.0
    %v2223 = vand.u32 %v171, 4294901760
    %v2224 = vsub.f32 %v171, %v2223
    %v2225 = vand.u32 %v2224, 4294901760
    %v2226 = vsub.f32 %v2224, %v2225
    %v2227 = vand.u32 %v2226, 4294901760
    %2228 = vmatmul.mubr.f32.gmra.mxu0 %v2227
    %v2229 = vpop.f32.mrf.mxu0
    %v2230 = vadd.f32 0.0, %v2229
    %v2231 = vpop.f32.mrf.mxu0
    %2232 = vmatprep.mubr.f32.mxu0 0.0
    %v2233 = vand.u32 %v174, 4294901760
    %v2234 = vsub.f32 %v174, %v2233
    %v2235 = vand.u32 %v2234, 4294901760
    %v2236 = vsub.f32 %v2234, %v2235
    %v2237 = vand.u32 %v2236, 4294901760
    %2238 = vmatmul.mubr.f32.gmra.mxu0 %v2237
    %v2239 = vpop.f32.mrf.mxu0
    %v2240 = vadd.f32 0.0, %v2239
    %v2241 = vpop.f32.mrf.mxu0
    %2242 = vmatprep.mubr.f32.mxu0 0.0
    %v2243 = vand.u32 %v177, 4294901760
    %v2244 = vsub.f32 %v177, %v2243
    %v2245 = vand.u32 %v2244, 4294901760
    %v2246 = vsub.f32 %v2244, %v2245
    %v2247 = vand.u32 %v2246, 4294901760
    %2248 = vmatmul.mubr.f32.gmra.mxu0 %v2247
    %v2249 = vpop.f32.mrf.mxu0
    %v2250 = vadd.f32 0.0, %v2249
    %v2251 = vpop.f32.mrf.mxu0
    %2252 = vmatprep.mubr.f32.mxu0 0.0
    %v2253 = vand.u32 %v180, 4294901760
    %v2254 = vsub.f32 %v180, %v2253
    %v2255 = vand.u32 %v2254, 4294901760
    %v2256 = vsub.f32 %v2254, %v2255
    %v2257 = vand.u32 %v2256, 4294901760
    %2258 = vmatmul.mubr.f32.gmra.mxu0 %v2257
    %v2259 = vpop.f32.mrf.mxu0
    %v2260 = vadd.f32 0.0, %v2259
    %v2261 = vpop.f32.mrf.mxu0
    %2262 = vmatprep.mubr.f32.mxu0 0.0
    %v2263 = vand.u32 %v183, 4294901760
    %v2264 = vsub.f32 %v183, %v2263
    %v2265 = vand.u32 %v2264, 4294901760
    %v2266 = vsub.f32 %v2264, %v2265
    %v2267 = vand.u32 %v2266, 4294901760
    %2268 = vmatmul.mubr.f32.gmra.mxu0 %v2267
    %v2269 = vpop.f32.mrf.mxu0
    %v2270 = vadd.f32 0.0, %v2269
    %v2271 = vpop.f32.mrf.mxu0
    %2272 = vmatprep.mubr.f32.mxu0 0.0
    %v2273 = vand.u32 %v186, 4294901760
    %v2274 = vsub.f32 %v186, %v2273
    %v2275 = vand.u32 %v2274, 4294901760
    %v2276 = vsub.f32 %v2274, %v2275
    %v2277 = vand.u32 %v2276, 4294901760
    %2278 = vmatmul.mubr.f32.gmra.mxu0 %v2277
    %v2279 = vpop.f32.mrf.mxu0
    %v2280 = vadd.f32 0.0, %v2279
    %v2281 = vpop.f32.mrf.mxu0
    %2282 = vmatprep.mubr.f32.mxu0 0.0
    %v2283 = vand.u32 %v189, 4294901760
    %v2284 = vsub.f32 %v189, %v2283
    %v2285 = vand.u32 %v2284, 4294901760
    %v2286 = vsub.f32 %v2284, %v2285
    %v2287 = vand.u32 %v2286, 4294901760
    %2288 = vmatmul.mubr.f32.gmra.mxu0 %v2287
    %v2289 = vpop.f32.mrf.mxu0
    %v2290 = vadd.f32 0.0, %v2289
    %v2291 = vpop.f32.mrf.mxu0
    %2292 = vmatprep.mubr.f32.mxu0 0.0
    %v2293 = vand.u32 %v192, 4294901760
    %v2294 = vsub.f32 %v192, %v2293
    %v2295 = vand.u32 %v2294, 4294901760
    %v2296 = vsub.f32 %v2294, %v2295
    %v2297 = vand.u32 %v2296, 4294901760
    %2298 = vmatmul.mubr.f32.gmra.mxu0 %v2297
    %v2299 = vpop.f32.mrf.mxu0
    %v2300 = vadd.f32 0.0, %v2299
    %v2301 = vpop.f32.mrf.mxu0
    %2302 = vmatprep.mubr.f32.mxu0 0.0
    %v2303 = vand.u32 %v195, 4294901760
    %v2304 = vsub.f32 %v195, %v2303
    %v2305 = vand.u32 %v2304, 4294901760
    %v2306 = vsub.f32 %v2304, %v2305
    %v2307 = vand.u32 %v2306, 4294901760
    %2308 = vmatmul.mubr.f32.gmra.mxu0 %v2307
    %v2309 = vpop.f32.mrf.mxu0
    %v2310 = vadd.f32 0.0, %v2309
    %v2311 = vpop.f32.mrf.mxu0
    %2312 = vmatprep.mubr.f32.mxu0 0.0
    %v2313 = vand.u32 %v198, 4294901760
    %v2314 = vsub.f32 %v198, %v2313
    %v2315 = vand.u32 %v2314, 4294901760
    %v2316 = vsub.f32 %v2314, %v2315
    %v2317 = vand.u32 %v2316, 4294901760
    %2318 = vmatmul.mubr.f32.gmra.mxu0 %v2317
    %v2319 = vpop.f32.mrf.mxu0
    %v2320 = vadd.f32 0.0, %v2319
    %v2321 = vpop.f32.mrf.mxu0
    %2322 = vmatprep.mubr.f32.mxu0 0.0
    %v2323 = vand.u32 %v201, 4294901760
    %v2324 = vsub.f32 %v201, %v2323
    %v2325 = vand.u32 %v2324, 4294901760
    %v2326 = vsub.f32 %v2324, %v2325
    %v2327 = vand.u32 %v2326, 4294901760
    %2328 = vmatmul.mubr.f32.gmra.mxu0 %v2327
    %v2329 = vpop.f32.mrf.mxu0
    %v2330 = vadd.f32 0.0, %v2329
    %v2331 = vpop.f32.mrf.mxu0
    %2332 = vmatprep.mubr.f32.mxu0 0.0
    %v2333 = vand.u32 %v204, 4294901760
    %v2334 = vsub.f32 %v204, %v2333
    %v2335 = vand.u32 %v2334, 4294901760
    %v2336 = vsub.f32 %v2334, %v2335
    %v2337 = vand.u32 %v2336, 4294901760
    %2338 = vmatmul.mubr.f32.gmra.mxu0 %v2337
    %v2339 = vpop.f32.mrf.mxu0
    %v2340 = vadd.f32 0.0, %v2339
    %v2341 = vpop.f32.mrf.mxu0
    %2342 = vmatprep.mubr.f32.mxu0 0.0
    %v2343 = vand.u32 %v207, 4294901760
    %v2344 = vsub.f32 %v207, %v2343
    %v2345 = vand.u32 %v2344, 4294901760
    %v2346 = vsub.f32 %v2344, %v2345
    %v2347 = vand.u32 %v2346, 4294901760
    %2348 = vmatmul.mubr.f32.gmra.mxu0 %v2347
    %v2349 = vpop.f32.mrf.mxu0
    %v2350 = vadd.f32 0.0, %v2349
    %v2351 = vpop.f32.mrf.mxu0
    %2352 = vmatprep.mubr.f32.mxu0 0.0
    %v2353 = vand.u32 %v210, 4294901760
    %v2354 = vsub.f32 %v210, %v2353
    %v2355 = vand.u32 %v2354, 4294901760
    %v2356 = vsub.f32 %v2354, %v2355
    %v2357 = vand.u32 %v2356, 4294901760
    %2358 = vmatmul.mubr.f32.gmra.mxu0 %v2357
    %v2359 = vpop.f32.mrf.mxu0
    %v2360 = vadd.f32 0.0, %v2359
    %v2361 = vpop.f32.mrf.mxu0
    %2362 = vmatprep.mubr.f32.mxu0 0.0
    %v2363 = vand.u32 %v213, 4294901760
    %v2364 = vsub.f32 %v213, %v2363
    %v2365 = vand.u32 %v2364, 4294901760
    %v2366 = vsub.f32 %v2364, %v2365
    %v2367 = vand.u32 %v2366, 4294901760
    %2368 = vmatmul.mubr.f32.gmra.mxu0 %v2367
    %v2369 = vpop.f32.mrf.mxu0
    %v2370 = vadd.f32 0.0, %v2369
    %v2371 = vpop.f32.mrf.mxu0
    %2372 = vmatprep.mubr.f32.mxu0 0.0
    %v2373 = vand.u32 %v216, 4294901760
    %v2374 = vsub.f32 %v216, %v2373
    %v2375 = vand.u32 %v2374, 4294901760
    %v2376 = vsub.f32 %v2374, %v2375
    %v2377 = vand.u32 %v2376, 4294901760
    %2378 = vmatmul.mubr.f32.gmra.mxu0 %v2377
    %v2379 = vpop.f32.mrf.mxu0
    %v2380 = vadd.f32 0.0, %v2379
    %v2381 = vpop.f32.mrf.mxu0
    %2382 = vmatprep.mubr.f32.mxu0 0.0
    %v2383 = vand.u32 %v219, 4294901760
    %v2384 = vsub.f32 %v219, %v2383
    %v2385 = vand.u32 %v2384, 4294901760
    %v2386 = vsub.f32 %v2384, %v2385
    %v2387 = vand.u32 %v2386, 4294901760
    %2388 = vmatmul.mubr.f32.gmra.mxu0 %v2387
    %v2389 = vpop.f32.mrf.mxu0
    %v2390 = vadd.f32 0.0, %v2389
    %v2391 = vpop.f32.mrf.mxu0
    %2392 = vmatprep.mubr.f32.mxu0 0.0
    %v2393 = vand.u32 %v222, 4294901760
    %v2394 = vsub.f32 %v222, %v2393
    %v2395 = vand.u32 %v2394, 4294901760
    %v2396 = vsub.f32 %v2394, %v2395
    %v2397 = vand.u32 %v2396, 4294901760
    %2398 = vmatmul.mubr.f32.gmra.mxu0 %v2397
    %v2399 = vpop.f32.mrf.mxu0
    %v2400 = vadd.f32 0.0, %v2399
    %v2401 = vpop.f32.mrf.mxu0
    %2402 = vmatprep.mubr.f32.mxu0 0.0
    %v2403 = vand.u32 %v225, 4294901760
    %v2404 = vsub.f32 %v225, %v2403
    %v2405 = vand.u32 %v2404, 4294901760
    %v2406 = vsub.f32 %v2404, %v2405
    %v2407 = vand.u32 %v2406, 4294901760
    %2408 = vmatmul.mubr.f32.gmra.mxu0 %v2407
    %v2409 = vpop.f32.mrf.mxu0
    %v2410 = vadd.f32 0.0, %v2409
    %v2411 = vpop.f32.mrf.mxu0
    %2412 = vmatprep.mubr.f32.mxu0 0.0
    %v2413 = vand.u32 %v228, 4294901760
    %v2414 = vsub.f32 %v228, %v2413
    %v2415 = vand.u32 %v2414, 4294901760
    %v2416 = vsub.f32 %v2414, %v2415
    %v2417 = vand.u32 %v2416, 4294901760
    %2418 = vmatmul.mubr.f32.gmra.mxu0 %v2417
    %v2419 = vpop.f32.mrf.mxu0
    %v2420 = vadd.f32 0.0, %v2419
    %v2421 = vpop.f32.mrf.mxu0
    %2422 = vmatprep.mubr.f32.mxu0 0.0
    %v2423 = vand.u32 %v231, 4294901760
    %v2424 = vsub.f32 %v231, %v2423
    %v2425 = vand.u32 %v2424, 4294901760
    %v2426 = vsub.f32 %v2424, %v2425
    %v2427 = vand.u32 %v2426, 4294901760
    %2428 = vmatmul.mubr.f32.gmra.mxu0 %v2427
    %v2429 = vpop.f32.mrf.mxu0
    %v2430 = vadd.f32 0.0, %v2429
    %v2431 = vpop.f32.mrf.mxu0
    %2432 = vmatprep.mubr.f32.mxu0 0.0
    %v2433 = vand.u32 %v234, 4294901760
    %v2434 = vsub.f32 %v234, %v2433
    %v2435 = vand.u32 %v2434, 4294901760
    %v2436 = vsub.f32 %v2434, %v2435
    %v2437 = vand.u32 %v2436, 4294901760
    %2438 = vmatmul.mubr.f32.gmra.mxu0 %v2437
    %v2439 = vpop.f32.mrf.mxu0
    %v2440 = vadd.f32 0.0, %v2439
    %v2441 = vpop.f32.mrf.mxu0
    %2442 = vmatprep.mubr.f32.mxu0 0.0
    %v2443 = vand.u32 %v237, 4294901760
    %v2444 = vsub.f32 %v237, %v2443
    %v2445 = vand.u32 %v2444, 4294901760
    %v2446 = vsub.f32 %v2444, %v2445
    %v2447 = vand.u32 %v2446, 4294901760
    %2448 = vmatmul.mubr.f32.gmra.mxu0 %v2447
    %v2449 = vpop.f32.mrf.mxu0
    %v2450 = vadd.f32 0.0, %v2449
    %v2451 = vpop.f32.mrf.mxu0
    %2452 = vmatprep.mubr.f32.mxu0 0.0
    %v2453 = vand.u32 %v240, 4294901760
    %v2454 = vsub.f32 %v240, %v2453
    %v2455 = vand.u32 %v2454, 4294901760
    %v2456 = vsub.f32 %v2454, %v2455
    %v2457 = vand.u32 %v2456, 4294901760
    %2458 = vmatmul.mubr.f32.gmra.mxu0 %v2457
    %v2459 = vpop.f32.mrf.mxu0
    %v2460 = vadd.f32 0.0, %v2459
    %v2461 = vpop.f32.mrf.mxu0
    %2462 = vmatprep.mubr.f32.mxu0 0.0
    %v2463 = vand.u32 %v243, 4294901760
    %v2464 = vsub.f32 %v243, %v2463
    %v2465 = vand.u32 %v2464, 4294901760
    %v2466 = vsub.f32 %v2464, %v2465
    %v2467 = vand.u32 %v2466, 4294901760
    %2468 = vmatmul.mubr.f32.gmra.mxu0 %v2467
    %v2469 = vpop.f32.mrf.mxu0
    %v2470 = vadd.f32 0.0, %v2469
    %v2471 = vpop.f32.mrf.mxu0
    %2472 = vmatprep.mubr.f32.mxu0 0.0
    %v2473 = vand.u32 %v246, 4294901760
    %v2474 = vsub.f32 %v246, %v2473
    %v2475 = vand.u32 %v2474, 4294901760
    %v2476 = vsub.f32 %v2474, %v2475
    %v2477 = vand.u32 %v2476, 4294901760
    %2478 = vmatmul.mubr.f32.gmra.mxu0 %v2477
    %v2479 = vpop.f32.mrf.mxu0
    %v2480 = vadd.f32 0.0, %v2479
    %v2481 = vpop.f32.mrf.mxu0
    %2482 = vmatprep.mubr.f32.mxu0 0.0
    %v2483 = vand.u32 %v249, 4294901760
    %v2484 = vsub.f32 %v249, %v2483
    %v2485 = vand.u32 %v2484, 4294901760
    %v2486 = vsub.f32 %v2484, %v2485
    %v2487 = vand.u32 %v2486, 4294901760
    %2488 = vmatmul.mubr.f32.gmra.mxu0 %v2487
    %v2489 = vpop.f32.mrf.mxu0
    %v2490 = vadd.f32 0.0, %v2489
    %v2491 = vpop.f32.mrf.mxu0
    %2492 = vmatprep.mubr.f32.mxu0 0.0
    %v2493 = vand.u32 %v252, 4294901760
    %v2494 = vsub.f32 %v252, %v2493
    %v2495 = vand.u32 %v2494, 4294901760
    %v2496 = vsub.f32 %v2494, %v2495
    %v2497 = vand.u32 %v2496, 4294901760
    %2498 = vmatmul.mubr.f32.gmra.mxu0 %v2497
    %v2499 = vpop.f32.mrf.mxu0
    %v2500 = vadd.f32 0.0, %v2499
    %v2501 = vpop.f32.mrf.mxu0
    %2502 = vmatprep.mubr.f32.mxu0 0.0
    %v2503 = vand.u32 %v255, 4294901760
    %v2504 = vsub.f32 %v255, %v2503
    %v2505 = vand.u32 %v2504, 4294901760
    %v2506 = vsub.f32 %v2504, %v2505
    %v2507 = vand.u32 %v2506, 4294901760
    %2508 = vmatmul.mubr.f32.gmra.mxu0 %v2507
    %v2509 = vpop.f32.mrf.mxu0
    %v2510 = vadd.f32 0.0, %v2509
    %v2511 = vpop.f32.mrf.mxu0
    %2512 = vmatprep.mubr.f32.mxu0 0.0
    %v2513 = vand.u32 %v258, 4294901760
    %v2514 = vsub.f32 %v258, %v2513
    %v2515 = vand.u32 %v2514, 4294901760
    %v2516 = vsub.f32 %v2514, %v2515
    %v2517 = vand.u32 %v2516, 4294901760
    %2518 = vmatmul.mubr.f32.gmra.mxu0 %v2517
    %v2519 = vpop.f32.mrf.mxu0
    %v2520 = vadd.f32 0.0, %v2519
    %v2521 = vpop.f32.mrf.mxu0
    %2522 = vdwg.mxu0
    %2523 = vmatprep.subr.mxu0 0.0
    %2524 = vmatpush1.msra.mxu0 0.0
    %2525 = vmatprep.subr.mxu0 0.0
    %2526 = vmatpush1.msra.mxu0 0.0
    %2527 = vmatprep.subr.mxu0 0.0
    %2528 = vmatpush1.msra.mxu0 0.0
    %2529 = vmatprep.subr.mxu0 0.0
    %2530 = vmatpush1.msra.mxu0 0.0
    %2531 = vmatprep.subr.mxu0 0.0
    %2532 = vmatpush1.msra.mxu0 0.0
    %2533 = vmatprep.subr.mxu0 0.0
    %2534 = vmatpush1.msra.mxu0 0.0
    %2535 = vmatprep.subr.mxu0 0.0
    %2536 = vmatpush1.msra.mxu0 0.0
    %2537 = vmatprep.subr.mxu0 0.0
    %2538 = vmatpush1.msra.mxu0 0.0
    %2539 = vmatprep.subr.mxu0 0.0
    %v2540 = vand.u32 %v88, 4294901760
    %v2541 = vsub.f32 %v88, %v2540
    %v2542 = vand.u32 %v2541, 4294901760
    %v2543 = vsub.f32 %v2541, %v2542
    %v2544 = vand.u32 %v2543, 4294901760
    %2545 = vmatpush1.msra.mxu0 %v2544
    %2546 = vmatprep.subr.mxu0 0.0
    %v2547 = vand.u32 %v87, 4294901760
    %v2548 = vsub.f32 %v87, %v2547
    %v2549 = vand.u32 %v2548, 4294901760
    %v2550 = vsub.f32 %v2548, %v2549
    %v2551 = vand.u32 %v2550, 4294901760
    %2552 = vmatpush1.msra.mxu0 %v2551
    %2553 = vmatprep.subr.mxu0 0.0
    %v2554 = vand.u32 %v86, 4294901760
    %v2555 = vsub.f32 %v86, %v2554
    %v2556 = vand.u32 %v2555, 4294901760
    %v2557 = vsub.f32 %v2555, %v2556
    %v2558 = vand.u32 %v2557, 4294901760
    %2559 = vmatpush1.msra.mxu0 %v2558
    %2560 = vmatprep.subr.mxu0 0.0
    %v2561 = vand.u32 %v85, 4294901760
    %v2562 = vsub.f32 %v85, %v2561
    %v2563 = vand.u32 %v2562, 4294901760
    %v2564 = vsub.f32 %v2562, %v2563
    %v2565 = vand.u32 %v2564, 4294901760
    %2566 = vmatpush1.msra.mxu0 %v2565
    %2567 = vmatprep.subr.mxu0 0.0
    %v2568 = vand.u32 %v84, 4294901760
    %v2569 = vsub.f32 %v84, %v2568
    %v2570 = vand.u32 %v2569, 4294901760
    %v2571 = vsub.f32 %v2569, %v2570
    %v2572 = vand.u32 %v2571, 4294901760
    %2573 = vmatpush1.msra.mxu0 %v2572
    %2574 = vmatprep.subr.mxu0 0.0
    %v2575 = vand.u32 %v83, 4294901760
    %v2576 = vsub.f32 %v83, %v2575
    %v2577 = vand.u32 %v2576, 4294901760
    %v2578 = vsub.f32 %v2576, %v2577
    %v2579 = vand.u32 %v2578, 4294901760
    %2580 = vmatpush1.msra.mxu0 %v2579
    %2581 = vmatprep.subr.mxu0 0.0
    %v2582 = vand.u32 %v82, 4294901760
    %v2583 = vsub.f32 %v82, %v2582
    %v2584 = vand.u32 %v2583, 4294901760
    %v2585 = vsub.f32 %v2583, %v2584
    %v2586 = vand.u32 %v2585, 4294901760
    %2587 = vmatpush1.msra.mxu0 %v2586
    %2588 = vmatprep.subr.mxu0 0.0
    %v2589 = vand.u32 %v81, 4294901760
    %v2590 = vsub.f32 %v81, %v2589
    %v2591 = vand.u32 %v2590, 4294901760
    %v2592 = vsub.f32 %v2590, %v2591
    %v2593 = vand.u32 %v2592, 4294901760
    %2594 = vmatpush1.msra.mxu0 %v2593
    %2595 = vmatprep.subr.mxu0 0.0
    %2596 = vmatpush2.msra.mxu0 0.0
    %2597 = vmatprep.subr.mxu0 0.0
    %2598 = vmatpush2.msra.mxu0 0.0
    %2599 = vmatprep.subr.mxu0 0.0
    %2600 = vmatpush2.msra.mxu0 0.0
    %2601 = vmatprep.subr.mxu0 0.0
    %2602 = vmatpush2.msra.mxu0 0.0
    %2603 = vmatprep.subr.mxu0 0.0
    %2604 = vmatpush2.msra.mxu0 0.0
    %2605 = vmatprep.subr.mxu0 0.0
    %2606 = vmatpush2.msra.mxu0 0.0
    %2607 = vmatprep.subr.mxu0 0.0
    %2608 = vmatpush2.msra.mxu0 0.0
    %2609 = vmatprep.subr.mxu0 0.0
    %2610 = vmatpush2.msra.mxu0 0.0
    %2611 = vmatprep.subr.mxu0 0.0
    %2612 = vmatpush2.msra.mxu0 0.0
    %2613 = vmatprep.subr.mxu0 0.0
    %2614 = vmatpush2.msra.mxu0 0.0
    %2615 = vmatprep.subr.mxu0 0.0
    %2616 = vmatpush2.msra.mxu0 0.0
    %2617 = vmatprep.subr.mxu0 0.0
    %2618 = vmatpush2.msra.mxu0 0.0
    %2619 = vmatprep.subr.mxu0 0.0
    %2620 = vmatpush2.msra.mxu0 0.0
    %2621 = vmatprep.subr.mxu0 0.0
    %2622 = vmatpush2.msra.mxu0 0.0
    %2623 = vmatprep.subr.mxu0 0.0
    %2624 = vmatpush2.msra.mxu0 0.0
    %2625 = vmatprep.subr.mxu0 0.0
    %2626 = vmatpush2.msra.mxu0 0.0
    %2627 = vmatprep.mubr.f32.mxu0 0.0
    %v2628 = vand.u32 %v165, 4294901760
    %2629 = vmatmul.mubr.f32.gmra.mxu0 %v2628
    %v2630 = vpop.f32.mrf.mxu0
    %v2631 = vadd.f32 %v2210, %v2630
    %v2632 = vpop.f32.mrf.mxu0
    %2633 = vmatprep.mubr.f32.mxu0 0.0
    %v2634 = vand.u32 %v168, 4294901760
    %2635 = vmatmul.mubr.f32.gmra.mxu0 %v2634
    %v2636 = vpop.f32.mrf.mxu0
    %v2637 = vadd.f32 %v2220, %v2636
    %v2638 = vpop.f32.mrf.mxu0
    %2639 = vmatprep.mubr.f32.mxu0 0.0
    %v2640 = vand.u32 %v171, 4294901760
    %2641 = vmatmul.mubr.f32.gmra.mxu0 %v2640
    %v2642 = vpop.f32.mrf.mxu0
    %v2643 = vadd.f32 %v2230, %v2642
    %v2644 = vpop.f32.mrf.mxu0
    %2645 = vmatprep.mubr.f32.mxu0 0.0
    %v2646 = vand.u32 %v174, 4294901760
    %2647 = vmatmul.mubr.f32.gmra.mxu0 %v2646
    %v2648 = vpop.f32.mrf.mxu0
    %v2649 = vadd.f32 %v2240, %v2648
    %v2650 = vpop.f32.mrf.mxu0
    %2651 = vmatprep.mubr.f32.mxu0 0.0
    %v2652 = vand.u32 %v177, 4294901760
    %2653 = vmatmul.mubr.f32.gmra.mxu0 %v2652
    %v2654 = vpop.f32.mrf.mxu0
    %v2655 = vadd.f32 %v2250, %v2654
    %v2656 = vpop.f32.mrf.mxu0
    %2657 = vmatprep.mubr.f32.mxu0 0.0
    %v2658 = vand.u32 %v180, 4294901760
    %2659 = vmatmul.mubr.f32.gmra.mxu0 %v2658
    %v2660 = vpop.f32.mrf.mxu0
    %v2661 = vadd.f32 %v2260, %v2660
    %v2662 = vpop.f32.mrf.mxu0
    %2663 = vmatprep.mubr.f32.mxu0 0.0
    %v2664 = vand.u32 %v183, 4294901760
    %2665 = vmatmul.mubr.f32.gmra.mxu0 %v2664
    %v2666 = vpop.f32.mrf.mxu0
    %v2667 = vadd.f32 %v2270, %v2666
    %v2668 = vpop.f32.mrf.mxu0
    %2669 = vmatprep.mubr.f32.mxu0 0.0
    %v2670 = vand.u32 %v186, 4294901760
    %2671 = vmatmul.mubr.f32.gmra.mxu0 %v2670
    %v2672 = vpop.f32.mrf.mxu0
    %v2673 = vadd.f32 %v2280, %v2672
    %v2674 = vpop.f32.mrf.mxu0
    %2675 = vmatprep.mubr.f32.mxu0 0.0
    %v2676 = vand.u32 %v189, 4294901760
    %2677 = vmatmul.mubr.f32.gmra.mxu0 %v2676
    %v2678 = vpop.f32.mrf.mxu0
    %v2679 = vadd.f32 %v2290, %v2678
    %v2680 = vpop.f32.mrf.mxu0
    %2681 = vmatprep.mubr.f32.mxu0 0.0
    %v2682 = vand.u32 %v192, 4294901760
    %2683 = vmatmul.mubr.f32.gmra.mxu0 %v2682
    %v2684 = vpop.f32.mrf.mxu0
    %v2685 = vadd.f32 %v2300, %v2684
    %v2686 = vpop.f32.mrf.mxu0
    %2687 = vmatprep.mubr.f32.mxu0 0.0
    %v2688 = vand.u32 %v195, 4294901760
    %2689 = vmatmul.mubr.f32.gmra.mxu0 %v2688
    %v2690 = vpop.f32.mrf.mxu0
    %v2691 = vadd.f32 %v2310, %v2690
    %v2692 = vpop.f32.mrf.mxu0
    %2693 = vmatprep.mubr.f32.mxu0 0.0
    %v2694 = vand.u32 %v198, 4294901760
    %2695 = vmatmul.mubr.f32.gmra.mxu0 %v2694
    %v2696 = vpop.f32.mrf.mxu0
    %v2697 = vadd.f32 %v2320, %v2696
    %v2698 = vpop.f32.mrf.mxu0
    %2699 = vmatprep.mubr.f32.mxu0 0.0
    %v2700 = vand.u32 %v201, 4294901760
    %2701 = vmatmul.mubr.f32.gmra.mxu0 %v2700
    %v2702 = vpop.f32.mrf.mxu0
    %v2703 = vadd.f32 %v2330, %v2702
    %v2704 = vpop.f32.mrf.mxu0
    %2705 = vmatprep.mubr.f32.mxu0 0.0
    %v2706 = vand.u32 %v204, 4294901760
    %2707 = vmatmul.mubr.f32.gmra.mxu0 %v2706
    %v2708 = vpop.f32.mrf.mxu0
    %v2709 = vadd.f32 %v2340, %v2708
    %v2710 = vpop.f32.mrf.mxu0
    %2711 = vmatprep.mubr.f32.mxu0 0.0
    %v2712 = vand.u32 %v207, 4294901760
    %2713 = vmatmul.mubr.f32.gmra.mxu0 %v2712
    %v2714 = vpop.f32.mrf.mxu0
    %v2715 = vadd.f32 %v2350, %v2714
    %v2716 = vpop.f32.mrf.mxu0
    %2717 = vmatprep.mubr.f32.mxu0 0.0
    %v2718 = vand.u32 %v210, 4294901760
    %2719 = vmatmul.mubr.f32.gmra.mxu0 %v2718
    %v2720 = vpop.f32.mrf.mxu0
    %v2721 = vadd.f32 %v2360, %v2720
    %v2722 = vpop.f32.mrf.mxu0
    %2723 = vmatprep.mubr.f32.mxu0 0.0
    %v2724 = vand.u32 %v213, 4294901760
    %2725 = vmatmul.mubr.f32.gmra.mxu0 %v2724
    %v2726 = vpop.f32.mrf.mxu0
    %v2727 = vadd.f32 %v2370, %v2726
    %v2728 = vpop.f32.mrf.mxu0
    %2729 = vmatprep.mubr.f32.mxu0 0.0
    %v2730 = vand.u32 %v216, 4294901760
    %2731 = vmatmul.mubr.f32.gmra.mxu0 %v2730
    %v2732 = vpop.f32.mrf.mxu0
    %v2733 = vadd.f32 %v2380, %v2732
    %v2734 = vpop.f32.mrf.mxu0
    %2735 = vmatprep.mubr.f32.mxu0 0.0
    %v2736 = vand.u32 %v219, 4294901760
    %2737 = vmatmul.mubr.f32.gmra.mxu0 %v2736
    %v2738 = vpop.f32.mrf.mxu0
    %v2739 = vadd.f32 %v2390, %v2738
    %v2740 = vpop.f32.mrf.mxu0
    %2741 = vmatprep.mubr.f32.mxu0 0.0
    %v2742 = vand.u32 %v222, 4294901760
    %2743 = vmatmul.mubr.f32.gmra.mxu0 %v2742
    %v2744 = vpop.f32.mrf.mxu0
    %v2745 = vadd.f32 %v2400, %v2744
    %v2746 = vpop.f32.mrf.mxu0
    %2747 = vmatprep.mubr.f32.mxu0 0.0
    %v2748 = vand.u32 %v225, 4294901760
    %2749 = vmatmul.mubr.f32.gmra.mxu0 %v2748
    %v2750 = vpop.f32.mrf.mxu0
    %v2751 = vadd.f32 %v2410, %v2750
    %v2752 = vpop.f32.mrf.mxu0
    %2753 = vmatprep.mubr.f32.mxu0 0.0
    %v2754 = vand.u32 %v228, 4294901760
    %2755 = vmatmul.mubr.f32.gmra.mxu0 %v2754
    %v2756 = vpop.f32.mrf.mxu0
    %v2757 = vadd.f32 %v2420, %v2756
    %v2758 = vpop.f32.mrf.mxu0
    %2759 = vmatprep.mubr.f32.mxu0 0.0
    %v2760 = vand.u32 %v231, 4294901760
    %2761 = vmatmul.mubr.f32.gmra.mxu0 %v2760
    %v2762 = vpop.f32.mrf.mxu0
    %v2763 = vadd.f32 %v2430, %v2762
    %v2764 = vpop.f32.mrf.mxu0
    %2765 = vmatprep.mubr.f32.mxu0 0.0
    %v2766 = vand.u32 %v234, 4294901760
    %2767 = vmatmul.mubr.f32.gmra.mxu0 %v2766
    %v2768 = vpop.f32.mrf.mxu0
    %v2769 = vadd.f32 %v2440, %v2768
    %v2770 = vpop.f32.mrf.mxu0
    %2771 = vmatprep.mubr.f32.mxu0 0.0
    %v2772 = vand.u32 %v237, 4294901760
    %2773 = vmatmul.mubr.f32.gmra.mxu0 %v2772
    %v2774 = vpop.f32.mrf.mxu0
    %v2775 = vadd.f32 %v2450, %v2774
    %v2776 = vpop.f32.mrf.mxu0
    %2777 = vmatprep.mubr.f32.mxu0 0.0
    %v2778 = vand.u32 %v240, 4294901760
    %2779 = vmatmul.mubr.f32.gmra.mxu0 %v2778
    %v2780 = vpop.f32.mrf.mxu0
    %v2781 = vadd.f32 %v2460, %v2780
    %v2782 = vpop.f32.mrf.mxu0
    %2783 = vmatprep.mubr.f32.mxu0 0.0
    %v2784 = vand.u32 %v243, 4294901760
    %2785 = vmatmul.mubr.f32.gmra.mxu0 %v2784
    %v2786 = vpop.f32.mrf.mxu0
    %v2787 = vadd.f32 %v2470, %v2786
    %v2788 = vpop.f32.mrf.mxu0
    %2789 = vmatprep.mubr.f32.mxu0 0.0
    %v2790 = vand.u32 %v246, 4294901760
    %2791 = vmatmul.mubr.f32.gmra.mxu0 %v2790
    %v2792 = vpop.f32.mrf.mxu0
    %v2793 = vadd.f32 %v2480, %v2792
    %v2794 = vpop.f32.mrf.mxu0
    %2795 = vmatprep.mubr.f32.mxu0 0.0
    %v2796 = vand.u32 %v249, 4294901760
    %2797 = vmatmul.mubr.f32.gmra.mxu0 %v2796
    %v2798 = vpop.f32.mrf.mxu0
    %v2799 = vadd.f32 %v2490, %v2798
    %v2800 = vpop.f32.mrf.mxu0
    %2801 = vmatprep.mubr.f32.mxu0 0.0
    %v2802 = vand.u32 %v252, 4294901760
    %2803 = vmatmul.mubr.f32.gmra.mxu0 %v2802
    %v2804 = vpop.f32.mrf.mxu0
    %v2805 = vadd.f32 %v2500, %v2804
    %v2806 = vpop.f32.mrf.mxu0
    %2807 = vmatprep.mubr.f32.mxu0 0.0
    %v2808 = vand.u32 %v255, 4294901760
    %2809 = vmatmul.mubr.f32.gmra.mxu0 %v2808
    %v2810 = vpop.f32.mrf.mxu0
    %v2811 = vadd.f32 %v2510, %v2810
    %v2812 = vpop.f32.mrf.mxu0
    %2813 = vmatprep.mubr.f32.mxu0 0.0
    %v2814 = vand.u32 %v258, 4294901760
    %2815 = vmatmul.mubr.f32.gmra.mxu0 %v2814
    %v2816 = vpop.f32.mrf.mxu0
    %v2817 = vadd.f32 %v2520, %v2816
    %v2818 = vpop.f32.mrf.mxu0
    %2819 = vdwg.mxu0
    %2820 = vmatprep.subr.mxu0 0.0
    %2821 = vmatpush1.msra.mxu0 0.0
    %2822 = vmatprep.subr.mxu0 0.0
    %2823 = vmatpush1.msra.mxu0 0.0
    %2824 = vmatprep.subr.mxu0 0.0
    %2825 = vmatpush1.msra.mxu0 0.0
    %2826 = vmatprep.subr.mxu0 0.0
    %2827 = vmatpush1.msra.mxu0 0.0
    %2828 = vmatprep.subr.mxu0 0.0
    %2829 = vmatpush1.msra.mxu0 0.0
    %2830 = vmatprep.subr.mxu0 0.0
    %2831 = vmatpush1.msra.mxu0 0.0
    %2832 = vmatprep.subr.mxu0 0.0
    %2833 = vmatpush1.msra.mxu0 0.0
    %2834 = vmatprep.subr.mxu0 0.0
    %2835 = vmatpush1.msra.mxu0 0.0
    %2836 = vmatprep.subr.mxu0 0.0
    %v2837 = vand.u32 %v88, 4294901760
    %v2838 = vsub.f32 %v88, %v2837
    %2839 = vmatpush1.msra.mxu0 %v2838
    %2840 = vmatprep.subr.mxu0 0.0
    %v2841 = vand.u32 %v87, 4294901760
    %v2842 = vsub.f32 %v87, %v2841
    %2843 = vmatpush1.msra.mxu0 %v2842
    %2844 = vmatprep.subr.mxu0 0.0
    %v2845 = vand.u32 %v86, 4294901760
    %v2846 = vsub.f32 %v86, %v2845
    %2847 = vmatpush1.msra.mxu0 %v2846
    %2848 = vmatprep.subr.mxu0 0.0
    %v2849 = vand.u32 %v85, 4294901760
    %v2850 = vsub.f32 %v85, %v2849
    %2851 = vmatpush1.msra.mxu0 %v2850
    %2852 = vmatprep.subr.mxu0 0.0
    %v2853 = vand.u32 %v84, 4294901760
    %v2854 = vsub.f32 %v84, %v2853
    %2855 = vmatpush1.msra.mxu0 %v2854
    %2856 = vmatprep.subr.mxu0 0.0
    %v2857 = vand.u32 %v83, 4294901760
    %v2858 = vsub.f32 %v83, %v2857
    %2859 = vmatpush1.msra.mxu0 %v2858
    %2860 = vmatprep.subr.mxu0 0.0
    %v2861 = vand.u32 %v82, 4294901760
    %v2862 = vsub.f32 %v82, %v2861
    %2863 = vmatpush1.msra.mxu0 %v2862
    %2864 = vmatprep.subr.mxu0 0.0
    %v2865 = vand.u32 %v81, 4294901760
    %v2866 = vsub.f32 %v81, %v2865
    %2867 = vmatpush1.msra.mxu0 %v2866
    %2868 = vmatprep.subr.mxu0 0.0
    %2869 = vmatpush2.msra.mxu0 0.0
    %2870 = vmatprep.subr.mxu0 0.0
    %2871 = vmatpush2.msra.mxu0 0.0
    %2872 = vmatprep.subr.mxu0 0.0
    %2873 = vmatpush2.msra.mxu0 0.0
    %2874 = vmatprep.subr.mxu0 0.0
    %2875 = vmatpush2.msra.mxu0 0.0
    %2876 = vmatprep.subr.mxu0 0.0
    %2877 = vmatpush2.msra.mxu0 0.0
    %2878 = vmatprep.subr.mxu0 0.0
    %2879 = vmatpush2.msra.mxu0 0.0
    %2880 = vmatprep.subr.mxu0 0.0
    %2881 = vmatpush2.msra.mxu0 0.0
    %2882 = vmatprep.subr.mxu0 0.0
    %2883 = vmatpush2.msra.mxu0 0.0
    %2884 = vmatprep.subr.mxu0 0.0
    %2885 = vmatpush2.msra.mxu0 0.0
    %2886 = vmatprep.subr.mxu0 0.0
    %2887 = vmatpush2.msra.mxu0 0.0
    %2888 = vmatprep.subr.mxu0 0.0
    %2889 = vmatpush2.msra.mxu0 0.0
    %2890 = vmatprep.subr.mxu0 0.0
    %2891 = vmatpush2.msra.mxu0 0.0
    %2892 = vmatprep.subr.mxu0 0.0
    %2893 = vmatpush2.msra.mxu0 0.0
    %2894 = vmatprep.subr.mxu0 0.0
    %2895 = vmatpush2.msra.mxu0 0.0
    %2896 = vmatprep.subr.mxu0 0.0
    %2897 = vmatpush2.msra.mxu0 0.0
    %2898 = vmatprep.subr.mxu0 0.0
    %2899 = vmatpush2.msra.mxu0 0.0
    %2900 = vmatprep.mubr.f32.mxu0 0.0
    %v2901 = vand.u32 %v165, 4294901760
    %v2902 = vsub.f32 %v165, %v2901
    %2903 = vmatmul.mubr.f32.gmra.mxu0 %v2902
    %v2904 = vpop.f32.mrf.mxu0
    %v2905 = vadd.f32 %v2631, %v2904
    %v2906 = vpop.f32.mrf.mxu0
    %2907 = vmatprep.mubr.f32.mxu0 0.0
    %v2908 = vand.u32 %v168, 4294901760
    %v2909 = vsub.f32 %v168, %v2908
    %2910 = vmatmul.mubr.f32.gmra.mxu0 %v2909
    %v2911 = vpop.f32.mrf.mxu0
    %v2912 = vadd.f32 %v2637, %v2911
    %v2913 = vpop.f32.mrf.mxu0
    %2914 = vmatprep.mubr.f32.mxu0 0.0
    %v2915 = vand.u32 %v171, 4294901760
    %v2916 = vsub.f32 %v171, %v2915
    %2917 = vmatmul.mubr.f32.gmra.mxu0 %v2916
    %v2918 = vpop.f32.mrf.mxu0
    %v2919 = vadd.f32 %v2643, %v2918
    %v2920 = vpop.f32.mrf.mxu0
    %2921 = vmatprep.mubr.f32.mxu0 0.0
    %v2922 = vand.u32 %v174, 4294901760
    %v2923 = vsub.f32 %v174, %v2922
    %2924 = vmatmul.mubr.f32.gmra.mxu0 %v2923
    %v2925 = vpop.f32.mrf.mxu0
    %v2926 = vadd.f32 %v2649, %v2925
    %v2927 = vpop.f32.mrf.mxu0
    %2928 = vmatprep.mubr.f32.mxu0 0.0
    %v2929 = vand.u32 %v177, 4294901760
    %v2930 = vsub.f32 %v177, %v2929
    %2931 = vmatmul.mubr.f32.gmra.mxu0 %v2930
    %v2932 = vpop.f32.mrf.mxu0
    %v2933 = vadd.f32 %v2655, %v2932
    %v2934 = vpop.f32.mrf.mxu0
    %2935 = vmatprep.mubr.f32.mxu0 0.0
    %v2936 = vand.u32 %v180, 4294901760
    %v2937 = vsub.f32 %v180, %v2936
    %2938 = vmatmul.mubr.f32.gmra.mxu0 %v2937
    %v2939 = vpop.f32.mrf.mxu0
    %v2940 = vadd.f32 %v2661, %v2939
    %v2941 = vpop.f32.mrf.mxu0
    %2942 = vmatprep.mubr.f32.mxu0 0.0
    %v2943 = vand.u32 %v183, 4294901760
    %v2944 = vsub.f32 %v183, %v2943
    %2945 = vmatmul.mubr.f32.gmra.mxu0 %v2944
    %v2946 = vpop.f32.mrf.mxu0
    %v2947 = vadd.f32 %v2667, %v2946
    %v2948 = vpop.f32.mrf.mxu0
    %2949 = vmatprep.mubr.f32.mxu0 0.0
    %v2950 = vand.u32 %v186, 4294901760
    %v2951 = vsub.f32 %v186, %v2950
    %2952 = vmatmul.mubr.f32.gmra.mxu0 %v2951
    %v2953 = vpop.f32.mrf.mxu0
    %v2954 = vadd.f32 %v2673, %v2953
    %v2955 = vpop.f32.mrf.mxu0
    %2956 = vmatprep.mubr.f32.mxu0 0.0
    %v2957 = vand.u32 %v189, 4294901760
    %v2958 = vsub.f32 %v189, %v2957
    %2959 = vmatmul.mubr.f32.gmra.mxu0 %v2958
    %v2960 = vpop.f32.mrf.mxu0
    %v2961 = vadd.f32 %v2679, %v2960
    %v2962 = vpop.f32.mrf.mxu0
    %2963 = vmatprep.mubr.f32.mxu0 0.0
    %v2964 = vand.u32 %v192, 4294901760
    %v2965 = vsub.f32 %v192, %v2964
    %2966 = vmatmul.mubr.f32.gmra.mxu0 %v2965
    %v2967 = vpop.f32.mrf.mxu0
    %v2968 = vadd.f32 %v2685, %v2967
    %v2969 = vpop.f32.mrf.mxu0
    %2970 = vmatprep.mubr.f32.mxu0 0.0
    %v2971 = vand.u32 %v195, 4294901760
    %v2972 = vsub.f32 %v195, %v2971
    %2973 = vmatmul.mubr.f32.gmra.mxu0 %v2972
    %v2974 = vpop.f32.mrf.mxu0
    %v2975 = vadd.f32 %v2691, %v2974
    %v2976 = vpop.f32.mrf.mxu0
    %2977 = vmatprep.mubr.f32.mxu0 0.0
    %v2978 = vand.u32 %v198, 4294901760
    %v2979 = vsub.f32 %v198, %v2978
    %2980 = vmatmul.mubr.f32.gmra.mxu0 %v2979
    %v2981 = vpop.f32.mrf.mxu0
    %v2982 = vadd.f32 %v2697, %v2981
    %v2983 = vpop.f32.mrf.mxu0
    %2984 = vmatprep.mubr.f32.mxu0 0.0
    %v2985 = vand.u32 %v201, 4294901760
    %v2986 = vsub.f32 %v201, %v2985
    %2987 = vmatmul.mubr.f32.gmra.mxu0 %v2986
    %v2988 = vpop.f32.mrf.mxu0
    %v2989 = vadd.f32 %v2703, %v2988
    %v2990 = vpop.f32.mrf.mxu0
    %2991 = vmatprep.mubr.f32.mxu0 0.0
    %v2992 = vand.u32 %v204, 4294901760
    %v2993 = vsub.f32 %v204, %v2992
    %2994 = vmatmul.mubr.f32.gmra.mxu0 %v2993
    %v2995 = vpop.f32.mrf.mxu0
    %v2996 = vadd.f32 %v2709, %v2995
    %v2997 = vpop.f32.mrf.mxu0
    %2998 = vmatprep.mubr.f32.mxu0 0.0
    %v2999 = vand.u32 %v207, 4294901760
    %v3000 = vsub.f32 %v207, %v2999
    %3001 = vmatmul.mubr.f32.gmra.mxu0 %v3000
    %v3002 = vpop.f32.mrf.mxu0
    %v3003 = vadd.f32 %v2715, %v3002
    %v3004 = vpop.f32.mrf.mxu0
    %3005 = vmatprep.mubr.f32.mxu0 0.0
    %v3006 = vand.u32 %v210, 4294901760
    %v3007 = vsub.f32 %v210, %v3006
    %3008 = vmatmul.mubr.f32.gmra.mxu0 %v3007
    %v3009 = vpop.f32.mrf.mxu0
    %v3010 = vadd.f32 %v2721, %v3009
    %v3011 = vpop.f32.mrf.mxu0
    %3012 = vmatprep.mubr.f32.mxu0 0.0
    %v3013 = vand.u32 %v213, 4294901760
    %v3014 = vsub.f32 %v213, %v3013
    %3015 = vmatmul.mubr.f32.gmra.mxu0 %v3014
    %v3016 = vpop.f32.mrf.mxu0
    %v3017 = vadd.f32 %v2727, %v3016
    %v3018 = vpop.f32.mrf.mxu0
    %3019 = vmatprep.mubr.f32.mxu0 0.0
    %v3020 = vand.u32 %v216, 4294901760
    %v3021 = vsub.f32 %v216, %v3020
    %3022 = vmatmul.mubr.f32.gmra.mxu0 %v3021
    %v3023 = vpop.f32.mrf.mxu0
    %v3024 = vadd.f32 %v2733, %v3023
    %v3025 = vpop.f32.mrf.mxu0
    %3026 = vmatprep.mubr.f32.mxu0 0.0
    %v3027 = vand.u32 %v219, 4294901760
    %v3028 = vsub.f32 %v219, %v3027
    %3029 = vmatmul.mubr.f32.gmra.mxu0 %v3028
    %v3030 = vpop.f32.mrf.mxu0
    %v3031 = vadd.f32 %v2739, %v3030
    %v3032 = vpop.f32.mrf.mxu0
    %3033 = vmatprep.mubr.f32.mxu0 0.0
    %v3034 = vand.u32 %v222, 4294901760
    %v3035 = vsub.f32 %v222, %v3034
    %3036 = vmatmul.mubr.f32.gmra.mxu0 %v3035
    %v3037 = vpop.f32.mrf.mxu0
    %v3038 = vadd.f32 %v2745, %v3037
    %v3039 = vpop.f32.mrf.mxu0
    %3040 = vmatprep.mubr.f32.mxu0 0.0
    %v3041 = vand.u32 %v225, 4294901760
    %v3042 = vsub.f32 %v225, %v3041
    %3043 = vmatmul.mubr.f32.gmra.mxu0 %v3042
    %v3044 = vpop.f32.mrf.mxu0
    %v3045 = vadd.f32 %v2751, %v3044
    %v3046 = vpop.f32.mrf.mxu0
    %3047 = vmatprep.mubr.f32.mxu0 0.0
    %v3048 = vand.u32 %v228, 4294901760
    %v3049 = vsub.f32 %v228, %v3048
    %3050 = vmatmul.mubr.f32.gmra.mxu0 %v3049
    %v3051 = vpop.f32.mrf.mxu0
    %v3052 = vadd.f32 %v2757, %v3051
    %v3053 = vpop.f32.mrf.mxu0
    %3054 = vmatprep.mubr.f32.mxu0 0.0
    %v3055 = vand.u32 %v231, 4294901760
    %v3056 = vsub.f32 %v231, %v3055
    %3057 = vmatmul.mubr.f32.gmra.mxu0 %v3056
    %v3058 = vpop.f32.mrf.mxu0
    %v3059 = vadd.f32 %v2763, %v3058
    %v3060 = vpop.f32.mrf.mxu0
    %3061 = vmatprep.mubr.f32.mxu0 0.0
    %v3062 = vand.u32 %v234, 4294901760
    %v3063 = vsub.f32 %v234, %v3062
    %3064 = vmatmul.mubr.f32.gmra.mxu0 %v3063
    %v3065 = vpop.f32.mrf.mxu0
    %v3066 = vadd.f32 %v2769, %v3065
    %v3067 = vpop.f32.mrf.mxu0
    %3068 = vmatprep.mubr.f32.mxu0 0.0
    %v3069 = vand.u32 %v237, 4294901760
    %v3070 = vsub.f32 %v237, %v3069
    %3071 = vmatmul.mubr.f32.gmra.mxu0 %v3070
    %v3072 = vpop.f32.mrf.mxu0
    %v3073 = vadd.f32 %v2775, %v3072
    %v3074 = vpop.f32.mrf.mxu0
    %3075 = vmatprep.mubr.f32.mxu0 0.0
    %v3076 = vand.u32 %v240, 4294901760
    %v3077 = vsub.f32 %v240, %v3076
    %3078 = vmatmul.mubr.f32.gmra.mxu0 %v3077
    %v3079 = vpop.f32.mrf.mxu0
    %v3080 = vadd.f32 %v2781, %v3079
    %v3081 = vpop.f32.mrf.mxu0
    %3082 = vmatprep.mubr.f32.mxu0 0.0
    %v3083 = vand.u32 %v243, 4294901760
    %v3084 = vsub.f32 %v243, %v3083
    %3085 = vmatmul.mubr.f32.gmra.mxu0 %v3084
    %v3086 = vpop.f32.mrf.mxu0
    %v3087 = vadd.f32 %v2787, %v3086
    %v3088 = vpop.f32.mrf.mxu0
    %3089 = vmatprep.mubr.f32.mxu0 0.0
    %v3090 = vand.u32 %v246, 4294901760
    %v3091 = vsub.f32 %v246, %v3090
    %3092 = vmatmul.mubr.f32.gmra.mxu0 %v3091
    %v3093 = vpop.f32.mrf.mxu0
    %v3094 = vadd.f32 %v2793, %v3093
    %v3095 = vpop.f32.mrf.mxu0
    %3096 = vmatprep.mubr.f32.mxu0 0.0
    %v3097 = vand.u32 %v249, 4294901760
    %v3098 = vsub.f32 %v249, %v3097
    %3099 = vmatmul.mubr.f32.gmra.mxu0 %v3098
    %v3100 = vpop.f32.mrf.mxu0
    %v3101 = vadd.f32 %v2799, %v3100
    %v3102 = vpop.f32.mrf.mxu0
    %3103 = vmatprep.mubr.f32.mxu0 0.0
    %v3104 = vand.u32 %v252, 4294901760
    %v3105 = vsub.f32 %v252, %v3104
    %3106 = vmatmul.mubr.f32.gmra.mxu0 %v3105
    %v3107 = vpop.f32.mrf.mxu0
    %v3108 = vadd.f32 %v2805, %v3107
    %v3109 = vpop.f32.mrf.mxu0
    %3110 = vmatprep.mubr.f32.mxu0 0.0
    %v3111 = vand.u32 %v255, 4294901760
    %v3112 = vsub.f32 %v255, %v3111
    %3113 = vmatmul.mubr.f32.gmra.mxu0 %v3112
    %v3114 = vpop.f32.mrf.mxu0
    %v3115 = vadd.f32 %v2811, %v3114
    %v3116 = vpop.f32.mrf.mxu0
    %3117 = vmatprep.mubr.f32.mxu0 0.0
    %v3118 = vand.u32 %v258, 4294901760
    %v3119 = vsub.f32 %v258, %v3118
    %3120 = vmatmul.mubr.f32.gmra.mxu0 %v3119
    %v3121 = vpop.f32.mrf.mxu0
    %v3122 = vadd.f32 %v2817, %v3121
    %v3123 = vpop.f32.mrf.mxu0
    %3124 = vdwg.mxu0
    %3125 = vmatprep.subr.mxu0 0.0
    %3126 = vmatpush1.msra.mxu0 0.0
    %3127 = vmatprep.subr.mxu0 0.0
    %3128 = vmatpush1.msra.mxu0 0.0
    %3129 = vmatprep.subr.mxu0 0.0
    %3130 = vmatpush1.msra.mxu0 0.0
    %3131 = vmatprep.subr.mxu0 0.0
    %3132 = vmatpush1.msra.mxu0 0.0
    %3133 = vmatprep.subr.mxu0 0.0
    %3134 = vmatpush1.msra.mxu0 0.0
    %3135 = vmatprep.subr.mxu0 0.0
    %3136 = vmatpush1.msra.mxu0 0.0
    %3137 = vmatprep.subr.mxu0 0.0
    %3138 = vmatpush1.msra.mxu0 0.0
    %3139 = vmatprep.subr.mxu0 0.0
    %3140 = vmatpush1.msra.mxu0 0.0
    %3141 = vmatprep.subr.mxu0 0.0
    %v3142 = vand.u32 %v88, 4294901760
    %3143 = vmatpush1.msra.mxu0 %v3142
    %3144 = vmatprep.subr.mxu0 0.0
    %v3145 = vand.u32 %v87, 4294901760
    %3146 = vmatpush1.msra.mxu0 %v3145
    %3147 = vmatprep.subr.mxu0 0.0
    %v3148 = vand.u32 %v86, 4294901760
    %3149 = vmatpush1.msra.mxu0 %v3148
    %3150 = vmatprep.subr.mxu0 0.0
    %v3151 = vand.u32 %v85, 4294901760
    %3152 = vmatpush1.msra.mxu0 %v3151
    %3153 = vmatprep.subr.mxu0 0.0
    %v3154 = vand.u32 %v84, 4294901760
    %3155 = vmatpush1.msra.mxu0 %v3154
    %3156 = vmatprep.subr.mxu0 0.0
    %v3157 = vand.u32 %v83, 4294901760
    %3158 = vmatpush1.msra.mxu0 %v3157
    %3159 = vmatprep.subr.mxu0 0.0
    %v3160 = vand.u32 %v82, 4294901760
    %3161 = vmatpush1.msra.mxu0 %v3160
    %3162 = vmatprep.subr.mxu0 0.0
    %v3163 = vand.u32 %v81, 4294901760
    %3164 = vmatpush1.msra.mxu0 %v3163
    %3165 = vmatprep.subr.mxu0 0.0
    %3166 = vmatpush2.msra.mxu0 0.0
    %3167 = vmatprep.subr.mxu0 0.0
    %3168 = vmatpush2.msra.mxu0 0.0
    %3169 = vmatprep.subr.mxu0 0.0
    %3170 = vmatpush2.msra.mxu0 0.0
    %3171 = vmatprep.subr.mxu0 0.0
    %3172 = vmatpush2.msra.mxu0 0.0
    %3173 = vmatprep.subr.mxu0 0.0
    %3174 = vmatpush2.msra.mxu0 0.0
    %3175 = vmatprep.subr.mxu0 0.0
    %3176 = vmatpush2.msra.mxu0 0.0
    %3177 = vmatprep.subr.mxu0 0.0
    %3178 = vmatpush2.msra.mxu0 0.0
    %3179 = vmatprep.subr.mxu0 0.0
    %3180 = vmatpush2.msra.mxu0 0.0
    %3181 = vmatprep.subr.mxu0 0.0
    %3182 = vmatpush2.msra.mxu0 0.0
    %3183 = vmatprep.subr.mxu0 0.0
    %3184 = vmatpush2.msra.mxu0 0.0
    %3185 = vmatprep.subr.mxu0 0.0
    %3186 = vmatpush2.msra.mxu0 0.0
    %3187 = vmatprep.subr.mxu0 0.0
    %3188 = vmatpush2.msra.mxu0 0.0
    %3189 = vmatprep.subr.mxu0 0.0
    %3190 = vmatpush2.msra.mxu0 0.0
    %3191 = vmatprep.subr.mxu0 0.0
    %3192 = vmatpush2.msra.mxu0 0.0
    %3193 = vmatprep.subr.mxu0 0.0
    %3194 = vmatpush2.msra.mxu0 0.0
    %3195 = vmatprep.subr.mxu0 0.0
    %3196 = vmatpush2.msra.mxu0 0.0
    %3197 = vmatprep.mubr.f32.mxu0 0.0
    %v3198 = vand.u32 %v165, 4294901760
    %v3199 = vsub.f32 %v165, %v3198
    %v3200 = vand.u32 %v3199, 4294901760
    %3201 = vmatmul.mubr.f32.gmra.mxu0 %v3200
    %v3202 = vpop.f32.mrf.mxu0
    %v3203 = vadd.f32 %v2905, %v3202
    %v3204 = vpop.f32.mrf.mxu0
    %3205 = vmatprep.mubr.f32.mxu0 0.0
    %v3206 = vand.u32 %v168, 4294901760
    %v3207 = vsub.f32 %v168, %v3206
    %v3208 = vand.u32 %v3207, 4294901760
    %3209 = vmatmul.mubr.f32.gmra.mxu0 %v3208
    %v3210 = vpop.f32.mrf.mxu0
    %v3211 = vadd.f32 %v2912, %v3210
    %v3212 = vpop.f32.mrf.mxu0
    %3213 = vmatprep.mubr.f32.mxu0 0.0
    %v3214 = vand.u32 %v171, 4294901760
    %v3215 = vsub.f32 %v171, %v3214
    %v3216 = vand.u32 %v3215, 4294901760
    %3217 = vmatmul.mubr.f32.gmra.mxu0 %v3216
    %v3218 = vpop.f32.mrf.mxu0
    %v3219 = vadd.f32 %v2919, %v3218
    %v3220 = vpop.f32.mrf.mxu0
    %3221 = vmatprep.mubr.f32.mxu0 0.0
    %v3222 = vand.u32 %v174, 4294901760
    %v3223 = vsub.f32 %v174, %v3222
    %v3224 = vand.u32 %v3223, 4294901760
    %3225 = vmatmul.mubr.f32.gmra.mxu0 %v3224
    %v3226 = vpop.f32.mrf.mxu0
    %v3227 = vadd.f32 %v2926, %v3226
    %v3228 = vpop.f32.mrf.mxu0
    %3229 = vmatprep.mubr.f32.mxu0 0.0
    %v3230 = vand.u32 %v177, 4294901760
    %v3231 = vsub.f32 %v177, %v3230
    %v3232 = vand.u32 %v3231, 4294901760
    %3233 = vmatmul.mubr.f32.gmra.mxu0 %v3232
    %v3234 = vpop.f32.mrf.mxu0
    %v3235 = vadd.f32 %v2933, %v3234
    %v3236 = vpop.f32.mrf.mxu0
    %3237 = vmatprep.mubr.f32.mxu0 0.0
    %v3238 = vand.u32 %v180, 4294901760
    %v3239 = vsub.f32 %v180, %v3238
    %v3240 = vand.u32 %v3239, 4294901760
    %3241 = vmatmul.mubr.f32.gmra.mxu0 %v3240
    %v3242 = vpop.f32.mrf.mxu0
    %v3243 = vadd.f32 %v2940, %v3242
    %v3244 = vpop.f32.mrf.mxu0
    %3245 = vmatprep.mubr.f32.mxu0 0.0
    %v3246 = vand.u32 %v183, 4294901760
    %v3247 = vsub.f32 %v183, %v3246
    %v3248 = vand.u32 %v3247, 4294901760
    %3249 = vmatmul.mubr.f32.gmra.mxu0 %v3248
    %v3250 = vpop.f32.mrf.mxu0
    %v3251 = vadd.f32 %v2947, %v3250
    %v3252 = vpop.f32.mrf.mxu0
    %3253 = vmatprep.mubr.f32.mxu0 0.0
    %v3254 = vand.u32 %v186, 4294901760
    %v3255 = vsub.f32 %v186, %v3254
    %v3256 = vand.u32 %v3255, 4294901760
    %3257 = vmatmul.mubr.f32.gmra.mxu0 %v3256
    %v3258 = vpop.f32.mrf.mxu0
    %v3259 = vadd.f32 %v2954, %v3258
    %v3260 = vpop.f32.mrf.mxu0
    %3261 = vmatprep.mubr.f32.mxu0 0.0
    %v3262 = vand.u32 %v189, 4294901760
    %v3263 = vsub.f32 %v189, %v3262
    %v3264 = vand.u32 %v3263, 4294901760
    %3265 = vmatmul.mubr.f32.gmra.mxu0 %v3264
    %v3266 = vpop.f32.mrf.mxu0
    %v3267 = vadd.f32 %v2961, %v3266
    %v3268 = vpop.f32.mrf.mxu0
    %3269 = vmatprep.mubr.f32.mxu0 0.0
    %v3270 = vand.u32 %v192, 4294901760
    %v3271 = vsub.f32 %v192, %v3270
    %v3272 = vand.u32 %v3271, 4294901760
    %3273 = vmatmul.mubr.f32.gmra.mxu0 %v3272
    %v3274 = vpop.f32.mrf.mxu0
    %v3275 = vadd.f32 %v2968, %v3274
    %v3276 = vpop.f32.mrf.mxu0
    %3277 = vmatprep.mubr.f32.mxu0 0.0
    %v3278 = vand.u32 %v195, 4294901760
    %v3279 = vsub.f32 %v195, %v3278
    %v3280 = vand.u32 %v3279, 4294901760
    %3281 = vmatmul.mubr.f32.gmra.mxu0 %v3280
    %v3282 = vpop.f32.mrf.mxu0
    %v3283 = vadd.f32 %v2975, %v3282
    %v3284 = vpop.f32.mrf.mxu0
    %3285 = vmatprep.mubr.f32.mxu0 0.0
    %v3286 = vand.u32 %v198, 4294901760
    %v3287 = vsub.f32 %v198, %v3286
    %v3288 = vand.u32 %v3287, 4294901760
    %3289 = vmatmul.mubr.f32.gmra.mxu0 %v3288
    %v3290 = vpop.f32.mrf.mxu0
    %v3291 = vadd.f32 %v2982, %v3290
    %v3292 = vpop.f32.mrf.mxu0
    %3293 = vmatprep.mubr.f32.mxu0 0.0
    %v3294 = vand.u32 %v201, 4294901760
    %v3295 = vsub.f32 %v201, %v3294
    %v3296 = vand.u32 %v3295, 4294901760
    %3297 = vmatmul.mubr.f32.gmra.mxu0 %v3296
    %v3298 = vpop.f32.mrf.mxu0
    %v3299 = vadd.f32 %v2989, %v3298
    %v3300 = vpop.f32.mrf.mxu0
    %3301 = vmatprep.mubr.f32.mxu0 0.0
    %v3302 = vand.u32 %v204, 4294901760
    %v3303 = vsub.f32 %v204, %v3302
    %v3304 = vand.u32 %v3303, 4294901760
    %3305 = vmatmul.mubr.f32.gmra.mxu0 %v3304
    %v3306 = vpop.f32.mrf.mxu0
    %v3307 = vadd.f32 %v2996, %v3306
    %v3308 = vpop.f32.mrf.mxu0
    %3309 = vmatprep.mubr.f32.mxu0 0.0
    %v3310 = vand.u32 %v207, 4294901760
    %v3311 = vsub.f32 %v207, %v3310
    %v3312 = vand.u32 %v3311, 4294901760
    %3313 = vmatmul.mubr.f32.gmra.mxu0 %v3312
    %v3314 = vpop.f32.mrf.mxu0
    %v3315 = vadd.f32 %v3003, %v3314
    %v3316 = vpop.f32.mrf.mxu0
    %3317 = vmatprep.mubr.f32.mxu0 0.0
    %v3318 = vand.u32 %v210, 4294901760
    %v3319 = vsub.f32 %v210, %v3318
    %v3320 = vand.u32 %v3319, 4294901760
    %3321 = vmatmul.mubr.f32.gmra.mxu0 %v3320
    %v3322 = vpop.f32.mrf.mxu0
    %v3323 = vadd.f32 %v3010, %v3322
    %v3324 = vpop.f32.mrf.mxu0
    %3325 = vmatprep.mubr.f32.mxu0 0.0
    %v3326 = vand.u32 %v213, 4294901760
    %v3327 = vsub.f32 %v213, %v3326
    %v3328 = vand.u32 %v3327, 4294901760
    %3329 = vmatmul.mubr.f32.gmra.mxu0 %v3328
    %v3330 = vpop.f32.mrf.mxu0
    %v3331 = vadd.f32 %v3017, %v3330
    %v3332 = vpop.f32.mrf.mxu0
    %3333 = vmatprep.mubr.f32.mxu0 0.0
    %v3334 = vand.u32 %v216, 4294901760
    %v3335 = vsub.f32 %v216, %v3334
    %v3336 = vand.u32 %v3335, 4294901760
    %3337 = vmatmul.mubr.f32.gmra.mxu0 %v3336
    %v3338 = vpop.f32.mrf.mxu0
    %v3339 = vadd.f32 %v3024, %v3338
    %v3340 = vpop.f32.mrf.mxu0
    %3341 = vmatprep.mubr.f32.mxu0 0.0
    %v3342 = vand.u32 %v219, 4294901760
    %v3343 = vsub.f32 %v219, %v3342
    %v3344 = vand.u32 %v3343, 4294901760
    %3345 = vmatmul.mubr.f32.gmra.mxu0 %v3344
    %v3346 = vpop.f32.mrf.mxu0
    %v3347 = vadd.f32 %v3031, %v3346
    %v3348 = vpop.f32.mrf.mxu0
    %3349 = vmatprep.mubr.f32.mxu0 0.0
    %v3350 = vand.u32 %v222, 4294901760
    %v3351 = vsub.f32 %v222, %v3350
    %v3352 = vand.u32 %v3351, 4294901760
    %3353 = vmatmul.mubr.f32.gmra.mxu0 %v3352
    %v3354 = vpop.f32.mrf.mxu0
    %v3355 = vadd.f32 %v3038, %v3354
    %v3356 = vpop.f32.mrf.mxu0
    %3357 = vmatprep.mubr.f32.mxu0 0.0
    %v3358 = vand.u32 %v225, 4294901760
    %v3359 = vsub.f32 %v225, %v3358
    %v3360 = vand.u32 %v3359, 4294901760
    %3361 = vmatmul.mubr.f32.gmra.mxu0 %v3360
    %v3362 = vpop.f32.mrf.mxu0
    %v3363 = vadd.f32 %v3045, %v3362
    %v3364 = vpop.f32.mrf.mxu0
    %3365 = vmatprep.mubr.f32.mxu0 0.0
    %v3366 = vand.u32 %v228, 4294901760
    %v3367 = vsub.f32 %v228, %v3366
    %v3368 = vand.u32 %v3367, 4294901760
    %3369 = vmatmul.mubr.f32.gmra.mxu0 %v3368
    %v3370 = vpop.f32.mrf.mxu0
    %v3371 = vadd.f32 %v3052, %v3370
    %v3372 = vpop.f32.mrf.mxu0
    %3373 = vmatprep.mubr.f32.mxu0 0.0
    %v3374 = vand.u32 %v231, 4294901760
    %v3375 = vsub.f32 %v231, %v3374
    %v3376 = vand.u32 %v3375, 4294901760
    %3377 = vmatmul.mubr.f32.gmra.mxu0 %v3376
    %v3378 = vpop.f32.mrf.mxu0
    %v3379 = vadd.f32 %v3059, %v3378
    %v3380 = vpop.f32.mrf.mxu0
    %3381 = vmatprep.mubr.f32.mxu0 0.0
    %v3382 = vand.u32 %v234, 4294901760
    %v3383 = vsub.f32 %v234, %v3382
    %v3384 = vand.u32 %v3383, 4294901760
    %3385 = vmatmul.mubr.f32.gmra.mxu0 %v3384
    %v3386 = vpop.f32.mrf.mxu0
    %v3387 = vadd.f32 %v3066, %v3386
    %v3388 = vpop.f32.mrf.mxu0
    %3389 = vmatprep.mubr.f32.mxu0 0.0
    %v3390 = vand.u32 %v237, 4294901760
    %v3391 = vsub.f32 %v237, %v3390
    %v3392 = vand.u32 %v3391, 4294901760
    %3393 = vmatmul.mubr.f32.gmra.mxu0 %v3392
    %v3394 = vpop.f32.mrf.mxu0
    %v3395 = vadd.f32 %v3073, %v3394
    %v3396 = vpop.f32.mrf.mxu0
    %3397 = vmatprep.mubr.f32.mxu0 0.0
    %v3398 = vand.u32 %v240, 4294901760
    %v3399 = vsub.f32 %v240, %v3398
    %v3400 = vand.u32 %v3399, 4294901760
    %3401 = vmatmul.mubr.f32.gmra.mxu0 %v3400
    %v3402 = vpop.f32.mrf.mxu0
    %v3403 = vadd.f32 %v3080, %v3402
    %v3404 = vpop.f32.mrf.mxu0
    %3405 = vmatprep.mubr.f32.mxu0 0.0
    %v3406 = vand.u32 %v243, 4294901760
    %v3407 = vsub.f32 %v243, %v3406
    %v3408 = vand.u32 %v3407, 4294901760
    %3409 = vmatmul.mubr.f32.gmra.mxu0 %v3408
    %v3410 = vpop.f32.mrf.mxu0
    %v3411 = vadd.f32 %v3087, %v3410
    %v3412 = vpop.f32.mrf.mxu0
    %3413 = vmatprep.mubr.f32.mxu0 0.0
    %v3414 = vand.u32 %v246, 4294901760
    %v3415 = vsub.f32 %v246, %v3414
    %v3416 = vand.u32 %v3415, 4294901760
    %3417 = vmatmul.mubr.f32.gmra.mxu0 %v3416
    %v3418 = vpop.f32.mrf.mxu0
    %v3419 = vadd.f32 %v3094, %v3418
    %v3420 = vpop.f32.mrf.mxu0
    %3421 = vmatprep.mubr.f32.mxu0 0.0
    %v3422 = vand.u32 %v249, 4294901760
    %v3423 = vsub.f32 %v249, %v3422
    %v3424 = vand.u32 %v3423, 4294901760
    %3425 = vmatmul.mubr.f32.gmra.mxu0 %v3424
    %v3426 = vpop.f32.mrf.mxu0
    %v3427 = vadd.f32 %v3101, %v3426
    %v3428 = vpop.f32.mrf.mxu0
    %3429 = vmatprep.mubr.f32.mxu0 0.0
    %v3430 = vand.u32 %v252, 4294901760
    %v3431 = vsub.f32 %v252, %v3430
    %v3432 = vand.u32 %v3431, 4294901760
    %3433 = vmatmul.mubr.f32.gmra.mxu0 %v3432
    %v3434 = vpop.f32.mrf.mxu0
    %v3435 = vadd.f32 %v3108, %v3434
    %v3436 = vpop.f32.mrf.mxu0
    %3437 = vmatprep.mubr.f32.mxu0 0.0
    %v3438 = vand.u32 %v255, 4294901760
    %v3439 = vsub.f32 %v255, %v3438
    %v3440 = vand.u32 %v3439, 4294901760
    %3441 = vmatmul.mubr.f32.gmra.mxu0 %v3440
    %v3442 = vpop.f32.mrf.mxu0
    %v3443 = vadd.f32 %v3115, %v3442
    %v3444 = vpop.f32.mrf.mxu0
    %3445 = vmatprep.mubr.f32.mxu0 0.0
    %v3446 = vand.u32 %v258, 4294901760
    %v3447 = vsub.f32 %v258, %v3446
    %v3448 = vand.u32 %v3447, 4294901760
    %3449 = vmatmul.mubr.f32.gmra.mxu0 %v3448
    %v3450 = vpop.f32.mrf.mxu0
    %v3451 = vadd.f32 %v3122, %v3450
    %v3452 = vpop.f32.mrf.mxu0
    %3453 = vdwg.mxu0
    %3454 = vmatprep.subr.mxu0 0.0
    %3455 = vmatpush1.msra.mxu0 0.0
    %3456 = vmatprep.subr.mxu0 0.0
    %3457 = vmatpush1.msra.mxu0 0.0
    %3458 = vmatprep.subr.mxu0 0.0
    %3459 = vmatpush1.msra.mxu0 0.0
    %3460 = vmatprep.subr.mxu0 0.0
    %3461 = vmatpush1.msra.mxu0 0.0
    %3462 = vmatprep.subr.mxu0 0.0
    %3463 = vmatpush1.msra.mxu0 0.0
    %3464 = vmatprep.subr.mxu0 0.0
    %3465 = vmatpush1.msra.mxu0 0.0
    %3466 = vmatprep.subr.mxu0 0.0
    %3467 = vmatpush1.msra.mxu0 0.0
    %3468 = vmatprep.subr.mxu0 0.0
    %3469 = vmatpush1.msra.mxu0 0.0
    %3470 = vmatprep.subr.mxu0 0.0
    %v3471 = vand.u32 %v88, 4294901760
    %v3472 = vsub.f32 %v88, %v3471
    %v3473 = vand.u32 %v3472, 4294901760
    %3474 = vmatpush1.msra.mxu0 %v3473
    %3475 = vmatprep.subr.mxu0 0.0
    %v3476 = vand.u32 %v87, 4294901760
    %v3477 = vsub.f32 %v87, %v3476
    %v3478 = vand.u32 %v3477, 4294901760
    %3479 = vmatpush1.msra.mxu0 %v3478
    %3480 = vmatprep.subr.mxu0 0.0
    %v3481 = vand.u32 %v86, 4294901760
    %v3482 = vsub.f32 %v86, %v3481
    %v3483 = vand.u32 %v3482, 4294901760
    %3484 = vmatpush1.msra.mxu0 %v3483
    %3485 = vmatprep.subr.mxu0 0.0
    %v3486 = vand.u32 %v85, 4294901760
    %v3487 = vsub.f32 %v85, %v3486
    %v3488 = vand.u32 %v3487, 4294901760
    %3489 = vmatpush1.msra.mxu0 %v3488
    %3490 = vmatprep.subr.mxu0 0.0
    %v3491 = vand.u32 %v84, 4294901760
    %v3492 = vsub.f32 %v84, %v3491
    %v3493 = vand.u32 %v3492, 4294901760
    %3494 = vmatpush1.msra.mxu0 %v3493
    %3495 = vmatprep.subr.mxu0 0.0
    %v3496 = vand.u32 %v83, 4294901760
    %v3497 = vsub.f32 %v83, %v3496
    %v3498 = vand.u32 %v3497, 4294901760
    %3499 = vmatpush1.msra.mxu0 %v3498
    %3500 = vmatprep.subr.mxu0 0.0
    %v3501 = vand.u32 %v82, 4294901760
    %v3502 = vsub.f32 %v82, %v3501
    %v3503 = vand.u32 %v3502, 4294901760
    %3504 = vmatpush1.msra.mxu0 %v3503
    %3505 = vmatprep.subr.mxu0 0.0
    %v3506 = vand.u32 %v81, 4294901760
    %v3507 = vsub.f32 %v81, %v3506
    %v3508 = vand.u32 %v3507, 4294901760
    %3509 = vmatpush1.msra.mxu0 %v3508
    %3510 = vmatprep.subr.mxu0 0.0
    %3511 = vmatpush2.msra.mxu0 0.0
    %3512 = vmatprep.subr.mxu0 0.0
    %3513 = vmatpush2.msra.mxu0 0.0
    %3514 = vmatprep.subr.mxu0 0.0
    %3515 = vmatpush2.msra.mxu0 0.0
    %3516 = vmatprep.subr.mxu0 0.0
    %3517 = vmatpush2.msra.mxu0 0.0
    %3518 = vmatprep.subr.mxu0 0.0
    %3519 = vmatpush2.msra.mxu0 0.0
    %3520 = vmatprep.subr.mxu0 0.0
    %3521 = vmatpush2.msra.mxu0 0.0
    %3522 = vmatprep.subr.mxu0 0.0
    %3523 = vmatpush2.msra.mxu0 0.0
    %3524 = vmatprep.subr.mxu0 0.0
    %3525 = vmatpush2.msra.mxu0 0.0
    %3526 = vmatprep.subr.mxu0 0.0
    %3527 = vmatpush2.msra.mxu0 0.0
    %3528 = vmatprep.subr.mxu0 0.0
    %3529 = vmatpush2.msra.mxu0 0.0
    %3530 = vmatprep.subr.mxu0 0.0
    %3531 = vmatpush2.msra.mxu0 0.0
    %3532 = vmatprep.subr.mxu0 0.0
    %3533 = vmatpush2.msra.mxu0 0.0
    %3534 = vmatprep.subr.mxu0 0.0
    %3535 = vmatpush2.msra.mxu0 0.0
    %3536 = vmatprep.subr.mxu0 0.0
    %3537 = vmatpush2.msra.mxu0 0.0
    %3538 = vmatprep.subr.mxu0 0.0
    %3539 = vmatpush2.msra.mxu0 0.0
    %3540 = vmatprep.subr.mxu0 0.0
    %3541 = vmatpush2.msra.mxu0 0.0
    %3542 = vmatprep.mubr.f32.mxu0 0.0
    %v3543 = vand.u32 %v165, 4294901760
    %3544 = vmatmul.mubr.f32.gmra.mxu0 %v3543
    %v3545 = vpop.f32.mrf.mxu0
    %v3546 = vadd.f32 %v3203, %v3545
    %v3547 = vpop.f32.mrf.mxu0
    %3548 = vmatprep.mubr.f32.mxu0 0.0
    %v3549 = vand.u32 %v168, 4294901760
    %3550 = vmatmul.mubr.f32.gmra.mxu0 %v3549
    %v3551 = vpop.f32.mrf.mxu0
    %v3552 = vadd.f32 %v3211, %v3551
    %v3553 = vpop.f32.mrf.mxu0
    %3554 = vmatprep.mubr.f32.mxu0 0.0
    %v3555 = vand.u32 %v171, 4294901760
    %3556 = vmatmul.mubr.f32.gmra.mxu0 %v3555
    %v3557 = vpop.f32.mrf.mxu0
    %v3558 = vadd.f32 %v3219, %v3557
    %v3559 = vpop.f32.mrf.mxu0
    %3560 = vmatprep.mubr.f32.mxu0 0.0
    %v3561 = vand.u32 %v174, 4294901760
    %3562 = vmatmul.mubr.f32.gmra.mxu0 %v3561
    %v3563 = vpop.f32.mrf.mxu0
    %v3564 = vadd.f32 %v3227, %v3563
    %v3565 = vpop.f32.mrf.mxu0
    %3566 = vmatprep.mubr.f32.mxu0 0.0
    %v3567 = vand.u32 %v177, 4294901760
    %3568 = vmatmul.mubr.f32.gmra.mxu0 %v3567
    %v3569 = vpop.f32.mrf.mxu0
    %v3570 = vadd.f32 %v3235, %v3569
    %v3571 = vpop.f32.mrf.mxu0
    %3572 = vmatprep.mubr.f32.mxu0 0.0
    %v3573 = vand.u32 %v180, 4294901760
    %3574 = vmatmul.mubr.f32.gmra.mxu0 %v3573
    %v3575 = vpop.f32.mrf.mxu0
    %v3576 = vadd.f32 %v3243, %v3575
    %v3577 = vpop.f32.mrf.mxu0
    %3578 = vmatprep.mubr.f32.mxu0 0.0
    %v3579 = vand.u32 %v183, 4294901760
    %3580 = vmatmul.mubr.f32.gmra.mxu0 %v3579
    %v3581 = vpop.f32.mrf.mxu0
    %v3582 = vadd.f32 %v3251, %v3581
    %v3583 = vpop.f32.mrf.mxu0
    %3584 = vmatprep.mubr.f32.mxu0 0.0
    %v3585 = vand.u32 %v186, 4294901760
    %3586 = vmatmul.mubr.f32.gmra.mxu0 %v3585
    %v3587 = vpop.f32.mrf.mxu0
    %v3588 = vadd.f32 %v3259, %v3587
    %v3589 = vpop.f32.mrf.mxu0
    %3590 = vmatprep.mubr.f32.mxu0 0.0
    %v3591 = vand.u32 %v189, 4294901760
    %3592 = vmatmul.mubr.f32.gmra.mxu0 %v3591
    %v3593 = vpop.f32.mrf.mxu0
    %v3594 = vadd.f32 %v3267, %v3593
    %v3595 = vpop.f32.mrf.mxu0
    %3596 = vmatprep.mubr.f32.mxu0 0.0
    %v3597 = vand.u32 %v192, 4294901760
    %3598 = vmatmul.mubr.f32.gmra.mxu0 %v3597
    %v3599 = vpop.f32.mrf.mxu0
    %v3600 = vadd.f32 %v3275, %v3599
    %v3601 = vpop.f32.mrf.mxu0
    %3602 = vmatprep.mubr.f32.mxu0 0.0
    %v3603 = vand.u32 %v195, 4294901760
    %3604 = vmatmul.mubr.f32.gmra.mxu0 %v3603
    %v3605 = vpop.f32.mrf.mxu0
    %v3606 = vadd.f32 %v3283, %v3605
    %v3607 = vpop.f32.mrf.mxu0
    %3608 = vmatprep.mubr.f32.mxu0 0.0
    %v3609 = vand.u32 %v198, 4294901760
    %3610 = vmatmul.mubr.f32.gmra.mxu0 %v3609
    %v3611 = vpop.f32.mrf.mxu0
    %v3612 = vadd.f32 %v3291, %v3611
    %v3613 = vpop.f32.mrf.mxu0
    %3614 = vmatprep.mubr.f32.mxu0 0.0
    %v3615 = vand.u32 %v201, 4294901760
    %3616 = vmatmul.mubr.f32.gmra.mxu0 %v3615
    %v3617 = vpop.f32.mrf.mxu0
    %v3618 = vadd.f32 %v3299, %v3617
    %v3619 = vpop.f32.mrf.mxu0
    %3620 = vmatprep.mubr.f32.mxu0 0.0
    %v3621 = vand.u32 %v204, 4294901760
    %3622 = vmatmul.mubr.f32.gmra.mxu0 %v3621
    %v3623 = vpop.f32.mrf.mxu0
    %v3624 = vadd.f32 %v3307, %v3623
    %v3625 = vpop.f32.mrf.mxu0
    %3626 = vmatprep.mubr.f32.mxu0 0.0
    %v3627 = vand.u32 %v207, 4294901760
    %3628 = vmatmul.mubr.f32.gmra.mxu0 %v3627
    %v3629 = vpop.f32.mrf.mxu0
    %v3630 = vadd.f32 %v3315, %v3629
    %v3631 = vpop.f32.mrf.mxu0
    %3632 = vmatprep.mubr.f32.mxu0 0.0
    %v3633 = vand.u32 %v210, 4294901760
    %3634 = vmatmul.mubr.f32.gmra.mxu0 %v3633
    %v3635 = vpop.f32.mrf.mxu0
    %v3636 = vadd.f32 %v3323, %v3635
    %v3637 = vpop.f32.mrf.mxu0
    %3638 = vmatprep.mubr.f32.mxu0 0.0
    %v3639 = vand.u32 %v213, 4294901760
    %3640 = vmatmul.mubr.f32.gmra.mxu0 %v3639
    %v3641 = vpop.f32.mrf.mxu0
    %v3642 = vadd.f32 %v3331, %v3641
    %v3643 = vpop.f32.mrf.mxu0
    %3644 = vmatprep.mubr.f32.mxu0 0.0
    %v3645 = vand.u32 %v216, 4294901760
    %3646 = vmatmul.mubr.f32.gmra.mxu0 %v3645
    %v3647 = vpop.f32.mrf.mxu0
    %v3648 = vadd.f32 %v3339, %v3647
    %v3649 = vpop.f32.mrf.mxu0
    %3650 = vmatprep.mubr.f32.mxu0 0.0
    %v3651 = vand.u32 %v219, 4294901760
    %3652 = vmatmul.mubr.f32.gmra.mxu0 %v3651
    %v3653 = vpop.f32.mrf.mxu0
    %v3654 = vadd.f32 %v3347, %v3653
    %v3655 = vpop.f32.mrf.mxu0
    %3656 = vmatprep.mubr.f32.mxu0 0.0
    %v3657 = vand.u32 %v222, 4294901760
    %3658 = vmatmul.mubr.f32.gmra.mxu0 %v3657
    %v3659 = vpop.f32.mrf.mxu0
    %v3660 = vadd.f32 %v3355, %v3659
    %v3661 = vpop.f32.mrf.mxu0
    %3662 = vmatprep.mubr.f32.mxu0 0.0
    %v3663 = vand.u32 %v225, 4294901760
    %3664 = vmatmul.mubr.f32.gmra.mxu0 %v3663
    %v3665 = vpop.f32.mrf.mxu0
    %v3666 = vadd.f32 %v3363, %v3665
    %v3667 = vpop.f32.mrf.mxu0
    %3668 = vmatprep.mubr.f32.mxu0 0.0
    %v3669 = vand.u32 %v228, 4294901760
    %3670 = vmatmul.mubr.f32.gmra.mxu0 %v3669
    %v3671 = vpop.f32.mrf.mxu0
    %v3672 = vadd.f32 %v3371, %v3671
    %v3673 = vpop.f32.mrf.mxu0
    %3674 = vmatprep.mubr.f32.mxu0 0.0
    %v3675 = vand.u32 %v231, 4294901760
    %3676 = vmatmul.mubr.f32.gmra.mxu0 %v3675
    %v3677 = vpop.f32.mrf.mxu0
    %v3678 = vadd.f32 %v3379, %v3677
    %v3679 = vpop.f32.mrf.mxu0
    %3680 = vmatprep.mubr.f32.mxu0 0.0
    %v3681 = vand.u32 %v234, 4294901760
    %3682 = vmatmul.mubr.f32.gmra.mxu0 %v3681
    %v3683 = vpop.f32.mrf.mxu0
    %v3684 = vadd.f32 %v3387, %v3683
    %v3685 = vpop.f32.mrf.mxu0
    %3686 = vmatprep.mubr.f32.mxu0 0.0
    %v3687 = vand.u32 %v237, 4294901760
    %3688 = vmatmul.mubr.f32.gmra.mxu0 %v3687
    %v3689 = vpop.f32.mrf.mxu0
    %v3690 = vadd.f32 %v3395, %v3689
    %v3691 = vpop.f32.mrf.mxu0
    %3692 = vmatprep.mubr.f32.mxu0 0.0
    %v3693 = vand.u32 %v240, 4294901760
    %3694 = vmatmul.mubr.f32.gmra.mxu0 %v3693
    %v3695 = vpop.f32.mrf.mxu0
    %v3696 = vadd.f32 %v3403, %v3695
    %v3697 = vpop.f32.mrf.mxu0
    %3698 = vmatprep.mubr.f32.mxu0 0.0
    %v3699 = vand.u32 %v243, 4294901760
    %3700 = vmatmul.mubr.f32.gmra.mxu0 %v3699
    %v3701 = vpop.f32.mrf.mxu0
    %v3702 = vadd.f32 %v3411, %v3701
    %v3703 = vpop.f32.mrf.mxu0
    %3704 = vmatprep.mubr.f32.mxu0 0.0
    %v3705 = vand.u32 %v246, 4294901760
    %3706 = vmatmul.mubr.f32.gmra.mxu0 %v3705
    %v3707 = vpop.f32.mrf.mxu0
    %v3708 = vadd.f32 %v3419, %v3707
    %v3709 = vpop.f32.mrf.mxu0
    %3710 = vmatprep.mubr.f32.mxu0 0.0
    %v3711 = vand.u32 %v249, 4294901760
    %3712 = vmatmul.mubr.f32.gmra.mxu0 %v3711
    %v3713 = vpop.f32.mrf.mxu0
    %v3714 = vadd.f32 %v3427, %v3713
    %v3715 = vpop.f32.mrf.mxu0
    %3716 = vmatprep.mubr.f32.mxu0 0.0
    %v3717 = vand.u32 %v252, 4294901760
    %3718 = vmatmul.mubr.f32.gmra.mxu0 %v3717
    %v3719 = vpop.f32.mrf.mxu0
    %v3720 = vadd.f32 %v3435, %v3719
    %v3721 = vpop.f32.mrf.mxu0
    %3722 = vmatprep.mubr.f32.mxu0 0.0
    %v3723 = vand.u32 %v255, 4294901760
    %3724 = vmatmul.mubr.f32.gmra.mxu0 %v3723
    %v3725 = vpop.f32.mrf.mxu0
    %v3726 = vadd.f32 %v3443, %v3725
    %v3727 = vpop.f32.mrf.mxu0
    %3728 = vmatprep.mubr.f32.mxu0 0.0
    %v3729 = vand.u32 %v258, 4294901760
    %3730 = vmatmul.mubr.f32.gmra.mxu0 %v3729
    %v3731 = vpop.f32.mrf.mxu0
    %v3732 = vadd.f32 %v3451, %v3731
    %v3733 = vpop.f32.mrf.mxu0
    %3734 = vdwg.mxu0
    %3735 = vmatprep.subr.mxu0 0.0
    %3736 = vmatpush1.msra.mxu0 0.0
    %3737 = vmatprep.subr.mxu0 0.0
    %3738 = vmatpush1.msra.mxu0 0.0
    %3739 = vmatprep.subr.mxu0 0.0
    %3740 = vmatpush1.msra.mxu0 0.0
    %3741 = vmatprep.subr.mxu0 0.0
    %3742 = vmatpush1.msra.mxu0 0.0
    %3743 = vmatprep.subr.mxu0 0.0
    %3744 = vmatpush1.msra.mxu0 0.0
    %3745 = vmatprep.subr.mxu0 0.0
    %3746 = vmatpush1.msra.mxu0 0.0
    %3747 = vmatprep.subr.mxu0 0.0
    %3748 = vmatpush1.msra.mxu0 0.0
    %3749 = vmatprep.subr.mxu0 0.0
    %3750 = vmatpush1.msra.mxu0 0.0
    %3751 = vmatprep.subr.mxu0 0.0
    %v3752 = vand.u32 %v88, 4294901760
    %3753 = vmatpush1.msra.mxu0 %v3752
    %3754 = vmatprep.subr.mxu0 0.0
    %v3755 = vand.u32 %v87, 4294901760
    %3756 = vmatpush1.msra.mxu0 %v3755
    %3757 = vmatprep.subr.mxu0 0.0
    %v3758 = vand.u32 %v86, 4294901760
    %3759 = vmatpush1.msra.mxu0 %v3758
    %3760 = vmatprep.subr.mxu0 0.0
    %v3761 = vand.u32 %v85, 4294901760
    %3762 = vmatpush1.msra.mxu0 %v3761
    %3763 = vmatprep.subr.mxu0 0.0
    %v3764 = vand.u32 %v84, 4294901760
    %3765 = vmatpush1.msra.mxu0 %v3764
    %3766 = vmatprep.subr.mxu0 0.0
    %v3767 = vand.u32 %v83, 4294901760
    %3768 = vmatpush1.msra.mxu0 %v3767
    %3769 = vmatprep.subr.mxu0 0.0
    %v3770 = vand.u32 %v82, 4294901760
    %3771 = vmatpush1.msra.mxu0 %v3770
    %3772 = vmatprep.subr.mxu0 0.0
    %v3773 = vand.u32 %v81, 4294901760
    %3774 = vmatpush1.msra.mxu0 %v3773
    %3775 = vmatprep.subr.mxu0 0.0
    %3776 = vmatpush2.msra.mxu0 0.0
    %3777 = vmatprep.subr.mxu0 0.0
    %3778 = vmatpush2.msra.mxu0 0.0
    %3779 = vmatprep.subr.mxu0 0.0
    %3780 = vmatpush2.msra.mxu0 0.0
    %3781 = vmatprep.subr.mxu0 0.0
    %3782 = vmatpush2.msra.mxu0 0.0
    %3783 = vmatprep.subr.mxu0 0.0
    %3784 = vmatpush2.msra.mxu0 0.0
    %3785 = vmatprep.subr.mxu0 0.0
    %3786 = vmatpush2.msra.mxu0 0.0
    %3787 = vmatprep.subr.mxu0 0.0
    %3788 = vmatpush2.msra.mxu0 0.0
    %3789 = vmatprep.subr.mxu0 0.0
    %3790 = vmatpush2.msra.mxu0 0.0
    %3791 = vmatprep.subr.mxu0 0.0
    %3792 = vmatpush2.msra.mxu0 0.0
    %3793 = vmatprep.subr.mxu0 0.0
    %3794 = vmatpush2.msra.mxu0 0.0
    %3795 = vmatprep.subr.mxu0 0.0
    %3796 = vmatpush2.msra.mxu0 0.0
    %3797 = vmatprep.subr.mxu0 0.0
    %3798 = vmatpush2.msra.mxu0 0.0
    %3799 = vmatprep.subr.mxu0 0.0
    %3800 = vmatpush2.msra.mxu0 0.0
    %3801 = vmatprep.subr.mxu0 0.0
    %3802 = vmatpush2.msra.mxu0 0.0
    %3803 = vmatprep.subr.mxu0 0.0
    %3804 = vmatpush2.msra.mxu0 0.0
    %3805 = vmatprep.subr.mxu0 0.0
    %3806 = vmatpush2.msra.mxu0 0.0
    %3807 = vmatprep.mubr.f32.mxu0 0.0
    %v3808 = vand.u32 %v165, 4294901760
    %3809 = vmatmul.mubr.f32.gmra.mxu0 %v3808
    %v3810 = vpop.f32.mrf.mxu0
    %v3811 = vadd.f32 %v3546, %v3810
    %v3812 = vpop.f32.mrf.mxu0
    %3813 = vmatprep.mubr.f32.mxu0 0.0
    %v3814 = vand.u32 %v168, 4294901760
    %3815 = vmatmul.mubr.f32.gmra.mxu0 %v3814
    %v3816 = vpop.f32.mrf.mxu0
    %v3817 = vadd.f32 %v3552, %v3816
    %v3818 = vpop.f32.mrf.mxu0
    %3819 = vmatprep.mubr.f32.mxu0 0.0
    %v3820 = vand.u32 %v171, 4294901760
    %3821 = vmatmul.mubr.f32.gmra.mxu0 %v3820
    %v3822 = vpop.f32.mrf.mxu0
    %v3823 = vadd.f32 %v3558, %v3822
    %v3824 = vpop.f32.mrf.mxu0
    %3825 = vmatprep.mubr.f32.mxu0 0.0
    %v3826 = vand.u32 %v174, 4294901760
    %3827 = vmatmul.mubr.f32.gmra.mxu0 %v3826
    %v3828 = vpop.f32.mrf.mxu0
    %v3829 = vadd.f32 %v3564, %v3828
    %v3830 = vpop.f32.mrf.mxu0
    %3831 = vmatprep.mubr.f32.mxu0 0.0
    %v3832 = vand.u32 %v177, 4294901760
    %3833 = vmatmul.mubr.f32.gmra.mxu0 %v3832
    %v3834 = vpop.f32.mrf.mxu0
    %v3835 = vadd.f32 %v3570, %v3834
    %v3836 = vpop.f32.mrf.mxu0
    %3837 = vmatprep.mubr.f32.mxu0 0.0
    %v3838 = vand.u32 %v180, 4294901760
    %3839 = vmatmul.mubr.f32.gmra.mxu0 %v3838
    %v3840 = vpop.f32.mrf.mxu0
    %v3841 = vadd.f32 %v3576, %v3840
    %v3842 = vpop.f32.mrf.mxu0
    %3843 = vmatprep.mubr.f32.mxu0 0.0
    %v3844 = vand.u32 %v183, 4294901760
    %3845 = vmatmul.mubr.f32.gmra.mxu0 %v3844
    %v3846 = vpop.f32.mrf.mxu0
    %v3847 = vadd.f32 %v3582, %v3846
    %v3848 = vpop.f32.mrf.mxu0
    %3849 = vmatprep.mubr.f32.mxu0 0.0
    %v3850 = vand.u32 %v186, 4294901760
    %3851 = vmatmul.mubr.f32.gmra.mxu0 %v3850
    %v3852 = vpop.f32.mrf.mxu0
    %v3853 = vadd.f32 %v3588, %v3852
    %v3854 = vpop.f32.mrf.mxu0
    %3855 = vmatprep.mubr.f32.mxu0 0.0
    %v3856 = vand.u32 %v189, 4294901760
    %3857 = vmatmul.mubr.f32.gmra.mxu0 %v3856
    %v3858 = vpop.f32.mrf.mxu0
    %v3859 = vadd.f32 %v3594, %v3858
    %v3860 = vpop.f32.mrf.mxu0
    %3861 = vmatprep.mubr.f32.mxu0 0.0
    %v3862 = vand.u32 %v192, 4294901760
    %3863 = vmatmul.mubr.f32.gmra.mxu0 %v3862
    %v3864 = vpop.f32.mrf.mxu0
    %v3865 = vadd.f32 %v3600, %v3864
    %v3866 = vpop.f32.mrf.mxu0
    %3867 = vmatprep.mubr.f32.mxu0 0.0
    %v3868 = vand.u32 %v195, 4294901760
    %3869 = vmatmul.mubr.f32.gmra.mxu0 %v3868
    %v3870 = vpop.f32.mrf.mxu0
    %v3871 = vadd.f32 %v3606, %v3870
    %v3872 = vpop.f32.mrf.mxu0
    %3873 = vmatprep.mubr.f32.mxu0 0.0
    %v3874 = vand.u32 %v198, 4294901760
    %3875 = vmatmul.mubr.f32.gmra.mxu0 %v3874
    %v3876 = vpop.f32.mrf.mxu0
    %v3877 = vadd.f32 %v3612, %v3876
    %v3878 = vpop.f32.mrf.mxu0
    %3879 = vmatprep.mubr.f32.mxu0 0.0
    %v3880 = vand.u32 %v201, 4294901760
    %3881 = vmatmul.mubr.f32.gmra.mxu0 %v3880
    %v3882 = vpop.f32.mrf.mxu0
    %v3883 = vadd.f32 %v3618, %v3882
    %v3884 = vpop.f32.mrf.mxu0
    %3885 = vmatprep.mubr.f32.mxu0 0.0
    %v3886 = vand.u32 %v204, 4294901760
    %3887 = vmatmul.mubr.f32.gmra.mxu0 %v3886
    %v3888 = vpop.f32.mrf.mxu0
    %v3889 = vadd.f32 %v3624, %v3888
    %v3890 = vpop.f32.mrf.mxu0
    %3891 = vmatprep.mubr.f32.mxu0 0.0
    %v3892 = vand.u32 %v207, 4294901760
    %3893 = vmatmul.mubr.f32.gmra.mxu0 %v3892
    %v3894 = vpop.f32.mrf.mxu0
    %v3895 = vadd.f32 %v3630, %v3894
    %v3896 = vpop.f32.mrf.mxu0
    %3897 = vmatprep.mubr.f32.mxu0 0.0
    %v3898 = vand.u32 %v210, 4294901760
    %3899 = vmatmul.mubr.f32.gmra.mxu0 %v3898
    %v3900 = vpop.f32.mrf.mxu0
    %v3901 = vadd.f32 %v3636, %v3900
    %v3902 = vpop.f32.mrf.mxu0
    %3903 = vmatprep.mubr.f32.mxu0 0.0
    %v3904 = vand.u32 %v213, 4294901760
    %3905 = vmatmul.mubr.f32.gmra.mxu0 %v3904
    %v3906 = vpop.f32.mrf.mxu0
    %v3907 = vadd.f32 %v3642, %v3906
    %v3908 = vpop.f32.mrf.mxu0
    %3909 = vmatprep.mubr.f32.mxu0 0.0
    %v3910 = vand.u32 %v216, 4294901760
    %3911 = vmatmul.mubr.f32.gmra.mxu0 %v3910
    %v3912 = vpop.f32.mrf.mxu0
    %v3913 = vadd.f32 %v3648, %v3912
    %v3914 = vpop.f32.mrf.mxu0
    %3915 = vmatprep.mubr.f32.mxu0 0.0
    %v3916 = vand.u32 %v219, 4294901760
    %3917 = vmatmul.mubr.f32.gmra.mxu0 %v3916
    %v3918 = vpop.f32.mrf.mxu0
    %v3919 = vadd.f32 %v3654, %v3918
    %v3920 = vpop.f32.mrf.mxu0
    %3921 = vmatprep.mubr.f32.mxu0 0.0
    %v3922 = vand.u32 %v222, 4294901760
    %3923 = vmatmul.mubr.f32.gmra.mxu0 %v3922
    %v3924 = vpop.f32.mrf.mxu0
    %v3925 = vadd.f32 %v3660, %v3924
    %v3926 = vpop.f32.mrf.mxu0
    %3927 = vmatprep.mubr.f32.mxu0 0.0
    %v3928 = vand.u32 %v225, 4294901760
    %3929 = vmatmul.mubr.f32.gmra.mxu0 %v3928
    %v3930 = vpop.f32.mrf.mxu0
    %v3931 = vadd.f32 %v3666, %v3930
    %v3932 = vpop.f32.mrf.mxu0
    %3933 = vmatprep.mubr.f32.mxu0 0.0
    %v3934 = vand.u32 %v228, 4294901760
    %3935 = vmatmul.mubr.f32.gmra.mxu0 %v3934
    %v3936 = vpop.f32.mrf.mxu0
    %v3937 = vadd.f32 %v3672, %v3936
    %v3938 = vpop.f32.mrf.mxu0
    %3939 = vmatprep.mubr.f32.mxu0 0.0
    %v3940 = vand.u32 %v231, 4294901760
    %3941 = vmatmul.mubr.f32.gmra.mxu0 %v3940
    %v3942 = vpop.f32.mrf.mxu0
    %v3943 = vadd.f32 %v3678, %v3942
    %v3944 = vpop.f32.mrf.mxu0
    %3945 = vmatprep.mubr.f32.mxu0 0.0
    %v3946 = vand.u32 %v234, 4294901760
    %3947 = vmatmul.mubr.f32.gmra.mxu0 %v3946
    %v3948 = vpop.f32.mrf.mxu0
    %v3949 = vadd.f32 %v3684, %v3948
    %v3950 = vpop.f32.mrf.mxu0
    %3951 = vmatprep.mubr.f32.mxu0 0.0
    %v3952 = vand.u32 %v237, 4294901760
    %3953 = vmatmul.mubr.f32.gmra.mxu0 %v3952
    %v3954 = vpop.f32.mrf.mxu0
    %v3955 = vadd.f32 %v3690, %v3954
    %v3956 = vpop.f32.mrf.mxu0
    %3957 = vmatprep.mubr.f32.mxu0 0.0
    %v3958 = vand.u32 %v240, 4294901760
    %3959 = vmatmul.mubr.f32.gmra.mxu0 %v3958
    %v3960 = vpop.f32.mrf.mxu0
    %v3961 = vadd.f32 %v3696, %v3960
    %v3962 = vpop.f32.mrf.mxu0
    %3963 = vmatprep.mubr.f32.mxu0 0.0
    %v3964 = vand.u32 %v243, 4294901760
    %3965 = vmatmul.mubr.f32.gmra.mxu0 %v3964
    %v3966 = vpop.f32.mrf.mxu0
    %v3967 = vadd.f32 %v3702, %v3966
    %v3968 = vpop.f32.mrf.mxu0
    %3969 = vmatprep.mubr.f32.mxu0 0.0
    %v3970 = vand.u32 %v246, 4294901760
    %3971 = vmatmul.mubr.f32.gmra.mxu0 %v3970
    %v3972 = vpop.f32.mrf.mxu0
    %v3973 = vadd.f32 %v3708, %v3972
    %v3974 = vpop.f32.mrf.mxu0
    %3975 = vmatprep.mubr.f32.mxu0 0.0
    %v3976 = vand.u32 %v249, 4294901760
    %3977 = vmatmul.mubr.f32.gmra.mxu0 %v3976
    %v3978 = vpop.f32.mrf.mxu0
    %v3979 = vadd.f32 %v3714, %v3978
    %v3980 = vpop.f32.mrf.mxu0
    %3981 = vmatprep.mubr.f32.mxu0 0.0
    %v3982 = vand.u32 %v252, 4294901760
    %3983 = vmatmul.mubr.f32.gmra.mxu0 %v3982
    %v3984 = vpop.f32.mrf.mxu0
    %v3985 = vadd.f32 %v3720, %v3984
    %v3986 = vpop.f32.mrf.mxu0
    %3987 = vmatprep.mubr.f32.mxu0 0.0
    %v3988 = vand.u32 %v255, 4294901760
    %3989 = vmatmul.mubr.f32.gmra.mxu0 %v3988
    %v3990 = vpop.f32.mrf.mxu0
    %v3991 = vadd.f32 %v3726, %v3990
    %v3992 = vpop.f32.mrf.mxu0
    %3993 = vmatprep.mubr.f32.mxu0 0.0
    %v3994 = vand.u32 %v258, 4294901760
    %3995 = vmatmul.mubr.f32.gmra.mxu0 %v3994
    %v3996 = vpop.f32.mrf.mxu0
    %v3997 = vadd.f32 %v3732, %v3996
    %v3998 = vpop.f32.mrf.mxu0
    %3999 = vdwg.mxu0
    %vm4000 = vcmask 130048
    %v4002 = vsel %vm4000, %v131, 0
    %v4005 = vsel %vm4000, %v132, 0
    %v4008 = vsel %vm4000, %v133, 0
    %v4011 = vsel %vm4000, %v134, 0
    %v4014 = vsel %vm4000, %v135, 0
    %v4017 = vsel %vm4000, %v136, 0
    %v4020 = vsel %vm4000, %v137, 0
    %v4023 = vsel %vm4000, %v138, 0
    %v4026 = vsel %vm4000, %v139, 0
    %v4029 = vsel %vm4000, %v140, 0
    %v4032 = vsel %vm4000, %v141, 0
    %v4035 = vsel %vm4000, %v142, 0
    %v4038 = vsel %vm4000, %v143, 0
    %v4041 = vsel %vm4000, %v144, 0
    %v4044 = vsel %vm4000, %v145, 0
    %v4047 = vsel %vm4000, %v146, 0
    %v4050 = vsel %vm4000, %v147, 0
    %v4053 = vsel %vm4000, %v148, 0
    %v4056 = vsel %vm4000, %v149, 0
    %v4059 = vsel %vm4000, %v150, 0
    %v4062 = vsel %vm4000, %v151, 0
    %v4065 = vsel %vm4000, %v152, 0
    %v4068 = vsel %vm4000, %v153, 0
    %v4071 = vsel %vm4000, %v154, 0
    %v4074 = vsel %vm4000, %v155, 0
    %v4077 = vsel %vm4000, %v156, 0
    %v4080 = vsel %vm4000, %v157, 0
    %v4083 = vsel %vm4000, %v158, 0
    %v4086 = vsel %vm4000, %v159, 0
    %v4089 = vsel %vm4000, %v160, 0
    %v4092 = vsel %vm4000, %v161, 0
    %v4095 = vsel %vm4000, %v162, 0
    %4097 = vmatprep.subr.mxu0 0.0
    %4098 = vmatpush1.msra.mxu0 0.0
    %4099 = vmatprep.subr.mxu0 0.0
    %4100 = vmatpush1.msra.mxu0 0.0
    %4101 = vmatprep.subr.mxu0 0.0
    %4102 = vmatpush1.msra.mxu0 0.0
    %4103 = vmatprep.subr.mxu0 0.0
    %4104 = vmatpush1.msra.mxu0 0.0
    %4105 = vmatprep.subr.mxu0 0.0
    %4106 = vmatpush1.msra.mxu0 0.0
    %4107 = vmatprep.subr.mxu0 0.0
    %4108 = vmatpush1.msra.mxu0 0.0
    %4109 = vmatprep.subr.mxu0 0.0
    %4110 = vmatpush1.msra.mxu0 0.0
    %4111 = vmatprep.subr.mxu0 0.0
    %4112 = vmatpush1.msra.mxu0 0.0
    %4113 = vmatprep.subr.mxu0 0.0
    %4114 = vmatpush1.msra.mxu0 0.0
    %4115 = vmatprep.subr.mxu0 0.0
    %4116 = vmatpush1.msra.mxu0 0.0
    %4117 = vmatprep.subr.mxu0 0.0
    %4118 = vmatpush1.msra.mxu0 0.0
    %4119 = vmatprep.subr.mxu0 0.0
    %4120 = vmatpush1.msra.mxu0 0.0
    %4121 = vmatprep.subr.mxu0 0.0
    %4122 = vmatpush1.msra.mxu0 0.0
    %4123 = vmatprep.subr.mxu0 0.0
    %4124 = vmatpush1.msra.mxu0 0.0
    %4125 = vmatprep.subr.mxu0 0.0
    %v4126 = vand.u32 %v98, 4294901760
    %4127 = vmatpush1.msra.mxu0 %v4126
    %4128 = vmatprep.subr.mxu0 0.0
    %v4129 = vand.u32 %v97, 4294901760
    %4130 = vmatpush1.msra.mxu0 %v4129
    %4131 = vmatprep.subr.mxu0 0.0
    %4132 = vmatpush2.msra.mxu0 0.0
    %4133 = vmatprep.subr.mxu0 0.0
    %4134 = vmatpush2.msra.mxu0 0.0
    %4135 = vmatprep.subr.mxu0 0.0
    %4136 = vmatpush2.msra.mxu0 0.0
    %4137 = vmatprep.subr.mxu0 0.0
    %4138 = vmatpush2.msra.mxu0 0.0
    %4139 = vmatprep.subr.mxu0 0.0
    %4140 = vmatpush2.msra.mxu0 0.0
    %4141 = vmatprep.subr.mxu0 0.0
    %4142 = vmatpush2.msra.mxu0 0.0
    %4143 = vmatprep.subr.mxu0 0.0
    %4144 = vmatpush2.msra.mxu0 0.0
    %4145 = vmatprep.subr.mxu0 0.0
    %4146 = vmatpush2.msra.mxu0 0.0
    %4147 = vmatprep.subr.mxu0 0.0
    %4148 = vmatpush2.msra.mxu0 0.0
    %4149 = vmatprep.subr.mxu0 0.0
    %4150 = vmatpush2.msra.mxu0 0.0
    %4151 = vmatprep.subr.mxu0 0.0
    %4152 = vmatpush2.msra.mxu0 0.0
    %4153 = vmatprep.subr.mxu0 0.0
    %4154 = vmatpush2.msra.mxu0 0.0
    %4155 = vmatprep.subr.mxu0 0.0
    %4156 = vmatpush2.msra.mxu0 0.0
    %4157 = vmatprep.subr.mxu0 0.0
    %4158 = vmatpush2.msra.mxu0 0.0
    %4159 = vmatprep.subr.mxu0 0.0
    %4160 = vmatpush2.msra.mxu0 0.0
    %4161 = vmatprep.subr.mxu0 0.0
    %4162 = vmatpush2.msra.mxu0 0.0
    %4163 = vmatprep.mubr.f32.mxu0 0.0
    %v4164 = vand.u32 %v4002, 4294901760
    %v4165 = vsub.f32 %v4002, %v4164
    %v4166 = vand.u32 %v4165, 4294901760
    %v4167 = vsub.f32 %v4165, %v4166
    %v4168 = vand.u32 %v4167, 4294901760
    %4169 = vmatmul.mubr.f32.gmra.mxu0 %v4168
    %v4170 = vpop.f32.mrf.mxu0
    %v4171 = vadd.f32 0.0, %v4170
    %v4172 = vpop.f32.mrf.mxu0
    %4173 = vmatprep.mubr.f32.mxu0 0.0
    %v4174 = vand.u32 %v4005, 4294901760
    %v4175 = vsub.f32 %v4005, %v4174
    %v4176 = vand.u32 %v4175, 4294901760
    %v4177 = vsub.f32 %v4175, %v4176
    %v4178 = vand.u32 %v4177, 4294901760
    %4179 = vmatmul.mubr.f32.gmra.mxu0 %v4178
    %v4180 = vpop.f32.mrf.mxu0
    %v4181 = vadd.f32 0.0, %v4180
    %v4182 = vpop.f32.mrf.mxu0
    %4183 = vmatprep.mubr.f32.mxu0 0.0
    %v4184 = vand.u32 %v4008, 4294901760
    %v4185 = vsub.f32 %v4008, %v4184
    %v4186 = vand.u32 %v4185, 4294901760
    %v4187 = vsub.f32 %v4185, %v4186
    %v4188 = vand.u32 %v4187, 4294901760
    %4189 = vmatmul.mubr.f32.gmra.mxu0 %v4188
    %v4190 = vpop.f32.mrf.mxu0
    %v4191 = vadd.f32 0.0, %v4190
    %v4192 = vpop.f32.mrf.mxu0
    %4193 = vmatprep.mubr.f32.mxu0 0.0
    %v4194 = vand.u32 %v4011, 4294901760
    %v4195 = vsub.f32 %v4011, %v4194
    %v4196 = vand.u32 %v4195, 4294901760
    %v4197 = vsub.f32 %v4195, %v4196
    %v4198 = vand.u32 %v4197, 4294901760
    %4199 = vmatmul.mubr.f32.gmra.mxu0 %v4198
    %v4200 = vpop.f32.mrf.mxu0
    %v4201 = vadd.f32 0.0, %v4200
    %v4202 = vpop.f32.mrf.mxu0
    %4203 = vmatprep.mubr.f32.mxu0 0.0
    %v4204 = vand.u32 %v4014, 4294901760
    %v4205 = vsub.f32 %v4014, %v4204
    %v4206 = vand.u32 %v4205, 4294901760
    %v4207 = vsub.f32 %v4205, %v4206
    %v4208 = vand.u32 %v4207, 4294901760
    %4209 = vmatmul.mubr.f32.gmra.mxu0 %v4208
    %v4210 = vpop.f32.mrf.mxu0
    %v4211 = vadd.f32 0.0, %v4210
    %v4212 = vpop.f32.mrf.mxu0
    %4213 = vmatprep.mubr.f32.mxu0 0.0
    %v4214 = vand.u32 %v4017, 4294901760
    %v4215 = vsub.f32 %v4017, %v4214
    %v4216 = vand.u32 %v4215, 4294901760
    %v4217 = vsub.f32 %v4215, %v4216
    %v4218 = vand.u32 %v4217, 4294901760
    %4219 = vmatmul.mubr.f32.gmra.mxu0 %v4218
    %v4220 = vpop.f32.mrf.mxu0
    %v4221 = vadd.f32 0.0, %v4220
    %v4222 = vpop.f32.mrf.mxu0
    %4223 = vmatprep.mubr.f32.mxu0 0.0
    %v4224 = vand.u32 %v4020, 4294901760
    %v4225 = vsub.f32 %v4020, %v4224
    %v4226 = vand.u32 %v4225, 4294901760
    %v4227 = vsub.f32 %v4225, %v4226
    %v4228 = vand.u32 %v4227, 4294901760
    %4229 = vmatmul.mubr.f32.gmra.mxu0 %v4228
    %v4230 = vpop.f32.mrf.mxu0
    %v4231 = vadd.f32 0.0, %v4230
    %v4232 = vpop.f32.mrf.mxu0
    %4233 = vmatprep.mubr.f32.mxu0 0.0
    %v4234 = vand.u32 %v4023, 4294901760
    %v4235 = vsub.f32 %v4023, %v4234
    %v4236 = vand.u32 %v4235, 4294901760
    %v4237 = vsub.f32 %v4235, %v4236
    %v4238 = vand.u32 %v4237, 4294901760
    %4239 = vmatmul.mubr.f32.gmra.mxu0 %v4238
    %v4240 = vpop.f32.mrf.mxu0
    %v4241 = vadd.f32 0.0, %v4240
    %v4242 = vpop.f32.mrf.mxu0
    %4243 = vmatprep.mubr.f32.mxu0 0.0
    %v4244 = vand.u32 %v4026, 4294901760
    %v4245 = vsub.f32 %v4026, %v4244
    %v4246 = vand.u32 %v4245, 4294901760
    %v4247 = vsub.f32 %v4245, %v4246
    %v4248 = vand.u32 %v4247, 4294901760
    %4249 = vmatmul.mubr.f32.gmra.mxu0 %v4248
    %v4250 = vpop.f32.mrf.mxu0
    %v4251 = vadd.f32 0.0, %v4250
    %v4252 = vpop.f32.mrf.mxu0
    %4253 = vmatprep.mubr.f32.mxu0 0.0
    %v4254 = vand.u32 %v4029, 4294901760
    %v4255 = vsub.f32 %v4029, %v4254
    %v4256 = vand.u32 %v4255, 4294901760
    %v4257 = vsub.f32 %v4255, %v4256
    %v4258 = vand.u32 %v4257, 4294901760
    %4259 = vmatmul.mubr.f32.gmra.mxu0 %v4258
    %v4260 = vpop.f32.mrf.mxu0
    %v4261 = vadd.f32 0.0, %v4260
    %v4262 = vpop.f32.mrf.mxu0
    %4263 = vmatprep.mubr.f32.mxu0 0.0
    %v4264 = vand.u32 %v4032, 4294901760
    %v4265 = vsub.f32 %v4032, %v4264
    %v4266 = vand.u32 %v4265, 4294901760
    %v4267 = vsub.f32 %v4265, %v4266
    %v4268 = vand.u32 %v4267, 4294901760
    %4269 = vmatmul.mubr.f32.gmra.mxu0 %v4268
    %v4270 = vpop.f32.mrf.mxu0
    %v4271 = vadd.f32 0.0, %v4270
    %v4272 = vpop.f32.mrf.mxu0
    %4273 = vmatprep.mubr.f32.mxu0 0.0
    %v4274 = vand.u32 %v4035, 4294901760
    %v4275 = vsub.f32 %v4035, %v4274
    %v4276 = vand.u32 %v4275, 4294901760
    %v4277 = vsub.f32 %v4275, %v4276
    %v4278 = vand.u32 %v4277, 4294901760
    %4279 = vmatmul.mubr.f32.gmra.mxu0 %v4278
    %v4280 = vpop.f32.mrf.mxu0
    %v4281 = vadd.f32 0.0, %v4280
    %v4282 = vpop.f32.mrf.mxu0
    %4283 = vmatprep.mubr.f32.mxu0 0.0
    %v4284 = vand.u32 %v4038, 4294901760
    %v4285 = vsub.f32 %v4038, %v4284
    %v4286 = vand.u32 %v4285, 4294901760
    %v4287 = vsub.f32 %v4285, %v4286
    %v4288 = vand.u32 %v4287, 4294901760
    %4289 = vmatmul.mubr.f32.gmra.mxu0 %v4288
    %v4290 = vpop.f32.mrf.mxu0
    %v4291 = vadd.f32 0.0, %v4290
    %v4292 = vpop.f32.mrf.mxu0
    %4293 = vmatprep.mubr.f32.mxu0 0.0
    %v4294 = vand.u32 %v4041, 4294901760
    %v4295 = vsub.f32 %v4041, %v4294
    %v4296 = vand.u32 %v4295, 4294901760
    %v4297 = vsub.f32 %v4295, %v4296
    %v4298 = vand.u32 %v4297, 4294901760
    %4299 = vmatmul.mubr.f32.gmra.mxu0 %v4298
    %v4300 = vpop.f32.mrf.mxu0
    %v4301 = vadd.f32 0.0, %v4300
    %v4302 = vpop.f32.mrf.mxu0
    %4303 = vmatprep.mubr.f32.mxu0 0.0
    %v4304 = vand.u32 %v4044, 4294901760
    %v4305 = vsub.f32 %v4044, %v4304
    %v4306 = vand.u32 %v4305, 4294901760
    %v4307 = vsub.f32 %v4305, %v4306
    %v4308 = vand.u32 %v4307, 4294901760
    %4309 = vmatmul.mubr.f32.gmra.mxu0 %v4308
    %v4310 = vpop.f32.mrf.mxu0
    %v4311 = vadd.f32 0.0, %v4310
    %v4312 = vpop.f32.mrf.mxu0
    %4313 = vmatprep.mubr.f32.mxu0 0.0
    %v4314 = vand.u32 %v4047, 4294901760
    %v4315 = vsub.f32 %v4047, %v4314
    %v4316 = vand.u32 %v4315, 4294901760
    %v4317 = vsub.f32 %v4315, %v4316
    %v4318 = vand.u32 %v4317, 4294901760
    %4319 = vmatmul.mubr.f32.gmra.mxu0 %v4318
    %v4320 = vpop.f32.mrf.mxu0
    %v4321 = vadd.f32 0.0, %v4320
    %v4322 = vpop.f32.mrf.mxu0
    %4323 = vmatprep.mubr.f32.mxu0 0.0
    %v4324 = vand.u32 %v4050, 4294901760
    %v4325 = vsub.f32 %v4050, %v4324
    %v4326 = vand.u32 %v4325, 4294901760
    %v4327 = vsub.f32 %v4325, %v4326
    %v4328 = vand.u32 %v4327, 4294901760
    %4329 = vmatmul.mubr.f32.gmra.mxu0 %v4328
    %v4330 = vpop.f32.mrf.mxu0
    %v4331 = vadd.f32 0.0, %v4330
    %v4332 = vpop.f32.mrf.mxu0
    %4333 = vmatprep.mubr.f32.mxu0 0.0
    %v4334 = vand.u32 %v4053, 4294901760
    %v4335 = vsub.f32 %v4053, %v4334
    %v4336 = vand.u32 %v4335, 4294901760
    %v4337 = vsub.f32 %v4335, %v4336
    %v4338 = vand.u32 %v4337, 4294901760
    %4339 = vmatmul.mubr.f32.gmra.mxu0 %v4338
    %v4340 = vpop.f32.mrf.mxu0
    %v4341 = vadd.f32 0.0, %v4340
    %v4342 = vpop.f32.mrf.mxu0
    %4343 = vmatprep.mubr.f32.mxu0 0.0
    %v4344 = vand.u32 %v4056, 4294901760
    %v4345 = vsub.f32 %v4056, %v4344
    %v4346 = vand.u32 %v4345, 4294901760
    %v4347 = vsub.f32 %v4345, %v4346
    %v4348 = vand.u32 %v4347, 4294901760
    %4349 = vmatmul.mubr.f32.gmra.mxu0 %v4348
    %v4350 = vpop.f32.mrf.mxu0
    %v4351 = vadd.f32 0.0, %v4350
    %v4352 = vpop.f32.mrf.mxu0
    %4353 = vmatprep.mubr.f32.mxu0 0.0
    %v4354 = vand.u32 %v4059, 4294901760
    %v4355 = vsub.f32 %v4059, %v4354
    %v4356 = vand.u32 %v4355, 4294901760
    %v4357 = vsub.f32 %v4355, %v4356
    %v4358 = vand.u32 %v4357, 4294901760
    %4359 = vmatmul.mubr.f32.gmra.mxu0 %v4358
    %v4360 = vpop.f32.mrf.mxu0
    %v4361 = vadd.f32 0.0, %v4360
    %v4362 = vpop.f32.mrf.mxu0
    %4363 = vmatprep.mubr.f32.mxu0 0.0
    %v4364 = vand.u32 %v4062, 4294901760
    %v4365 = vsub.f32 %v4062, %v4364
    %v4366 = vand.u32 %v4365, 4294901760
    %v4367 = vsub.f32 %v4365, %v4366
    %v4368 = vand.u32 %v4367, 4294901760
    %4369 = vmatmul.mubr.f32.gmra.mxu0 %v4368
    %v4370 = vpop.f32.mrf.mxu0
    %v4371 = vadd.f32 0.0, %v4370
    %v4372 = vpop.f32.mrf.mxu0
    %4373 = vmatprep.mubr.f32.mxu0 0.0
    %v4374 = vand.u32 %v4065, 4294901760
    %v4375 = vsub.f32 %v4065, %v4374
    %v4376 = vand.u32 %v4375, 4294901760
    %v4377 = vsub.f32 %v4375, %v4376
    %v4378 = vand.u32 %v4377, 4294901760
    %4379 = vmatmul.mubr.f32.gmra.mxu0 %v4378
    %v4380 = vpop.f32.mrf.mxu0
    %v4381 = vadd.f32 0.0, %v4380
    %v4382 = vpop.f32.mrf.mxu0
    %4383 = vmatprep.mubr.f32.mxu0 0.0
    %v4384 = vand.u32 %v4068, 4294901760
    %v4385 = vsub.f32 %v4068, %v4384
    %v4386 = vand.u32 %v4385, 4294901760
    %v4387 = vsub.f32 %v4385, %v4386
    %v4388 = vand.u32 %v4387, 4294901760
    %4389 = vmatmul.mubr.f32.gmra.mxu0 %v4388
    %v4390 = vpop.f32.mrf.mxu0
    %v4391 = vadd.f32 0.0, %v4390
    %v4392 = vpop.f32.mrf.mxu0
    %4393 = vmatprep.mubr.f32.mxu0 0.0
    %v4394 = vand.u32 %v4071, 4294901760
    %v4395 = vsub.f32 %v4071, %v4394
    %v4396 = vand.u32 %v4395, 4294901760
    %v4397 = vsub.f32 %v4395, %v4396
    %v4398 = vand.u32 %v4397, 4294901760
    %4399 = vmatmul.mubr.f32.gmra.mxu0 %v4398
    %v4400 = vpop.f32.mrf.mxu0
    %v4401 = vadd.f32 0.0, %v4400
    %v4402 = vpop.f32.mrf.mxu0
    %4403 = vmatprep.mubr.f32.mxu0 0.0
    %v4404 = vand.u32 %v4074, 4294901760
    %v4405 = vsub.f32 %v4074, %v4404
    %v4406 = vand.u32 %v4405, 4294901760
    %v4407 = vsub.f32 %v4405, %v4406
    %v4408 = vand.u32 %v4407, 4294901760
    %4409 = vmatmul.mubr.f32.gmra.mxu0 %v4408
    %v4410 = vpop.f32.mrf.mxu0
    %v4411 = vadd.f32 0.0, %v4410
    %v4412 = vpop.f32.mrf.mxu0
    %4413 = vmatprep.mubr.f32.mxu0 0.0
    %v4414 = vand.u32 %v4077, 4294901760
    %v4415 = vsub.f32 %v4077, %v4414
    %v4416 = vand.u32 %v4415, 4294901760
    %v4417 = vsub.f32 %v4415, %v4416
    %v4418 = vand.u32 %v4417, 4294901760
    %4419 = vmatmul.mubr.f32.gmra.mxu0 %v4418
    %v4420 = vpop.f32.mrf.mxu0
    %v4421 = vadd.f32 0.0, %v4420
    %v4422 = vpop.f32.mrf.mxu0
    %4423 = vmatprep.mubr.f32.mxu0 0.0
    %v4424 = vand.u32 %v4080, 4294901760
    %v4425 = vsub.f32 %v4080, %v4424
    %v4426 = vand.u32 %v4425, 4294901760
    %v4427 = vsub.f32 %v4425, %v4426
    %v4428 = vand.u32 %v4427, 4294901760
    %4429 = vmatmul.mubr.f32.gmra.mxu0 %v4428
    %v4430 = vpop.f32.mrf.mxu0
    %v4431 = vadd.f32 0.0, %v4430
    %v4432 = vpop.f32.mrf.mxu0
    %4433 = vmatprep.mubr.f32.mxu0 0.0
    %v4434 = vand.u32 %v4083, 4294901760
    %v4435 = vsub.f32 %v4083, %v4434
    %v4436 = vand.u32 %v4435, 4294901760
    %v4437 = vsub.f32 %v4435, %v4436
    %v4438 = vand.u32 %v4437, 4294901760
    %4439 = vmatmul.mubr.f32.gmra.mxu0 %v4438
    %v4440 = vpop.f32.mrf.mxu0
    %v4441 = vadd.f32 0.0, %v4440
    %v4442 = vpop.f32.mrf.mxu0
    %4443 = vmatprep.mubr.f32.mxu0 0.0
    %v4444 = vand.u32 %v4086, 4294901760
    %v4445 = vsub.f32 %v4086, %v4444
    %v4446 = vand.u32 %v4445, 4294901760
    %v4447 = vsub.f32 %v4445, %v4446
    %v4448 = vand.u32 %v4447, 4294901760
    %4449 = vmatmul.mubr.f32.gmra.mxu0 %v4448
    %v4450 = vpop.f32.mrf.mxu0
    %v4451 = vadd.f32 0.0, %v4450
    %v4452 = vpop.f32.mrf.mxu0
    %4453 = vmatprep.mubr.f32.mxu0 0.0
    %v4454 = vand.u32 %v4089, 4294901760
    %v4455 = vsub.f32 %v4089, %v4454
    %v4456 = vand.u32 %v4455, 4294901760
    %v4457 = vsub.f32 %v4455, %v4456
    %v4458 = vand.u32 %v4457, 4294901760
    %4459 = vmatmul.mubr.f32.gmra.mxu0 %v4458
    %v4460 = vpop.f32.mrf.mxu0
    %v4461 = vadd.f32 0.0, %v4460
    %v4462 = vpop.f32.mrf.mxu0
    %4463 = vmatprep.mubr.f32.mxu0 0.0
    %v4464 = vand.u32 %v4092, 4294901760
    %v4465 = vsub.f32 %v4092, %v4464
    %v4466 = vand.u32 %v4465, 4294901760
    %v4467 = vsub.f32 %v4465, %v4466
    %v4468 = vand.u32 %v4467, 4294901760
    %4469 = vmatmul.mubr.f32.gmra.mxu0 %v4468
    %v4470 = vpop.f32.mrf.mxu0
    %v4471 = vadd.f32 0.0, %v4470
    %v4472 = vpop.f32.mrf.mxu0
    %4473 = vmatprep.mubr.f32.mxu0 0.0
    %v4474 = vand.u32 %v4095, 4294901760
    %v4475 = vsub.f32 %v4095, %v4474
    %v4476 = vand.u32 %v4475, 4294901760
    %v4477 = vsub.f32 %v4475, %v4476
    %v4478 = vand.u32 %v4477, 4294901760
    %4479 = vmatmul.mubr.f32.gmra.mxu0 %v4478
    %v4480 = vpop.f32.mrf.mxu0
    %v4481 = vadd.f32 0.0, %v4480
    %v4482 = vpop.f32.mrf.mxu0
    %4483 = vdwg.mxu0
    %4484 = vmatprep.subr.mxu0 0.0
    %4485 = vmatpush1.msra.mxu0 0.0
    %4486 = vmatprep.subr.mxu0 0.0
    %4487 = vmatpush1.msra.mxu0 0.0
    %4488 = vmatprep.subr.mxu0 0.0
    %4489 = vmatpush1.msra.mxu0 0.0
    %4490 = vmatprep.subr.mxu0 0.0
    %4491 = vmatpush1.msra.mxu0 0.0
    %4492 = vmatprep.subr.mxu0 0.0
    %4493 = vmatpush1.msra.mxu0 0.0
    %4494 = vmatprep.subr.mxu0 0.0
    %4495 = vmatpush1.msra.mxu0 0.0
    %4496 = vmatprep.subr.mxu0 0.0
    %4497 = vmatpush1.msra.mxu0 0.0
    %4498 = vmatprep.subr.mxu0 0.0
    %4499 = vmatpush1.msra.mxu0 0.0
    %4500 = vmatprep.subr.mxu0 0.0
    %4501 = vmatpush1.msra.mxu0 0.0
    %4502 = vmatprep.subr.mxu0 0.0
    %4503 = vmatpush1.msra.mxu0 0.0
    %4504 = vmatprep.subr.mxu0 0.0
    %4505 = vmatpush1.msra.mxu0 0.0
    %4506 = vmatprep.subr.mxu0 0.0
    %4507 = vmatpush1.msra.mxu0 0.0
    %4508 = vmatprep.subr.mxu0 0.0
    %4509 = vmatpush1.msra.mxu0 0.0
    %4510 = vmatprep.subr.mxu0 0.0
    %4511 = vmatpush1.msra.mxu0 0.0
    %4512 = vmatprep.subr.mxu0 0.0
    %v4513 = vand.u32 %v98, 4294901760
    %v4514 = vsub.f32 %v98, %v4513
    %v4515 = vand.u32 %v4514, 4294901760
    %v4516 = vsub.f32 %v4514, %v4515
    %v4517 = vand.u32 %v4516, 4294901760
    %4518 = vmatpush1.msra.mxu0 %v4517
    %4519 = vmatprep.subr.mxu0 0.0
    %v4520 = vand.u32 %v97, 4294901760
    %v4521 = vsub.f32 %v97, %v4520
    %v4522 = vand.u32 %v4521, 4294901760
    %v4523 = vsub.f32 %v4521, %v4522
    %v4524 = vand.u32 %v4523, 4294901760
    %4525 = vmatpush1.msra.mxu0 %v4524
    %4526 = vmatprep.subr.mxu0 0.0
    %4527 = vmatpush2.msra.mxu0 0.0
    %4528 = vmatprep.subr.mxu0 0.0
    %4529 = vmatpush2.msra.mxu0 0.0
    %4530 = vmatprep.subr.mxu0 0.0
    %4531 = vmatpush2.msra.mxu0 0.0
    %4532 = vmatprep.subr.mxu0 0.0
    %4533 = vmatpush2.msra.mxu0 0.0
    %4534 = vmatprep.subr.mxu0 0.0
    %4535 = vmatpush2.msra.mxu0 0.0
    %4536 = vmatprep.subr.mxu0 0.0
    %4537 = vmatpush2.msra.mxu0 0.0
    %4538 = vmatprep.subr.mxu0 0.0
    %4539 = vmatpush2.msra.mxu0 0.0
    %4540 = vmatprep.subr.mxu0 0.0
    %4541 = vmatpush2.msra.mxu0 0.0
    %4542 = vmatprep.subr.mxu0 0.0
    %4543 = vmatpush2.msra.mxu0 0.0
    %4544 = vmatprep.subr.mxu0 0.0
    %4545 = vmatpush2.msra.mxu0 0.0
    %4546 = vmatprep.subr.mxu0 0.0
    %4547 = vmatpush2.msra.mxu0 0.0
    %4548 = vmatprep.subr.mxu0 0.0
    %4549 = vmatpush2.msra.mxu0 0.0
    %4550 = vmatprep.subr.mxu0 0.0
    %4551 = vmatpush2.msra.mxu0 0.0
    %4552 = vmatprep.subr.mxu0 0.0
    %4553 = vmatpush2.msra.mxu0 0.0
    %4554 = vmatprep.subr.mxu0 0.0
    %4555 = vmatpush2.msra.mxu0 0.0
    %4556 = vmatprep.subr.mxu0 0.0
    %4557 = vmatpush2.msra.mxu0 0.0
    %4558 = vmatprep.mubr.f32.mxu0 0.0
    %v4559 = vand.u32 %v4002, 4294901760
    %4560 = vmatmul.mubr.f32.gmra.mxu0 %v4559
    %v4561 = vpop.f32.mrf.mxu0
    %v4562 = vadd.f32 %v4171, %v4561
    %v4563 = vpop.f32.mrf.mxu0
    %4564 = vmatprep.mubr.f32.mxu0 0.0
    %v4565 = vand.u32 %v4005, 4294901760
    %4566 = vmatmul.mubr.f32.gmra.mxu0 %v4565
    %v4567 = vpop.f32.mrf.mxu0
    %v4568 = vadd.f32 %v4181, %v4567
    %v4569 = vpop.f32.mrf.mxu0
    %4570 = vmatprep.mubr.f32.mxu0 0.0
    %v4571 = vand.u32 %v4008, 4294901760
    %4572 = vmatmul.mubr.f32.gmra.mxu0 %v4571
    %v4573 = vpop.f32.mrf.mxu0
    %v4574 = vadd.f32 %v4191, %v4573
    %v4575 = vpop.f32.mrf.mxu0
    %4576 = vmatprep.mubr.f32.mxu0 0.0
    %v4577 = vand.u32 %v4011, 4294901760
    %4578 = vmatmul.mubr.f32.gmra.mxu0 %v4577
    %v4579 = vpop.f32.mrf.mxu0
    %v4580 = vadd.f32 %v4201, %v4579
    %v4581 = vpop.f32.mrf.mxu0
    %4582 = vmatprep.mubr.f32.mxu0 0.0
    %v4583 = vand.u32 %v4014, 4294901760
    %4584 = vmatmul.mubr.f32.gmra.mxu0 %v4583
    %v4585 = vpop.f32.mrf.mxu0
    %v4586 = vadd.f32 %v4211, %v4585
    %v4587 = vpop.f32.mrf.mxu0
    %4588 = vmatprep.mubr.f32.mxu0 0.0
    %v4589 = vand.u32 %v4017, 4294901760
    %4590 = vmatmul.mubr.f32.gmra.mxu0 %v4589
    %v4591 = vpop.f32.mrf.mxu0
    %v4592 = vadd.f32 %v4221, %v4591
    %v4593 = vpop.f32.mrf.mxu0
    %4594 = vmatprep.mubr.f32.mxu0 0.0
    %v4595 = vand.u32 %v4020, 4294901760
    %4596 = vmatmul.mubr.f32.gmra.mxu0 %v4595
    %v4597 = vpop.f32.mrf.mxu0
    %v4598 = vadd.f32 %v4231, %v4597
    %v4599 = vpop.f32.mrf.mxu0
    %4600 = vmatprep.mubr.f32.mxu0 0.0
    %v4601 = vand.u32 %v4023, 4294901760
    %4602 = vmatmul.mubr.f32.gmra.mxu0 %v4601
    %v4603 = vpop.f32.mrf.mxu0
    %v4604 = vadd.f32 %v4241, %v4603
    %v4605 = vpop.f32.mrf.mxu0
    %4606 = vmatprep.mubr.f32.mxu0 0.0
    %v4607 = vand.u32 %v4026, 4294901760
    %4608 = vmatmul.mubr.f32.gmra.mxu0 %v4607
    %v4609 = vpop.f32.mrf.mxu0
    %v4610 = vadd.f32 %v4251, %v4609
    %v4611 = vpop.f32.mrf.mxu0
    %4612 = vmatprep.mubr.f32.mxu0 0.0
    %v4613 = vand.u32 %v4029, 4294901760
    %4614 = vmatmul.mubr.f32.gmra.mxu0 %v4613
    %v4615 = vpop.f32.mrf.mxu0
    %v4616 = vadd.f32 %v4261, %v4615
    %v4617 = vpop.f32.mrf.mxu0
    %4618 = vmatprep.mubr.f32.mxu0 0.0
    %v4619 = vand.u32 %v4032, 4294901760
    %4620 = vmatmul.mubr.f32.gmra.mxu0 %v4619
    %v4621 = vpop.f32.mrf.mxu0
    %v4622 = vadd.f32 %v4271, %v4621
    %v4623 = vpop.f32.mrf.mxu0
    %4624 = vmatprep.mubr.f32.mxu0 0.0
    %v4625 = vand.u32 %v4035, 4294901760
    %4626 = vmatmul.mubr.f32.gmra.mxu0 %v4625
    %v4627 = vpop.f32.mrf.mxu0
    %v4628 = vadd.f32 %v4281, %v4627
    %v4629 = vpop.f32.mrf.mxu0
    %4630 = vmatprep.mubr.f32.mxu0 0.0
    %v4631 = vand.u32 %v4038, 4294901760
    %4632 = vmatmul.mubr.f32.gmra.mxu0 %v4631
    %v4633 = vpop.f32.mrf.mxu0
    %v4634 = vadd.f32 %v4291, %v4633
    %v4635 = vpop.f32.mrf.mxu0
    %4636 = vmatprep.mubr.f32.mxu0 0.0
    %v4637 = vand.u32 %v4041, 4294901760
    %4638 = vmatmul.mubr.f32.gmra.mxu0 %v4637
    %v4639 = vpop.f32.mrf.mxu0
    %v4640 = vadd.f32 %v4301, %v4639
    %v4641 = vpop.f32.mrf.mxu0
    %4642 = vmatprep.mubr.f32.mxu0 0.0
    %v4643 = vand.u32 %v4044, 4294901760
    %4644 = vmatmul.mubr.f32.gmra.mxu0 %v4643
    %v4645 = vpop.f32.mrf.mxu0
    %v4646 = vadd.f32 %v4311, %v4645
    %v4647 = vpop.f32.mrf.mxu0
    %4648 = vmatprep.mubr.f32.mxu0 0.0
    %v4649 = vand.u32 %v4047, 4294901760
    %4650 = vmatmul.mubr.f32.gmra.mxu0 %v4649
    %v4651 = vpop.f32.mrf.mxu0
    %v4652 = vadd.f32 %v4321, %v4651
    %v4653 = vpop.f32.mrf.mxu0
    %4654 = vmatprep.mubr.f32.mxu0 0.0
    %v4655 = vand.u32 %v4050, 4294901760
    %4656 = vmatmul.mubr.f32.gmra.mxu0 %v4655
    %v4657 = vpop.f32.mrf.mxu0
    %v4658 = vadd.f32 %v4331, %v4657
    %v4659 = vpop.f32.mrf.mxu0
    %4660 = vmatprep.mubr.f32.mxu0 0.0
    %v4661 = vand.u32 %v4053, 4294901760
    %4662 = vmatmul.mubr.f32.gmra.mxu0 %v4661
    %v4663 = vpop.f32.mrf.mxu0
    %v4664 = vadd.f32 %v4341, %v4663
    %v4665 = vpop.f32.mrf.mxu0
    %4666 = vmatprep.mubr.f32.mxu0 0.0
    %v4667 = vand.u32 %v4056, 4294901760
    %4668 = vmatmul.mubr.f32.gmra.mxu0 %v4667
    %v4669 = vpop.f32.mrf.mxu0
    %v4670 = vadd.f32 %v4351, %v4669
    %v4671 = vpop.f32.mrf.mxu0
    %4672 = vmatprep.mubr.f32.mxu0 0.0
    %v4673 = vand.u32 %v4059, 4294901760
    %4674 = vmatmul.mubr.f32.gmra.mxu0 %v4673
    %v4675 = vpop.f32.mrf.mxu0
    %v4676 = vadd.f32 %v4361, %v4675
    %v4677 = vpop.f32.mrf.mxu0
    %4678 = vmatprep.mubr.f32.mxu0 0.0
    %v4679 = vand.u32 %v4062, 4294901760
    %4680 = vmatmul.mubr.f32.gmra.mxu0 %v4679
    %v4681 = vpop.f32.mrf.mxu0
    %v4682 = vadd.f32 %v4371, %v4681
    %v4683 = vpop.f32.mrf.mxu0
    %4684 = vmatprep.mubr.f32.mxu0 0.0
    %v4685 = vand.u32 %v4065, 4294901760
    %4686 = vmatmul.mubr.f32.gmra.mxu0 %v4685
    %v4687 = vpop.f32.mrf.mxu0
    %v4688 = vadd.f32 %v4381, %v4687
    %v4689 = vpop.f32.mrf.mxu0
    %4690 = vmatprep.mubr.f32.mxu0 0.0
    %v4691 = vand.u32 %v4068, 4294901760
    %4692 = vmatmul.mubr.f32.gmra.mxu0 %v4691
    %v4693 = vpop.f32.mrf.mxu0
    %v4694 = vadd.f32 %v4391, %v4693
    %v4695 = vpop.f32.mrf.mxu0
    %4696 = vmatprep.mubr.f32.mxu0 0.0
    %v4697 = vand.u32 %v4071, 4294901760
    %4698 = vmatmul.mubr.f32.gmra.mxu0 %v4697
    %v4699 = vpop.f32.mrf.mxu0
    %v4700 = vadd.f32 %v4401, %v4699
    %v4701 = vpop.f32.mrf.mxu0
    %4702 = vmatprep.mubr.f32.mxu0 0.0
    %v4703 = vand.u32 %v4074, 4294901760
    %4704 = vmatmul.mubr.f32.gmra.mxu0 %v4703
    %v4705 = vpop.f32.mrf.mxu0
    %v4706 = vadd.f32 %v4411, %v4705
    %v4707 = vpop.f32.mrf.mxu0
    %4708 = vmatprep.mubr.f32.mxu0 0.0
    %v4709 = vand.u32 %v4077, 4294901760
    %4710 = vmatmul.mubr.f32.gmra.mxu0 %v4709
    %v4711 = vpop.f32.mrf.mxu0
    %v4712 = vadd.f32 %v4421, %v4711
    %v4713 = vpop.f32.mrf.mxu0
    %4714 = vmatprep.mubr.f32.mxu0 0.0
    %v4715 = vand.u32 %v4080, 4294901760
    %4716 = vmatmul.mubr.f32.gmra.mxu0 %v4715
    %v4717 = vpop.f32.mrf.mxu0
    %v4718 = vadd.f32 %v4431, %v4717
    %v4719 = vpop.f32.mrf.mxu0
    %4720 = vmatprep.mubr.f32.mxu0 0.0
    %v4721 = vand.u32 %v4083, 4294901760
    %4722 = vmatmul.mubr.f32.gmra.mxu0 %v4721
    %v4723 = vpop.f32.mrf.mxu0
    %v4724 = vadd.f32 %v4441, %v4723
    %v4725 = vpop.f32.mrf.mxu0
    %4726 = vmatprep.mubr.f32.mxu0 0.0
    %v4727 = vand.u32 %v4086, 4294901760
    %4728 = vmatmul.mubr.f32.gmra.mxu0 %v4727
    %v4729 = vpop.f32.mrf.mxu0
    %v4730 = vadd.f32 %v4451, %v4729
    %v4731 = vpop.f32.mrf.mxu0
    %4732 = vmatprep.mubr.f32.mxu0 0.0
    %v4733 = vand.u32 %v4089, 4294901760
    %4734 = vmatmul.mubr.f32.gmra.mxu0 %v4733
    %v4735 = vpop.f32.mrf.mxu0
    %v4736 = vadd.f32 %v4461, %v4735
    %v4737 = vpop.f32.mrf.mxu0
    %4738 = vmatprep.mubr.f32.mxu0 0.0
    %v4739 = vand.u32 %v4092, 4294901760
    %4740 = vmatmul.mubr.f32.gmra.mxu0 %v4739
    %v4741 = vpop.f32.mrf.mxu0
    %v4742 = vadd.f32 %v4471, %v4741
    %v4743 = vpop.f32.mrf.mxu0
    %4744 = vmatprep.mubr.f32.mxu0 0.0
    %v4745 = vand.u32 %v4095, 4294901760
    %4746 = vmatmul.mubr.f32.gmra.mxu0 %v4745
    %v4747 = vpop.f32.mrf.mxu0
    %v4748 = vadd.f32 %v4481, %v4747
    %v4749 = vpop.f32.mrf.mxu0
    %4750 = vdwg.mxu0
    %4751 = vmatprep.subr.mxu0 0.0
    %4752 = vmatpush1.msra.mxu0 0.0
    %4753 = vmatprep.subr.mxu0 0.0
    %4754 = vmatpush1.msra.mxu0 0.0
    %4755 = vmatprep.subr.mxu0 0.0
    %4756 = vmatpush1.msra.mxu0 0.0
    %4757 = vmatprep.subr.mxu0 0.0
    %4758 = vmatpush1.msra.mxu0 0.0
    %4759 = vmatprep.subr.mxu0 0.0
    %4760 = vmatpush1.msra.mxu0 0.0
    %4761 = vmatprep.subr.mxu0 0.0
    %4762 = vmatpush1.msra.mxu0 0.0
    %4763 = vmatprep.subr.mxu0 0.0
    %4764 = vmatpush1.msra.mxu0 0.0
    %4765 = vmatprep.subr.mxu0 0.0
    %4766 = vmatpush1.msra.mxu0 0.0
    %4767 = vmatprep.subr.mxu0 0.0
    %4768 = vmatpush1.msra.mxu0 0.0
    %4769 = vmatprep.subr.mxu0 0.0
    %4770 = vmatpush1.msra.mxu0 0.0
    %4771 = vmatprep.subr.mxu0 0.0
    %4772 = vmatpush1.msra.mxu0 0.0
    %4773 = vmatprep.subr.mxu0 0.0
    %4774 = vmatpush1.msra.mxu0 0.0
    %4775 = vmatprep.subr.mxu0 0.0
    %4776 = vmatpush1.msra.mxu0 0.0
    %4777 = vmatprep.subr.mxu0 0.0
    %4778 = vmatpush1.msra.mxu0 0.0
    %4779 = vmatprep.subr.mxu0 0.0
    %v4780 = vand.u32 %v98, 4294901760
    %v4781 = vsub.f32 %v98, %v4780
    %4782 = vmatpush1.msra.mxu0 %v4781
    %4783 = vmatprep.subr.mxu0 0.0
    %v4784 = vand.u32 %v97, 4294901760
    %v4785 = vsub.f32 %v97, %v4784
    %4786 = vmatpush1.msra.mxu0 %v4785
    %4787 = vmatprep.subr.mxu0 0.0
    %4788 = vmatpush2.msra.mxu0 0.0
    %4789 = vmatprep.subr.mxu0 0.0
    %4790 = vmatpush2.msra.mxu0 0.0
    %4791 = vmatprep.subr.mxu0 0.0
    %4792 = vmatpush2.msra.mxu0 0.0
    %4793 = vmatprep.subr.mxu0 0.0
    %4794 = vmatpush2.msra.mxu0 0.0
    %4795 = vmatprep.subr.mxu0 0.0
    %4796 = vmatpush2.msra.mxu0 0.0
    %4797 = vmatprep.subr.mxu0 0.0
    %4798 = vmatpush2.msra.mxu0 0.0
    %4799 = vmatprep.subr.mxu0 0.0
    %4800 = vmatpush2.msra.mxu0 0.0
    %4801 = vmatprep.subr.mxu0 0.0
    %4802 = vmatpush2.msra.mxu0 0.0
    %4803 = vmatprep.subr.mxu0 0.0
    %4804 = vmatpush2.msra.mxu0 0.0
    %4805 = vmatprep.subr.mxu0 0.0
    %4806 = vmatpush2.msra.mxu0 0.0
    %4807 = vmatprep.subr.mxu0 0.0
    %4808 = vmatpush2.msra.mxu0 0.0
    %4809 = vmatprep.subr.mxu0 0.0
    %4810 = vmatpush2.msra.mxu0 0.0
    %4811 = vmatprep.subr.mxu0 0.0
    %4812 = vmatpush2.msra.mxu0 0.0
    %4813 = vmatprep.subr.mxu0 0.0
    %4814 = vmatpush2.msra.mxu0 0.0
    %4815 = vmatprep.subr.mxu0 0.0
    %4816 = vmatpush2.msra.mxu0 0.0
    %4817 = vmatprep.subr.mxu0 0.0
    %4818 = vmatpush2.msra.mxu0 0.0
    %4819 = vmatprep.mubr.f32.mxu0 0.0
    %v4820 = vand.u32 %v4002, 4294901760
    %v4821 = vsub.f32 %v4002, %v4820
    %4822 = vmatmul.mubr.f32.gmra.mxu0 %v4821
    %v4823 = vpop.f32.mrf.mxu0
    %v4824 = vadd.f32 %v4562, %v4823
    %v4825 = vpop.f32.mrf.mxu0
    %4826 = vmatprep.mubr.f32.mxu0 0.0
    %v4827 = vand.u32 %v4005, 4294901760
    %v4828 = vsub.f32 %v4005, %v4827
    %4829 = vmatmul.mubr.f32.gmra.mxu0 %v4828
    %v4830 = vpop.f32.mrf.mxu0
    %v4831 = vadd.f32 %v4568, %v4830
    %v4832 = vpop.f32.mrf.mxu0
    %4833 = vmatprep.mubr.f32.mxu0 0.0
    %v4834 = vand.u32 %v4008, 4294901760
    %v4835 = vsub.f32 %v4008, %v4834
    %4836 = vmatmul.mubr.f32.gmra.mxu0 %v4835
    %v4837 = vpop.f32.mrf.mxu0
    %v4838 = vadd.f32 %v4574, %v4837
    %v4839 = vpop.f32.mrf.mxu0
    %4840 = vmatprep.mubr.f32.mxu0 0.0
    %v4841 = vand.u32 %v4011, 4294901760
    %v4842 = vsub.f32 %v4011, %v4841
    %4843 = vmatmul.mubr.f32.gmra.mxu0 %v4842
    %v4844 = vpop.f32.mrf.mxu0
    %v4845 = vadd.f32 %v4580, %v4844
    %v4846 = vpop.f32.mrf.mxu0
    %4847 = vmatprep.mubr.f32.mxu0 0.0
    %v4848 = vand.u32 %v4014, 4294901760
    %v4849 = vsub.f32 %v4014, %v4848
    %4850 = vmatmul.mubr.f32.gmra.mxu0 %v4849
    %v4851 = vpop.f32.mrf.mxu0
    %v4852 = vadd.f32 %v4586, %v4851
    %v4853 = vpop.f32.mrf.mxu0
    %4854 = vmatprep.mubr.f32.mxu0 0.0
    %v4855 = vand.u32 %v4017, 4294901760
    %v4856 = vsub.f32 %v4017, %v4855
    %4857 = vmatmul.mubr.f32.gmra.mxu0 %v4856
    %v4858 = vpop.f32.mrf.mxu0
    %v4859 = vadd.f32 %v4592, %v4858
    %v4860 = vpop.f32.mrf.mxu0
    %4861 = vmatprep.mubr.f32.mxu0 0.0
    %v4862 = vand.u32 %v4020, 4294901760
    %v4863 = vsub.f32 %v4020, %v4862
    %4864 = vmatmul.mubr.f32.gmra.mxu0 %v4863
    %v4865 = vpop.f32.mrf.mxu0
    %v4866 = vadd.f32 %v4598, %v4865
    %v4867 = vpop.f32.mrf.mxu0
    %4868 = vmatprep.mubr.f32.mxu0 0.0
    %v4869 = vand.u32 %v4023, 4294901760
    %v4870 = vsub.f32 %v4023, %v4869
    %4871 = vmatmul.mubr.f32.gmra.mxu0 %v4870
    %v4872 = vpop.f32.mrf.mxu0
    %v4873 = vadd.f32 %v4604, %v4872
    %v4874 = vpop.f32.mrf.mxu0
    %4875 = vmatprep.mubr.f32.mxu0 0.0
    %v4876 = vand.u32 %v4026, 4294901760
    %v4877 = vsub.f32 %v4026, %v4876
    %4878 = vmatmul.mubr.f32.gmra.mxu0 %v4877
    %v4879 = vpop.f32.mrf.mxu0
    %v4880 = vadd.f32 %v4610, %v4879
    %v4881 = vpop.f32.mrf.mxu0
    %4882 = vmatprep.mubr.f32.mxu0 0.0
    %v4883 = vand.u32 %v4029, 4294901760
    %v4884 = vsub.f32 %v4029, %v4883
    %4885 = vmatmul.mubr.f32.gmra.mxu0 %v4884
    %v4886 = vpop.f32.mrf.mxu0
    %v4887 = vadd.f32 %v4616, %v4886
    %v4888 = vpop.f32.mrf.mxu0
    %4889 = vmatprep.mubr.f32.mxu0 0.0
    %v4890 = vand.u32 %v4032, 4294901760
    %v4891 = vsub.f32 %v4032, %v4890
    %4892 = vmatmul.mubr.f32.gmra.mxu0 %v4891
    %v4893 = vpop.f32.mrf.mxu0
    %v4894 = vadd.f32 %v4622, %v4893
    %v4895 = vpop.f32.mrf.mxu0
    %4896 = vmatprep.mubr.f32.mxu0 0.0
    %v4897 = vand.u32 %v4035, 4294901760
    %v4898 = vsub.f32 %v4035, %v4897
    %4899 = vmatmul.mubr.f32.gmra.mxu0 %v4898
    %v4900 = vpop.f32.mrf.mxu0
    %v4901 = vadd.f32 %v4628, %v4900
    %v4902 = vpop.f32.mrf.mxu0
    %4903 = vmatprep.mubr.f32.mxu0 0.0
    %v4904 = vand.u32 %v4038, 4294901760
    %v4905 = vsub.f32 %v4038, %v4904
    %4906 = vmatmul.mubr.f32.gmra.mxu0 %v4905
    %v4907 = vpop.f32.mrf.mxu0
    %v4908 = vadd.f32 %v4634, %v4907
    %v4909 = vpop.f32.mrf.mxu0
    %4910 = vmatprep.mubr.f32.mxu0 0.0
    %v4911 = vand.u32 %v4041, 4294901760
    %v4912 = vsub.f32 %v4041, %v4911
    %4913 = vmatmul.mubr.f32.gmra.mxu0 %v4912
    %v4914 = vpop.f32.mrf.mxu0
    %v4915 = vadd.f32 %v4640, %v4914
    %v4916 = vpop.f32.mrf.mxu0
    %4917 = vmatprep.mubr.f32.mxu0 0.0
    %v4918 = vand.u32 %v4044, 4294901760
    %v4919 = vsub.f32 %v4044, %v4918
    %4920 = vmatmul.mubr.f32.gmra.mxu0 %v4919
    %v4921 = vpop.f32.mrf.mxu0
    %v4922 = vadd.f32 %v4646, %v4921
    %v4923 = vpop.f32.mrf.mxu0
    %4924 = vmatprep.mubr.f32.mxu0 0.0
    %v4925 = vand.u32 %v4047, 4294901760
    %v4926 = vsub.f32 %v4047, %v4925
    %4927 = vmatmul.mubr.f32.gmra.mxu0 %v4926
    %v4928 = vpop.f32.mrf.mxu0
    %v4929 = vadd.f32 %v4652, %v4928
    %v4930 = vpop.f32.mrf.mxu0
    %4931 = vmatprep.mubr.f32.mxu0 0.0
    %v4932 = vand.u32 %v4050, 4294901760
    %v4933 = vsub.f32 %v4050, %v4932
    %4934 = vmatmul.mubr.f32.gmra.mxu0 %v4933
    %v4935 = vpop.f32.mrf.mxu0
    %v4936 = vadd.f32 %v4658, %v4935
    %v4937 = vpop.f32.mrf.mxu0
    %4938 = vmatprep.mubr.f32.mxu0 0.0
    %v4939 = vand.u32 %v4053, 4294901760
    %v4940 = vsub.f32 %v4053, %v4939
    %4941 = vmatmul.mubr.f32.gmra.mxu0 %v4940
    %v4942 = vpop.f32.mrf.mxu0
    %v4943 = vadd.f32 %v4664, %v4942
    %v4944 = vpop.f32.mrf.mxu0
    %4945 = vmatprep.mubr.f32.mxu0 0.0
    %v4946 = vand.u32 %v4056, 4294901760
    %v4947 = vsub.f32 %v4056, %v4946
    %4948 = vmatmul.mubr.f32.gmra.mxu0 %v4947
    %v4949 = vpop.f32.mrf.mxu0
    %v4950 = vadd.f32 %v4670, %v4949
    %v4951 = vpop.f32.mrf.mxu0
    %4952 = vmatprep.mubr.f32.mxu0 0.0
    %v4953 = vand.u32 %v4059, 4294901760
    %v4954 = vsub.f32 %v4059, %v4953
    %4955 = vmatmul.mubr.f32.gmra.mxu0 %v4954
    %v4956 = vpop.f32.mrf.mxu0
    %v4957 = vadd.f32 %v4676, %v4956
    %v4958 = vpop.f32.mrf.mxu0
    %4959 = vmatprep.mubr.f32.mxu0 0.0
    %v4960 = vand.u32 %v4062, 4294901760
    %v4961 = vsub.f32 %v4062, %v4960
    %4962 = vmatmul.mubr.f32.gmra.mxu0 %v4961
    %v4963 = vpop.f32.mrf.mxu0
    %v4964 = vadd.f32 %v4682, %v4963
    %v4965 = vpop.f32.mrf.mxu0
    %4966 = vmatprep.mubr.f32.mxu0 0.0
    %v4967 = vand.u32 %v4065, 4294901760
    %v4968 = vsub.f32 %v4065, %v4967
    %4969 = vmatmul.mubr.f32.gmra.mxu0 %v4968
    %v4970 = vpop.f32.mrf.mxu0
    %v4971 = vadd.f32 %v4688, %v4970
    %v4972 = vpop.f32.mrf.mxu0
    %4973 = vmatprep.mubr.f32.mxu0 0.0
    %v4974 = vand.u32 %v4068, 4294901760
    %v4975 = vsub.f32 %v4068, %v4974
    %4976 = vmatmul.mubr.f32.gmra.mxu0 %v4975
    %v4977 = vpop.f32.mrf.mxu0
    %v4978 = vadd.f32 %v4694, %v4977
    %v4979 = vpop.f32.mrf.mxu0
    %4980 = vmatprep.mubr.f32.mxu0 0.0
    %v4981 = vand.u32 %v4071, 4294901760
    %v4982 = vsub.f32 %v4071, %v4981
    %4983 = vmatmul.mubr.f32.gmra.mxu0 %v4982
    %v4984 = vpop.f32.mrf.mxu0
    %v4985 = vadd.f32 %v4700, %v4984
    %v4986 = vpop.f32.mrf.mxu0
    %4987 = vmatprep.mubr.f32.mxu0 0.0
    %v4988 = vand.u32 %v4074, 4294901760
    %v4989 = vsub.f32 %v4074, %v4988
    %4990 = vmatmul.mubr.f32.gmra.mxu0 %v4989
    %v4991 = vpop.f32.mrf.mxu0
    %v4992 = vadd.f32 %v4706, %v4991
    %v4993 = vpop.f32.mrf.mxu0
    %4994 = vmatprep.mubr.f32.mxu0 0.0
    %v4995 = vand.u32 %v4077, 4294901760
    %v4996 = vsub.f32 %v4077, %v4995
    %4997 = vmatmul.mubr.f32.gmra.mxu0 %v4996
    %v4998 = vpop.f32.mrf.mxu0
    %v4999 = vadd.f32 %v4712, %v4998
    %v5000 = vpop.f32.mrf.mxu0
    %5001 = vmatprep.mubr.f32.mxu0 0.0
    %v5002 = vand.u32 %v4080, 4294901760
    %v5003 = vsub.f32 %v4080, %v5002
    %5004 = vmatmul.mubr.f32.gmra.mxu0 %v5003
    %v5005 = vpop.f32.mrf.mxu0
    %v5006 = vadd.f32 %v4718, %v5005
    %v5007 = vpop.f32.mrf.mxu0
    %5008 = vmatprep.mubr.f32.mxu0 0.0
    %v5009 = vand.u32 %v4083, 4294901760
    %v5010 = vsub.f32 %v4083, %v5009
    %5011 = vmatmul.mubr.f32.gmra.mxu0 %v5010
    %v5012 = vpop.f32.mrf.mxu0
    %v5013 = vadd.f32 %v4724, %v5012
    %v5014 = vpop.f32.mrf.mxu0
    %5015 = vmatprep.mubr.f32.mxu0 0.0
    %v5016 = vand.u32 %v4086, 4294901760
    %v5017 = vsub.f32 %v4086, %v5016
    %5018 = vmatmul.mubr.f32.gmra.mxu0 %v5017
    %v5019 = vpop.f32.mrf.mxu0
    %v5020 = vadd.f32 %v4730, %v5019
    %v5021 = vpop.f32.mrf.mxu0
    %5022 = vmatprep.mubr.f32.mxu0 0.0
    %v5023 = vand.u32 %v4089, 4294901760
    %v5024 = vsub.f32 %v4089, %v5023
    %5025 = vmatmul.mubr.f32.gmra.mxu0 %v5024
    %v5026 = vpop.f32.mrf.mxu0
    %v5027 = vadd.f32 %v4736, %v5026
    %v5028 = vpop.f32.mrf.mxu0
    %5029 = vmatprep.mubr.f32.mxu0 0.0
    %v5030 = vand.u32 %v4092, 4294901760
    %v5031 = vsub.f32 %v4092, %v5030
    %5032 = vmatmul.mubr.f32.gmra.mxu0 %v5031
    %v5033 = vpop.f32.mrf.mxu0
    %v5034 = vadd.f32 %v4742, %v5033
    %v5035 = vpop.f32.mrf.mxu0
    %5036 = vmatprep.mubr.f32.mxu0 0.0
    %v5037 = vand.u32 %v4095, 4294901760
    %v5038 = vsub.f32 %v4095, %v5037
    %5039 = vmatmul.mubr.f32.gmra.mxu0 %v5038
    %v5040 = vpop.f32.mrf.mxu0
    %v5041 = vadd.f32 %v4748, %v5040
    %v5042 = vpop.f32.mrf.mxu0
    %5043 = vdwg.mxu0
    %5044 = vmatprep.subr.mxu0 0.0
    %5045 = vmatpush1.msra.mxu0 0.0
    %5046 = vmatprep.subr.mxu0 0.0
    %5047 = vmatpush1.msra.mxu0 0.0
    %5048 = vmatprep.subr.mxu0 0.0
    %5049 = vmatpush1.msra.mxu0 0.0
    %5050 = vmatprep.subr.mxu0 0.0
    %5051 = vmatpush1.msra.mxu0 0.0
    %5052 = vmatprep.subr.mxu0 0.0
    %5053 = vmatpush1.msra.mxu0 0.0
    %5054 = vmatprep.subr.mxu0 0.0
    %5055 = vmatpush1.msra.mxu0 0.0
    %5056 = vmatprep.subr.mxu0 0.0
    %5057 = vmatpush1.msra.mxu0 0.0
    %5058 = vmatprep.subr.mxu0 0.0
    %5059 = vmatpush1.msra.mxu0 0.0
    %5060 = vmatprep.subr.mxu0 0.0
    %5061 = vmatpush1.msra.mxu0 0.0
    %5062 = vmatprep.subr.mxu0 0.0
    %5063 = vmatpush1.msra.mxu0 0.0
    %5064 = vmatprep.subr.mxu0 0.0
    %5065 = vmatpush1.msra.mxu0 0.0
    %5066 = vmatprep.subr.mxu0 0.0
    %5067 = vmatpush1.msra.mxu0 0.0
    %5068 = vmatprep.subr.mxu0 0.0
    %5069 = vmatpush1.msra.mxu0 0.0
    %5070 = vmatprep.subr.mxu0 0.0
    %5071 = vmatpush1.msra.mxu0 0.0
    %5072 = vmatprep.subr.mxu0 0.0
    %v5073 = vand.u32 %v98, 4294901760
    %5074 = vmatpush1.msra.mxu0 %v5073
    %5075 = vmatprep.subr.mxu0 0.0
    %v5076 = vand.u32 %v97, 4294901760
    %5077 = vmatpush1.msra.mxu0 %v5076
    %5078 = vmatprep.subr.mxu0 0.0
    %5079 = vmatpush2.msra.mxu0 0.0
    %5080 = vmatprep.subr.mxu0 0.0
    %5081 = vmatpush2.msra.mxu0 0.0
    %5082 = vmatprep.subr.mxu0 0.0
    %5083 = vmatpush2.msra.mxu0 0.0
    %5084 = vmatprep.subr.mxu0 0.0
    %5085 = vmatpush2.msra.mxu0 0.0
    %5086 = vmatprep.subr.mxu0 0.0
    %5087 = vmatpush2.msra.mxu0 0.0
    %5088 = vmatprep.subr.mxu0 0.0
    %5089 = vmatpush2.msra.mxu0 0.0
    %5090 = vmatprep.subr.mxu0 0.0
    %5091 = vmatpush2.msra.mxu0 0.0
    %5092 = vmatprep.subr.mxu0 0.0
    %5093 = vmatpush2.msra.mxu0 0.0
    %5094 = vmatprep.subr.mxu0 0.0
    %5095 = vmatpush2.msra.mxu0 0.0
    %5096 = vmatprep.subr.mxu0 0.0
    %5097 = vmatpush2.msra.mxu0 0.0
    %5098 = vmatprep.subr.mxu0 0.0
    %5099 = vmatpush2.msra.mxu0 0.0
    %5100 = vmatprep.subr.mxu0 0.0
    %5101 = vmatpush2.msra.mxu0 0.0
    %5102 = vmatprep.subr.mxu0 0.0
    %5103 = vmatpush2.msra.mxu0 0.0
    %5104 = vmatprep.subr.mxu0 0.0
    %5105 = vmatpush2.msra.mxu0 0.0
    %5106 = vmatprep.subr.mxu0 0.0
    %5107 = vmatpush2.msra.mxu0 0.0
    %5108 = vmatprep.subr.mxu0 0.0
    %5109 = vmatpush2.msra.mxu0 0.0
    %5110 = vmatprep.mubr.f32.mxu0 0.0
    %v5111 = vand.u32 %v4002, 4294901760
    %v5112 = vsub.f32 %v4002, %v5111
    %v5113 = vand.u32 %v5112, 4294901760
    %5114 = vmatmul.mubr.f32.gmra.mxu0 %v5113
    %v5115 = vpop.f32.mrf.mxu0
    %v5116 = vadd.f32 %v4824, %v5115
    %v5117 = vpop.f32.mrf.mxu0
    %5118 = vmatprep.mubr.f32.mxu0 0.0
    %v5119 = vand.u32 %v4005, 4294901760
    %v5120 = vsub.f32 %v4005, %v5119
    %v5121 = vand.u32 %v5120, 4294901760
    %5122 = vmatmul.mubr.f32.gmra.mxu0 %v5121
    %v5123 = vpop.f32.mrf.mxu0
    %v5124 = vadd.f32 %v4831, %v5123
    %v5125 = vpop.f32.mrf.mxu0
    %5126 = vmatprep.mubr.f32.mxu0 0.0
    %v5127 = vand.u32 %v4008, 4294901760
    %v5128 = vsub.f32 %v4008, %v5127
    %v5129 = vand.u32 %v5128, 4294901760
    %5130 = vmatmul.mubr.f32.gmra.mxu0 %v5129
    %v5131 = vpop.f32.mrf.mxu0
    %v5132 = vadd.f32 %v4838, %v5131
    %v5133 = vpop.f32.mrf.mxu0
    %5134 = vmatprep.mubr.f32.mxu0 0.0
    %v5135 = vand.u32 %v4011, 4294901760
    %v5136 = vsub.f32 %v4011, %v5135
    %v5137 = vand.u32 %v5136, 4294901760
    %5138 = vmatmul.mubr.f32.gmra.mxu0 %v5137
    %v5139 = vpop.f32.mrf.mxu0
    %v5140 = vadd.f32 %v4845, %v5139
    %v5141 = vpop.f32.mrf.mxu0
    %5142 = vmatprep.mubr.f32.mxu0 0.0
    %v5143 = vand.u32 %v4014, 4294901760
    %v5144 = vsub.f32 %v4014, %v5143
    %v5145 = vand.u32 %v5144, 4294901760
    %5146 = vmatmul.mubr.f32.gmra.mxu0 %v5145
    %v5147 = vpop.f32.mrf.mxu0
    %v5148 = vadd.f32 %v4852, %v5147
    %v5149 = vpop.f32.mrf.mxu0
    %5150 = vmatprep.mubr.f32.mxu0 0.0
    %v5151 = vand.u32 %v4017, 4294901760
    %v5152 = vsub.f32 %v4017, %v5151
    %v5153 = vand.u32 %v5152, 4294901760
    %5154 = vmatmul.mubr.f32.gmra.mxu0 %v5153
    %v5155 = vpop.f32.mrf.mxu0
    %v5156 = vadd.f32 %v4859, %v5155
    %v5157 = vpop.f32.mrf.mxu0
    %5158 = vmatprep.mubr.f32.mxu0 0.0
    %v5159 = vand.u32 %v4020, 4294901760
    %v5160 = vsub.f32 %v4020, %v5159
    %v5161 = vand.u32 %v5160, 4294901760
    %5162 = vmatmul.mubr.f32.gmra.mxu0 %v5161
    %v5163 = vpop.f32.mrf.mxu0
    %v5164 = vadd.f32 %v4866, %v5163
    %v5165 = vpop.f32.mrf.mxu0
    %5166 = vmatprep.mubr.f32.mxu0 0.0
    %v5167 = vand.u32 %v4023, 4294901760
    %v5168 = vsub.f32 %v4023, %v5167
    %v5169 = vand.u32 %v5168, 4294901760
    %5170 = vmatmul.mubr.f32.gmra.mxu0 %v5169
    %v5171 = vpop.f32.mrf.mxu0
    %v5172 = vadd.f32 %v4873, %v5171
    %v5173 = vpop.f32.mrf.mxu0
    %5174 = vmatprep.mubr.f32.mxu0 0.0
    %v5175 = vand.u32 %v4026, 4294901760
    %v5176 = vsub.f32 %v4026, %v5175
    %v5177 = vand.u32 %v5176, 4294901760
    %5178 = vmatmul.mubr.f32.gmra.mxu0 %v5177
    %v5179 = vpop.f32.mrf.mxu0
    %v5180 = vadd.f32 %v4880, %v5179
    %v5181 = vpop.f32.mrf.mxu0
    %5182 = vmatprep.mubr.f32.mxu0 0.0
    %v5183 = vand.u32 %v4029, 4294901760
    %v5184 = vsub.f32 %v4029, %v5183
    %v5185 = vand.u32 %v5184, 4294901760
    %5186 = vmatmul.mubr.f32.gmra.mxu0 %v5185
    %v5187 = vpop.f32.mrf.mxu0
    %v5188 = vadd.f32 %v4887, %v5187
    %v5189 = vpop.f32.mrf.mxu0
    %5190 = vmatprep.mubr.f32.mxu0 0.0
    %v5191 = vand.u32 %v4032, 4294901760
    %v5192 = vsub.f32 %v4032, %v5191
    %v5193 = vand.u32 %v5192, 4294901760
    %5194 = vmatmul.mubr.f32.gmra.mxu0 %v5193
    %v5195 = vpop.f32.mrf.mxu0
    %v5196 = vadd.f32 %v4894, %v5195
    %v5197 = vpop.f32.mrf.mxu0
    %5198 = vmatprep.mubr.f32.mxu0 0.0
    %v5199 = vand.u32 %v4035, 4294901760
    %v5200 = vsub.f32 %v4035, %v5199
    %v5201 = vand.u32 %v5200, 4294901760
    %5202 = vmatmul.mubr.f32.gmra.mxu0 %v5201
    %v5203 = vpop.f32.mrf.mxu0
    %v5204 = vadd.f32 %v4901, %v5203
    %v5205 = vpop.f32.mrf.mxu0
    %5206 = vmatprep.mubr.f32.mxu0 0.0
    %v5207 = vand.u32 %v4038, 4294901760
    %v5208 = vsub.f32 %v4038, %v5207
    %v5209 = vand.u32 %v5208, 4294901760
    %5210 = vmatmul.mubr.f32.gmra.mxu0 %v5209
    %v5211 = vpop.f32.mrf.mxu0
    %v5212 = vadd.f32 %v4908, %v5211
    %v5213 = vpop.f32.mrf.mxu0
    %5214 = vmatprep.mubr.f32.mxu0 0.0
    %v5215 = vand.u32 %v4041, 4294901760
    %v5216 = vsub.f32 %v4041, %v5215
    %v5217 = vand.u32 %v5216, 4294901760
    %5218 = vmatmul.mubr.f32.gmra.mxu0 %v5217
    %v5219 = vpop.f32.mrf.mxu0
    %v5220 = vadd.f32 %v4915, %v5219
    %v5221 = vpop.f32.mrf.mxu0
    %5222 = vmatprep.mubr.f32.mxu0 0.0
    %v5223 = vand.u32 %v4044, 4294901760
    %v5224 = vsub.f32 %v4044, %v5223
    %v5225 = vand.u32 %v5224, 4294901760
    %5226 = vmatmul.mubr.f32.gmra.mxu0 %v5225
    %v5227 = vpop.f32.mrf.mxu0
    %v5228 = vadd.f32 %v4922, %v5227
    %v5229 = vpop.f32.mrf.mxu0
    %5230 = vmatprep.mubr.f32.mxu0 0.0
    %v5231 = vand.u32 %v4047, 4294901760
    %v5232 = vsub.f32 %v4047, %v5231
    %v5233 = vand.u32 %v5232, 4294901760
    %5234 = vmatmul.mubr.f32.gmra.mxu0 %v5233
    %v5235 = vpop.f32.mrf.mxu0
    %v5236 = vadd.f32 %v4929, %v5235
    %v5237 = vpop.f32.mrf.mxu0
    %5238 = vmatprep.mubr.f32.mxu0 0.0
    %v5239 = vand.u32 %v4050, 4294901760
    %v5240 = vsub.f32 %v4050, %v5239
    %v5241 = vand.u32 %v5240, 4294901760
    %5242 = vmatmul.mubr.f32.gmra.mxu0 %v5241
    %v5243 = vpop.f32.mrf.mxu0
    %v5244 = vadd.f32 %v4936, %v5243
    %v5245 = vpop.f32.mrf.mxu0
    %5246 = vmatprep.mubr.f32.mxu0 0.0
    %v5247 = vand.u32 %v4053, 4294901760
    %v5248 = vsub.f32 %v4053, %v5247
    %v5249 = vand.u32 %v5248, 4294901760
    %5250 = vmatmul.mubr.f32.gmra.mxu0 %v5249
    %v5251 = vpop.f32.mrf.mxu0
    %v5252 = vadd.f32 %v4943, %v5251
    %v5253 = vpop.f32.mrf.mxu0
    %5254 = vmatprep.mubr.f32.mxu0 0.0
    %v5255 = vand.u32 %v4056, 4294901760
    %v5256 = vsub.f32 %v4056, %v5255
    %v5257 = vand.u32 %v5256, 4294901760
    %5258 = vmatmul.mubr.f32.gmra.mxu0 %v5257
    %v5259 = vpop.f32.mrf.mxu0
    %v5260 = vadd.f32 %v4950, %v5259
    %v5261 = vpop.f32.mrf.mxu0
    %5262 = vmatprep.mubr.f32.mxu0 0.0
    %v5263 = vand.u32 %v4059, 4294901760
    %v5264 = vsub.f32 %v4059, %v5263
    %v5265 = vand.u32 %v5264, 4294901760
    %5266 = vmatmul.mubr.f32.gmra.mxu0 %v5265
    %v5267 = vpop.f32.mrf.mxu0
    %v5268 = vadd.f32 %v4957, %v5267
    %v5269 = vpop.f32.mrf.mxu0
    %5270 = vmatprep.mubr.f32.mxu0 0.0
    %v5271 = vand.u32 %v4062, 4294901760
    %v5272 = vsub.f32 %v4062, %v5271
    %v5273 = vand.u32 %v5272, 4294901760
    %5274 = vmatmul.mubr.f32.gmra.mxu0 %v5273
    %v5275 = vpop.f32.mrf.mxu0
    %v5276 = vadd.f32 %v4964, %v5275
    %v5277 = vpop.f32.mrf.mxu0
    %5278 = vmatprep.mubr.f32.mxu0 0.0
    %v5279 = vand.u32 %v4065, 4294901760
    %v5280 = vsub.f32 %v4065, %v5279
    %v5281 = vand.u32 %v5280, 4294901760
    %5282 = vmatmul.mubr.f32.gmra.mxu0 %v5281
    %v5283 = vpop.f32.mrf.mxu0
    %v5284 = vadd.f32 %v4971, %v5283
    %v5285 = vpop.f32.mrf.mxu0
    %5286 = vmatprep.mubr.f32.mxu0 0.0
    %v5287 = vand.u32 %v4068, 4294901760
    %v5288 = vsub.f32 %v4068, %v5287
    %v5289 = vand.u32 %v5288, 4294901760
    %5290 = vmatmul.mubr.f32.gmra.mxu0 %v5289
    %v5291 = vpop.f32.mrf.mxu0
    %v5292 = vadd.f32 %v4978, %v5291
    %v5293 = vpop.f32.mrf.mxu0
    %5294 = vmatprep.mubr.f32.mxu0 0.0
    %v5295 = vand.u32 %v4071, 4294901760
    %v5296 = vsub.f32 %v4071, %v5295
    %v5297 = vand.u32 %v5296, 4294901760
    %5298 = vmatmul.mubr.f32.gmra.mxu0 %v5297
    %v5299 = vpop.f32.mrf.mxu0
    %v5300 = vadd.f32 %v4985, %v5299
    %v5301 = vpop.f32.mrf.mxu0
    %5302 = vmatprep.mubr.f32.mxu0 0.0
    %v5303 = vand.u32 %v4074, 4294901760
    %v5304 = vsub.f32 %v4074, %v5303
    %v5305 = vand.u32 %v5304, 4294901760
    %5306 = vmatmul.mubr.f32.gmra.mxu0 %v5305
    %v5307 = vpop.f32.mrf.mxu0
    %v5308 = vadd.f32 %v4992, %v5307
    %v5309 = vpop.f32.mrf.mxu0
    %5310 = vmatprep.mubr.f32.mxu0 0.0
    %v5311 = vand.u32 %v4077, 4294901760
    %v5312 = vsub.f32 %v4077, %v5311
    %v5313 = vand.u32 %v5312, 4294901760
    %5314 = vmatmul.mubr.f32.gmra.mxu0 %v5313
    %v5315 = vpop.f32.mrf.mxu0
    %v5316 = vadd.f32 %v4999, %v5315
    %v5317 = vpop.f32.mrf.mxu0
    %5318 = vmatprep.mubr.f32.mxu0 0.0
    %v5319 = vand.u32 %v4080, 4294901760
    %v5320 = vsub.f32 %v4080, %v5319
    %v5321 = vand.u32 %v5320, 4294901760
    %5322 = vmatmul.mubr.f32.gmra.mxu0 %v5321
    %v5323 = vpop.f32.mrf.mxu0
    %v5324 = vadd.f32 %v5006, %v5323
    %v5325 = vpop.f32.mrf.mxu0
    %5326 = vmatprep.mubr.f32.mxu0 0.0
    %v5327 = vand.u32 %v4083, 4294901760
    %v5328 = vsub.f32 %v4083, %v5327
    %v5329 = vand.u32 %v5328, 4294901760
    %5330 = vmatmul.mubr.f32.gmra.mxu0 %v5329
    %v5331 = vpop.f32.mrf.mxu0
    %v5332 = vadd.f32 %v5013, %v5331
    %v5333 = vpop.f32.mrf.mxu0
    %5334 = vmatprep.mubr.f32.mxu0 0.0
    %v5335 = vand.u32 %v4086, 4294901760
    %v5336 = vsub.f32 %v4086, %v5335
    %v5337 = vand.u32 %v5336, 4294901760
    %5338 = vmatmul.mubr.f32.gmra.mxu0 %v5337
    %v5339 = vpop.f32.mrf.mxu0
    %v5340 = vadd.f32 %v5020, %v5339
    %v5341 = vpop.f32.mrf.mxu0
    %5342 = vmatprep.mubr.f32.mxu0 0.0
    %v5343 = vand.u32 %v4089, 4294901760
    %v5344 = vsub.f32 %v4089, %v5343
    %v5345 = vand.u32 %v5344, 4294901760
    %5346 = vmatmul.mubr.f32.gmra.mxu0 %v5345
    %v5347 = vpop.f32.mrf.mxu0
    %v5348 = vadd.f32 %v5027, %v5347
    %v5349 = vpop.f32.mrf.mxu0
    %5350 = vmatprep.mubr.f32.mxu0 0.0
    %v5351 = vand.u32 %v4092, 4294901760
    %v5352 = vsub.f32 %v4092, %v5351
    %v5353 = vand.u32 %v5352, 4294901760
    %5354 = vmatmul.mubr.f32.gmra.mxu0 %v5353
    %v5355 = vpop.f32.mrf.mxu0
    %v5356 = vadd.f32 %v5034, %v5355
    %v5357 = vpop.f32.mrf.mxu0
    %5358 = vmatprep.mubr.f32.mxu0 0.0
    %v5359 = vand.u32 %v4095, 4294901760
    %v5360 = vsub.f32 %v4095, %v5359
    %v5361 = vand.u32 %v5360, 4294901760
    %5362 = vmatmul.mubr.f32.gmra.mxu0 %v5361
    %v5363 = vpop.f32.mrf.mxu0
    %v5364 = vadd.f32 %v5041, %v5363
    %v5365 = vpop.f32.mrf.mxu0
    %5366 = vdwg.mxu0
    %5367 = vmatprep.subr.mxu0 0.0
    %5368 = vmatpush1.msra.mxu0 0.0
    %5369 = vmatprep.subr.mxu0 0.0
    %5370 = vmatpush1.msra.mxu0 0.0
    %5371 = vmatprep.subr.mxu0 0.0
    %5372 = vmatpush1.msra.mxu0 0.0
    %5373 = vmatprep.subr.mxu0 0.0
    %5374 = vmatpush1.msra.mxu0 0.0
    %5375 = vmatprep.subr.mxu0 0.0
    %5376 = vmatpush1.msra.mxu0 0.0
    %5377 = vmatprep.subr.mxu0 0.0
    %5378 = vmatpush1.msra.mxu0 0.0
    %5379 = vmatprep.subr.mxu0 0.0
    %5380 = vmatpush1.msra.mxu0 0.0
    %5381 = vmatprep.subr.mxu0 0.0
    %5382 = vmatpush1.msra.mxu0 0.0
    %5383 = vmatprep.subr.mxu0 0.0
    %5384 = vmatpush1.msra.mxu0 0.0
    %5385 = vmatprep.subr.mxu0 0.0
    %5386 = vmatpush1.msra.mxu0 0.0
    %5387 = vmatprep.subr.mxu0 0.0
    %5388 = vmatpush1.msra.mxu0 0.0
    %5389 = vmatprep.subr.mxu0 0.0
    %5390 = vmatpush1.msra.mxu0 0.0
    %5391 = vmatprep.subr.mxu0 0.0
    %5392 = vmatpush1.msra.mxu0 0.0
    %5393 = vmatprep.subr.mxu0 0.0
    %5394 = vmatpush1.msra.mxu0 0.0
    %5395 = vmatprep.subr.mxu0 0.0
    %v5396 = vand.u32 %v98, 4294901760
    %v5397 = vsub.f32 %v98, %v5396
    %v5398 = vand.u32 %v5397, 4294901760
    %5399 = vmatpush1.msra.mxu0 %v5398
    %5400 = vmatprep.subr.mxu0 0.0
    %v5401 = vand.u32 %v97, 4294901760
    %v5402 = vsub.f32 %v97, %v5401
    %v5403 = vand.u32 %v5402, 4294901760
    %5404 = vmatpush1.msra.mxu0 %v5403
    %5405 = vmatprep.subr.mxu0 0.0
    %5406 = vmatpush2.msra.mxu0 0.0
    %5407 = vmatprep.subr.mxu0 0.0
    %5408 = vmatpush2.msra.mxu0 0.0
    %5409 = vmatprep.subr.mxu0 0.0
    %5410 = vmatpush2.msra.mxu0 0.0
    %5411 = vmatprep.subr.mxu0 0.0
    %5412 = vmatpush2.msra.mxu0 0.0
    %5413 = vmatprep.subr.mxu0 0.0
    %5414 = vmatpush2.msra.mxu0 0.0
    %5415 = vmatprep.subr.mxu0 0.0
    %5416 = vmatpush2.msra.mxu0 0.0
    %5417 = vmatprep.subr.mxu0 0.0
    %5418 = vmatpush2.msra.mxu0 0.0
    %5419 = vmatprep.subr.mxu0 0.0
    %5420 = vmatpush2.msra.mxu0 0.0
    %5421 = vmatprep.subr.mxu0 0.0
    %5422 = vmatpush2.msra.mxu0 0.0
    %5423 = vmatprep.subr.mxu0 0.0
    %5424 = vmatpush2.msra.mxu0 0.0
    %5425 = vmatprep.subr.mxu0 0.0
    %5426 = vmatpush2.msra.mxu0 0.0
    %5427 = vmatprep.subr.mxu0 0.0
    %5428 = vmatpush2.msra.mxu0 0.0
    %5429 = vmatprep.subr.mxu0 0.0
    %5430 = vmatpush2.msra.mxu0 0.0
    %5431 = vmatprep.subr.mxu0 0.0
    %5432 = vmatpush2.msra.mxu0 0.0
    %5433 = vmatprep.subr.mxu0 0.0
    %5434 = vmatpush2.msra.mxu0 0.0
    %5435 = vmatprep.subr.mxu0 0.0
    %5436 = vmatpush2.msra.mxu0 0.0
    %5437 = vmatprep.mubr.f32.mxu0 0.0
    %v5438 = vand.u32 %v4002, 4294901760
    %5439 = vmatmul.mubr.f32.gmra.mxu0 %v5438
    %v5440 = vpop.f32.mrf.mxu0
    %v5441 = vadd.f32 %v5116, %v5440
    %v5442 = vpop.f32.mrf.mxu0
    %5443 = vmatprep.mubr.f32.mxu0 0.0
    %v5444 = vand.u32 %v4005, 4294901760
    %5445 = vmatmul.mubr.f32.gmra.mxu0 %v5444
    %v5446 = vpop.f32.mrf.mxu0
    %v5447 = vadd.f32 %v5124, %v5446
    %v5448 = vpop.f32.mrf.mxu0
    %5449 = vmatprep.mubr.f32.mxu0 0.0
    %v5450 = vand.u32 %v4008, 4294901760
    %5451 = vmatmul.mubr.f32.gmra.mxu0 %v5450
    %v5452 = vpop.f32.mrf.mxu0
    %v5453 = vadd.f32 %v5132, %v5452
    %v5454 = vpop.f32.mrf.mxu0
    %5455 = vmatprep.mubr.f32.mxu0 0.0
    %v5456 = vand.u32 %v4011, 4294901760
    %5457 = vmatmul.mubr.f32.gmra.mxu0 %v5456
    %v5458 = vpop.f32.mrf.mxu0
    %v5459 = vadd.f32 %v5140, %v5458
    %v5460 = vpop.f32.mrf.mxu0
    %5461 = vmatprep.mubr.f32.mxu0 0.0
    %v5462 = vand.u32 %v4014, 4294901760
    %5463 = vmatmul.mubr.f32.gmra.mxu0 %v5462
    %v5464 = vpop.f32.mrf.mxu0
    %v5465 = vadd.f32 %v5148, %v5464
    %v5466 = vpop.f32.mrf.mxu0
    %5467 = vmatprep.mubr.f32.mxu0 0.0
    %v5468 = vand.u32 %v4017, 4294901760
    %5469 = vmatmul.mubr.f32.gmra.mxu0 %v5468
    %v5470 = vpop.f32.mrf.mxu0
    %v5471 = vadd.f32 %v5156, %v5470
    %v5472 = vpop.f32.mrf.mxu0
    %5473 = vmatprep.mubr.f32.mxu0 0.0
    %v5474 = vand.u32 %v4020, 4294901760
    %5475 = vmatmul.mubr.f32.gmra.mxu0 %v5474
    %v5476 = vpop.f32.mrf.mxu0
    %v5477 = vadd.f32 %v5164, %v5476
    %v5478 = vpop.f32.mrf.mxu0
    %5479 = vmatprep.mubr.f32.mxu0 0.0
    %v5480 = vand.u32 %v4023, 4294901760
    %5481 = vmatmul.mubr.f32.gmra.mxu0 %v5480
    %v5482 = vpop.f32.mrf.mxu0
    %v5483 = vadd.f32 %v5172, %v5482
    %v5484 = vpop.f32.mrf.mxu0
    %5485 = vmatprep.mubr.f32.mxu0 0.0
    %v5486 = vand.u32 %v4026, 4294901760
    %5487 = vmatmul.mubr.f32.gmra.mxu0 %v5486
    %v5488 = vpop.f32.mrf.mxu0
    %v5489 = vadd.f32 %v5180, %v5488
    %v5490 = vpop.f32.mrf.mxu0
    %5491 = vmatprep.mubr.f32.mxu0 0.0
    %v5492 = vand.u32 %v4029, 4294901760
    %5493 = vmatmul.mubr.f32.gmra.mxu0 %v5492
    %v5494 = vpop.f32.mrf.mxu0
    %v5495 = vadd.f32 %v5188, %v5494
    %v5496 = vpop.f32.mrf.mxu0
    %5497 = vmatprep.mubr.f32.mxu0 0.0
    %v5498 = vand.u32 %v4032, 4294901760
    %5499 = vmatmul.mubr.f32.gmra.mxu0 %v5498
    %v5500 = vpop.f32.mrf.mxu0
    %v5501 = vadd.f32 %v5196, %v5500
    %v5502 = vpop.f32.mrf.mxu0
    %5503 = vmatprep.mubr.f32.mxu0 0.0
    %v5504 = vand.u32 %v4035, 4294901760
    %5505 = vmatmul.mubr.f32.gmra.mxu0 %v5504
    %v5506 = vpop.f32.mrf.mxu0
    %v5507 = vadd.f32 %v5204, %v5506
    %v5508 = vpop.f32.mrf.mxu0
    %5509 = vmatprep.mubr.f32.mxu0 0.0
    %v5510 = vand.u32 %v4038, 4294901760
    %5511 = vmatmul.mubr.f32.gmra.mxu0 %v5510
    %v5512 = vpop.f32.mrf.mxu0
    %v5513 = vadd.f32 %v5212, %v5512
    %v5514 = vpop.f32.mrf.mxu0
    %5515 = vmatprep.mubr.f32.mxu0 0.0
    %v5516 = vand.u32 %v4041, 4294901760
    %5517 = vmatmul.mubr.f32.gmra.mxu0 %v5516
    %v5518 = vpop.f32.mrf.mxu0
    %v5519 = vadd.f32 %v5220, %v5518
    %v5520 = vpop.f32.mrf.mxu0
    %5521 = vmatprep.mubr.f32.mxu0 0.0
    %v5522 = vand.u32 %v4044, 4294901760
    %5523 = vmatmul.mubr.f32.gmra.mxu0 %v5522
    %v5524 = vpop.f32.mrf.mxu0
    %v5525 = vadd.f32 %v5228, %v5524
    %v5526 = vpop.f32.mrf.mxu0
    %5527 = vmatprep.mubr.f32.mxu0 0.0
    %v5528 = vand.u32 %v4047, 4294901760
    %5529 = vmatmul.mubr.f32.gmra.mxu0 %v5528
    %v5530 = vpop.f32.mrf.mxu0
    %v5531 = vadd.f32 %v5236, %v5530
    %v5532 = vpop.f32.mrf.mxu0
    %5533 = vmatprep.mubr.f32.mxu0 0.0
    %v5534 = vand.u32 %v4050, 4294901760
    %5535 = vmatmul.mubr.f32.gmra.mxu0 %v5534
    %v5536 = vpop.f32.mrf.mxu0
    %v5537 = vadd.f32 %v5244, %v5536
    %v5538 = vpop.f32.mrf.mxu0
    %5539 = vmatprep.mubr.f32.mxu0 0.0
    %v5540 = vand.u32 %v4053, 4294901760
    %5541 = vmatmul.mubr.f32.gmra.mxu0 %v5540
    %v5542 = vpop.f32.mrf.mxu0
    %v5543 = vadd.f32 %v5252, %v5542
    %v5544 = vpop.f32.mrf.mxu0
    %5545 = vmatprep.mubr.f32.mxu0 0.0
    %v5546 = vand.u32 %v4056, 4294901760
    %5547 = vmatmul.mubr.f32.gmra.mxu0 %v5546
    %v5548 = vpop.f32.mrf.mxu0
    %v5549 = vadd.f32 %v5260, %v5548
    %v5550 = vpop.f32.mrf.mxu0
    %5551 = vmatprep.mubr.f32.mxu0 0.0
    %v5552 = vand.u32 %v4059, 4294901760
    %5553 = vmatmul.mubr.f32.gmra.mxu0 %v5552
    %v5554 = vpop.f32.mrf.mxu0
    %v5555 = vadd.f32 %v5268, %v5554
    %v5556 = vpop.f32.mrf.mxu0
    %5557 = vmatprep.mubr.f32.mxu0 0.0
    %v5558 = vand.u32 %v4062, 4294901760
    %5559 = vmatmul.mubr.f32.gmra.mxu0 %v5558
    %v5560 = vpop.f32.mrf.mxu0
    %v5561 = vadd.f32 %v5276, %v5560
    %v5562 = vpop.f32.mrf.mxu0
    %5563 = vmatprep.mubr.f32.mxu0 0.0
    %v5564 = vand.u32 %v4065, 4294901760
    %5565 = vmatmul.mubr.f32.gmra.mxu0 %v5564
    %v5566 = vpop.f32.mrf.mxu0
    %v5567 = vadd.f32 %v5284, %v5566
    %v5568 = vpop.f32.mrf.mxu0
    %5569 = vmatprep.mubr.f32.mxu0 0.0
    %v5570 = vand.u32 %v4068, 4294901760
    %5571 = vmatmul.mubr.f32.gmra.mxu0 %v5570
    %v5572 = vpop.f32.mrf.mxu0
    %v5573 = vadd.f32 %v5292, %v5572
    %v5574 = vpop.f32.mrf.mxu0
    %5575 = vmatprep.mubr.f32.mxu0 0.0
    %v5576 = vand.u32 %v4071, 4294901760
    %5577 = vmatmul.mubr.f32.gmra.mxu0 %v5576
    %v5578 = vpop.f32.mrf.mxu0
    %v5579 = vadd.f32 %v5300, %v5578
    %v5580 = vpop.f32.mrf.mxu0
    %5581 = vmatprep.mubr.f32.mxu0 0.0
    %v5582 = vand.u32 %v4074, 4294901760
    %5583 = vmatmul.mubr.f32.gmra.mxu0 %v5582
    %v5584 = vpop.f32.mrf.mxu0
    %v5585 = vadd.f32 %v5308, %v5584
    %v5586 = vpop.f32.mrf.mxu0
    %5587 = vmatprep.mubr.f32.mxu0 0.0
    %v5588 = vand.u32 %v4077, 4294901760
    %5589 = vmatmul.mubr.f32.gmra.mxu0 %v5588
    %v5590 = vpop.f32.mrf.mxu0
    %v5591 = vadd.f32 %v5316, %v5590
    %v5592 = vpop.f32.mrf.mxu0
    %5593 = vmatprep.mubr.f32.mxu0 0.0
    %v5594 = vand.u32 %v4080, 4294901760
    %5595 = vmatmul.mubr.f32.gmra.mxu0 %v5594
    %v5596 = vpop.f32.mrf.mxu0
    %v5597 = vadd.f32 %v5324, %v5596
    %v5598 = vpop.f32.mrf.mxu0
    %5599 = vmatprep.mubr.f32.mxu0 0.0
    %v5600 = vand.u32 %v4083, 4294901760
    %5601 = vmatmul.mubr.f32.gmra.mxu0 %v5600
    %v5602 = vpop.f32.mrf.mxu0
    %v5603 = vadd.f32 %v5332, %v5602
    %v5604 = vpop.f32.mrf.mxu0
    %5605 = vmatprep.mubr.f32.mxu0 0.0
    %v5606 = vand.u32 %v4086, 4294901760
    %5607 = vmatmul.mubr.f32.gmra.mxu0 %v5606
    %v5608 = vpop.f32.mrf.mxu0
    %v5609 = vadd.f32 %v5340, %v5608
    %v5610 = vpop.f32.mrf.mxu0
    %5611 = vmatprep.mubr.f32.mxu0 0.0
    %v5612 = vand.u32 %v4089, 4294901760
    %5613 = vmatmul.mubr.f32.gmra.mxu0 %v5612
    %v5614 = vpop.f32.mrf.mxu0
    %v5615 = vadd.f32 %v5348, %v5614
    %v5616 = vpop.f32.mrf.mxu0
    %5617 = vmatprep.mubr.f32.mxu0 0.0
    %v5618 = vand.u32 %v4092, 4294901760
    %5619 = vmatmul.mubr.f32.gmra.mxu0 %v5618
    %v5620 = vpop.f32.mrf.mxu0
    %v5621 = vadd.f32 %v5356, %v5620
    %v5622 = vpop.f32.mrf.mxu0
    %5623 = vmatprep.mubr.f32.mxu0 0.0
    %v5624 = vand.u32 %v4095, 4294901760
    %5625 = vmatmul.mubr.f32.gmra.mxu0 %v5624
    %v5626 = vpop.f32.mrf.mxu0
    %v5627 = vadd.f32 %v5364, %v5626
    %v5628 = vpop.f32.mrf.mxu0
    %5629 = vdwg.mxu0
    %5630 = vmatprep.subr.mxu0 0.0
    %5631 = vmatpush1.msra.mxu0 0.0
    %5632 = vmatprep.subr.mxu0 0.0
    %5633 = vmatpush1.msra.mxu0 0.0
    %5634 = vmatprep.subr.mxu0 0.0
    %5635 = vmatpush1.msra.mxu0 0.0
    %5636 = vmatprep.subr.mxu0 0.0
    %5637 = vmatpush1.msra.mxu0 0.0
    %5638 = vmatprep.subr.mxu0 0.0
    %5639 = vmatpush1.msra.mxu0 0.0
    %5640 = vmatprep.subr.mxu0 0.0
    %5641 = vmatpush1.msra.mxu0 0.0
    %5642 = vmatprep.subr.mxu0 0.0
    %5643 = vmatpush1.msra.mxu0 0.0
    %5644 = vmatprep.subr.mxu0 0.0
    %5645 = vmatpush1.msra.mxu0 0.0
    %5646 = vmatprep.subr.mxu0 0.0
    %5647 = vmatpush1.msra.mxu0 0.0
    %5648 = vmatprep.subr.mxu0 0.0
    %5649 = vmatpush1.msra.mxu0 0.0
    %5650 = vmatprep.subr.mxu0 0.0
    %5651 = vmatpush1.msra.mxu0 0.0
    %5652 = vmatprep.subr.mxu0 0.0
    %5653 = vmatpush1.msra.mxu0 0.0
    %5654 = vmatprep.subr.mxu0 0.0
    %5655 = vmatpush1.msra.mxu0 0.0
    %5656 = vmatprep.subr.mxu0 0.0
    %5657 = vmatpush1.msra.mxu0 0.0
    %5658 = vmatprep.subr.mxu0 0.0
    %v5659 = vand.u32 %v98, 4294901760
    %5660 = vmatpush1.msra.mxu0 %v5659
    %5661 = vmatprep.subr.mxu0 0.0
    %v5662 = vand.u32 %v97, 4294901760
    %5663 = vmatpush1.msra.mxu0 %v5662
    %5664 = vmatprep.subr.mxu0 0.0
    %5665 = vmatpush2.msra.mxu0 0.0
    %5666 = vmatprep.subr.mxu0 0.0
    %5667 = vmatpush2.msra.mxu0 0.0
    %5668 = vmatprep.subr.mxu0 0.0
    %5669 = vmatpush2.msra.mxu0 0.0
    %5670 = vmatprep.subr.mxu0 0.0
    %5671 = vmatpush2.msra.mxu0 0.0
    %5672 = vmatprep.subr.mxu0 0.0
    %5673 = vmatpush2.msra.mxu0 0.0
    %5674 = vmatprep.subr.mxu0 0.0
    %5675 = vmatpush2.msra.mxu0 0.0
    %5676 = vmatprep.subr.mxu0 0.0
    %5677 = vmatpush2.msra.mxu0 0.0
    %5678 = vmatprep.subr.mxu0 0.0
    %5679 = vmatpush2.msra.mxu0 0.0
    %5680 = vmatprep.subr.mxu0 0.0
    %5681 = vmatpush2.msra.mxu0 0.0
    %5682 = vmatprep.subr.mxu0 0.0
    %5683 = vmatpush2.msra.mxu0 0.0
    %5684 = vmatprep.subr.mxu0 0.0
    %5685 = vmatpush2.msra.mxu0 0.0
    %5686 = vmatprep.subr.mxu0 0.0
    %5687 = vmatpush2.msra.mxu0 0.0
    %5688 = vmatprep.subr.mxu0 0.0
    %5689 = vmatpush2.msra.mxu0 0.0
    %5690 = vmatprep.subr.mxu0 0.0
    %5691 = vmatpush2.msra.mxu0 0.0
    %5692 = vmatprep.subr.mxu0 0.0
    %5693 = vmatpush2.msra.mxu0 0.0
    %5694 = vmatprep.subr.mxu0 0.0
    %5695 = vmatpush2.msra.mxu0 0.0
    %5696 = vmatprep.mubr.f32.mxu0 0.0
    %v5697 = vand.u32 %v4002, 4294901760
    %5698 = vmatmul.mubr.f32.gmra.mxu0 %v5697
    %v5699 = vpop.f32.mrf.mxu0
    %v5700 = vadd.f32 %v5441, %v5699
    %v5701 = vpop.f32.mrf.mxu0
    %5702 = vmatprep.mubr.f32.mxu0 0.0
    %v5703 = vand.u32 %v4005, 4294901760
    %5704 = vmatmul.mubr.f32.gmra.mxu0 %v5703
    %v5705 = vpop.f32.mrf.mxu0
    %v5706 = vadd.f32 %v5447, %v5705
    %v5707 = vpop.f32.mrf.mxu0
    %5708 = vmatprep.mubr.f32.mxu0 0.0
    %v5709 = vand.u32 %v4008, 4294901760
    %5710 = vmatmul.mubr.f32.gmra.mxu0 %v5709
    %v5711 = vpop.f32.mrf.mxu0
    %v5712 = vadd.f32 %v5453, %v5711
    %v5713 = vpop.f32.mrf.mxu0
    %5714 = vmatprep.mubr.f32.mxu0 0.0
    %v5715 = vand.u32 %v4011, 4294901760
    %5716 = vmatmul.mubr.f32.gmra.mxu0 %v5715
    %v5717 = vpop.f32.mrf.mxu0
    %v5718 = vadd.f32 %v5459, %v5717
    %v5719 = vpop.f32.mrf.mxu0
    %5720 = vmatprep.mubr.f32.mxu0 0.0
    %v5721 = vand.u32 %v4014, 4294901760
    %5722 = vmatmul.mubr.f32.gmra.mxu0 %v5721
    %v5723 = vpop.f32.mrf.mxu0
    %v5724 = vadd.f32 %v5465, %v5723
    %v5725 = vpop.f32.mrf.mxu0
    %5726 = vmatprep.mubr.f32.mxu0 0.0
    %v5727 = vand.u32 %v4017, 4294901760
    %5728 = vmatmul.mubr.f32.gmra.mxu0 %v5727
    %v5729 = vpop.f32.mrf.mxu0
    %v5730 = vadd.f32 %v5471, %v5729
    %v5731 = vpop.f32.mrf.mxu0
    %5732 = vmatprep.mubr.f32.mxu0 0.0
    %v5733 = vand.u32 %v4020, 4294901760
    %5734 = vmatmul.mubr.f32.gmra.mxu0 %v5733
    %v5735 = vpop.f32.mrf.mxu0
    %v5736 = vadd.f32 %v5477, %v5735
    %v5737 = vpop.f32.mrf.mxu0
    %5738 = vmatprep.mubr.f32.mxu0 0.0
    %v5739 = vand.u32 %v4023, 4294901760
    %5740 = vmatmul.mubr.f32.gmra.mxu0 %v5739
    %v5741 = vpop.f32.mrf.mxu0
    %v5742 = vadd.f32 %v5483, %v5741
    %v5743 = vpop.f32.mrf.mxu0
    %5744 = vmatprep.mubr.f32.mxu0 0.0
    %v5745 = vand.u32 %v4026, 4294901760
    %5746 = vmatmul.mubr.f32.gmra.mxu0 %v5745
    %v5747 = vpop.f32.mrf.mxu0
    %v5748 = vadd.f32 %v5489, %v5747
    %v5749 = vpop.f32.mrf.mxu0
    %5750 = vmatprep.mubr.f32.mxu0 0.0
    %v5751 = vand.u32 %v4029, 4294901760
    %5752 = vmatmul.mubr.f32.gmra.mxu0 %v5751
    %v5753 = vpop.f32.mrf.mxu0
    %v5754 = vadd.f32 %v5495, %v5753
    %v5755 = vpop.f32.mrf.mxu0
    %5756 = vmatprep.mubr.f32.mxu0 0.0
    %v5757 = vand.u32 %v4032, 4294901760
    %5758 = vmatmul.mubr.f32.gmra.mxu0 %v5757
    %v5759 = vpop.f32.mrf.mxu0
    %v5760 = vadd.f32 %v5501, %v5759
    %v5761 = vpop.f32.mrf.mxu0
    %5762 = vmatprep.mubr.f32.mxu0 0.0
    %v5763 = vand.u32 %v4035, 4294901760
    %5764 = vmatmul.mubr.f32.gmra.mxu0 %v5763
    %v5765 = vpop.f32.mrf.mxu0
    %v5766 = vadd.f32 %v5507, %v5765
    %v5767 = vpop.f32.mrf.mxu0
    %5768 = vmatprep.mubr.f32.mxu0 0.0
    %v5769 = vand.u32 %v4038, 4294901760
    %5770 = vmatmul.mubr.f32.gmra.mxu0 %v5769
    %v5771 = vpop.f32.mrf.mxu0
    %v5772 = vadd.f32 %v5513, %v5771
    %v5773 = vpop.f32.mrf.mxu0
    %5774 = vmatprep.mubr.f32.mxu0 0.0
    %v5775 = vand.u32 %v4041, 4294901760
    %5776 = vmatmul.mubr.f32.gmra.mxu0 %v5775
    %v5777 = vpop.f32.mrf.mxu0
    %v5778 = vadd.f32 %v5519, %v5777
    %v5779 = vpop.f32.mrf.mxu0
    %5780 = vmatprep.mubr.f32.mxu0 0.0
    %v5781 = vand.u32 %v4044, 4294901760
    %5782 = vmatmul.mubr.f32.gmra.mxu0 %v5781
    %v5783 = vpop.f32.mrf.mxu0
    %v5784 = vadd.f32 %v5525, %v5783
    %v5785 = vpop.f32.mrf.mxu0
    %5786 = vmatprep.mubr.f32.mxu0 0.0
    %v5787 = vand.u32 %v4047, 4294901760
    %5788 = vmatmul.mubr.f32.gmra.mxu0 %v5787
    %v5789 = vpop.f32.mrf.mxu0
    %v5790 = vadd.f32 %v5531, %v5789
    %v5791 = vpop.f32.mrf.mxu0
    %5792 = vmatprep.mubr.f32.mxu0 0.0
    %v5793 = vand.u32 %v4050, 4294901760
    %5794 = vmatmul.mubr.f32.gmra.mxu0 %v5793
    %v5795 = vpop.f32.mrf.mxu0
    %v5796 = vadd.f32 %v5537, %v5795
    %v5797 = vpop.f32.mrf.mxu0
    %5798 = vmatprep.mubr.f32.mxu0 0.0
    %v5799 = vand.u32 %v4053, 4294901760
    %5800 = vmatmul.mubr.f32.gmra.mxu0 %v5799
    %v5801 = vpop.f32.mrf.mxu0
    %v5802 = vadd.f32 %v5543, %v5801
    %v5803 = vpop.f32.mrf.mxu0
    %5804 = vmatprep.mubr.f32.mxu0 0.0
    %v5805 = vand.u32 %v4056, 4294901760
    %5806 = vmatmul.mubr.f32.gmra.mxu0 %v5805
    %v5807 = vpop.f32.mrf.mxu0
    %v5808 = vadd.f32 %v5549, %v5807
    %v5809 = vpop.f32.mrf.mxu0
    %5810 = vmatprep.mubr.f32.mxu0 0.0
    %v5811 = vand.u32 %v4059, 4294901760
    %5812 = vmatmul.mubr.f32.gmra.mxu0 %v5811
    %v5813 = vpop.f32.mrf.mxu0
    %v5814 = vadd.f32 %v5555, %v5813
    %v5815 = vpop.f32.mrf.mxu0
    %5816 = vmatprep.mubr.f32.mxu0 0.0
    %v5817 = vand.u32 %v4062, 4294901760
    %5818 = vmatmul.mubr.f32.gmra.mxu0 %v5817
    %v5819 = vpop.f32.mrf.mxu0
    %v5820 = vadd.f32 %v5561, %v5819
    %v5821 = vpop.f32.mrf.mxu0
    %5822 = vmatprep.mubr.f32.mxu0 0.0
    %v5823 = vand.u32 %v4065, 4294901760
    %5824 = vmatmul.mubr.f32.gmra.mxu0 %v5823
    %v5825 = vpop.f32.mrf.mxu0
    %v5826 = vadd.f32 %v5567, %v5825
    %v5827 = vpop.f32.mrf.mxu0
    %5828 = vmatprep.mubr.f32.mxu0 0.0
    %v5829 = vand.u32 %v4068, 4294901760
    %5830 = vmatmul.mubr.f32.gmra.mxu0 %v5829
    %v5831 = vpop.f32.mrf.mxu0
    %v5832 = vadd.f32 %v5573, %v5831
    %v5833 = vpop.f32.mrf.mxu0
    %5834 = vmatprep.mubr.f32.mxu0 0.0
    %v5835 = vand.u32 %v4071, 4294901760
    %5836 = vmatmul.mubr.f32.gmra.mxu0 %v5835
    %v5837 = vpop.f32.mrf.mxu0
    %v5838 = vadd.f32 %v5579, %v5837
    %v5839 = vpop.f32.mrf.mxu0
    %5840 = vmatprep.mubr.f32.mxu0 0.0
    %v5841 = vand.u32 %v4074, 4294901760
    %5842 = vmatmul.mubr.f32.gmra.mxu0 %v5841
    %v5843 = vpop.f32.mrf.mxu0
    %v5844 = vadd.f32 %v5585, %v5843
    %v5845 = vpop.f32.mrf.mxu0
    %5846 = vmatprep.mubr.f32.mxu0 0.0
    %v5847 = vand.u32 %v4077, 4294901760
    %5848 = vmatmul.mubr.f32.gmra.mxu0 %v5847
    %v5849 = vpop.f32.mrf.mxu0
    %v5850 = vadd.f32 %v5591, %v5849
    %v5851 = vpop.f32.mrf.mxu0
    %5852 = vmatprep.mubr.f32.mxu0 0.0
    %v5853 = vand.u32 %v4080, 4294901760
    %5854 = vmatmul.mubr.f32.gmra.mxu0 %v5853
    %v5855 = vpop.f32.mrf.mxu0
    %v5856 = vadd.f32 %v5597, %v5855
    %v5857 = vpop.f32.mrf.mxu0
    %5858 = vmatprep.mubr.f32.mxu0 0.0
    %v5859 = vand.u32 %v4083, 4294901760
    %5860 = vmatmul.mubr.f32.gmra.mxu0 %v5859
    %v5861 = vpop.f32.mrf.mxu0
    %v5862 = vadd.f32 %v5603, %v5861
    %v5863 = vpop.f32.mrf.mxu0
    %5864 = vmatprep.mubr.f32.mxu0 0.0
    %v5865 = vand.u32 %v4086, 4294901760
    %5866 = vmatmul.mubr.f32.gmra.mxu0 %v5865
    %v5867 = vpop.f32.mrf.mxu0
    %v5868 = vadd.f32 %v5609, %v5867
    %v5869 = vpop.f32.mrf.mxu0
    %5870 = vmatprep.mubr.f32.mxu0 0.0
    %v5871 = vand.u32 %v4089, 4294901760
    %5872 = vmatmul.mubr.f32.gmra.mxu0 %v5871
    %v5873 = vpop.f32.mrf.mxu0
    %v5874 = vadd.f32 %v5615, %v5873
    %v5875 = vpop.f32.mrf.mxu0
    %5876 = vmatprep.mubr.f32.mxu0 0.0
    %v5877 = vand.u32 %v4092, 4294901760
    %5878 = vmatmul.mubr.f32.gmra.mxu0 %v5877
    %v5879 = vpop.f32.mrf.mxu0
    %v5880 = vadd.f32 %v5621, %v5879
    %v5881 = vpop.f32.mrf.mxu0
    %5882 = vmatprep.mubr.f32.mxu0 0.0
    %v5883 = vand.u32 %v4095, 4294901760
    %5884 = vmatmul.mubr.f32.gmra.mxu0 %v5883
    %v5885 = vpop.f32.mrf.mxu0
    %v5886 = vadd.f32 %v5627, %v5885
    %v5887 = vpop.f32.mrf.mxu0
    %5888 = vdwg.mxu0
    %v5889 = vmul.f32 %v1941, %v5700
    %v5890 = vmul.f32 %v1947, %v5706
    %v5891 = vmul.f32 %v1953, %v5712
    %v5892 = vmul.f32 %v1959, %v5718
    %v5893 = vmul.f32 %v1965, %v5724
    %v5894 = vmul.f32 %v1971, %v5730
    %v5895 = vmul.f32 %v1977, %v5736
    %v5896 = vmul.f32 %v1983, %v5742
    %v5897 = vmul.f32 %v1989, %v5748
    %v5898 = vmul.f32 %v1995, %v5754
    %v5899 = vmul.f32 %v2001, %v5760
    %v5900 = vmul.f32 %v2007, %v5766
    %v5901 = vmul.f32 %v2013, %v5772
    %v5902 = vmul.f32 %v2019, %v5778
    %v5903 = vmul.f32 %v2025, %v5784
    %v5904 = vmul.f32 %v2031, %v5790
    %v5905 = vmul.f32 %v2037, %v5796
    %v5906 = vmul.f32 %v2043, %v5802
    %v5907 = vmul.f32 %v2049, %v5808
    %v5908 = vmul.f32 %v2055, %v5814
    %v5909 = vmul.f32 %v2061, %v5820
    %v5910 = vmul.f32 %v2067, %v5826
    %v5911 = vmul.f32 %v2073, %v5832
    %v5912 = vmul.f32 %v2079, %v5838
    %v5913 = vmul.f32 %v2085, %v5844
    %v5914 = vmul.f32 %v2091, %v5850
    %v5915 = vmul.f32 %v2097, %v5856
    %v5916 = vmul.f32 %v2103, %v5862
    %v5917 = vmul.f32 %v2109, %v5868
    %v5918 = vmul.f32 %v2115, %v5874
    %v5919 = vmul.f32 %v2121, %v5880
    %v5920 = vmul.f32 %v2127, %v5886
    %v5921 = vadd.f32 %v5889, %v5905
    %v5922 = vadd.f32 %v5890, %v5906
    %v5923 = vadd.f32 %v5891, %v5907
    %v5924 = vadd.f32 %v5892, %v5908
    %v5925 = vadd.f32 %v5893, %v5909
    %v5926 = vadd.f32 %v5894, %v5910
    %v5927 = vadd.f32 %v5895, %v5911
    %v5928 = vadd.f32 %v5896, %v5912
    %v5929 = vadd.f32 %v5897, %v5913
    %v5930 = vadd.f32 %v5898, %v5914
    %v5931 = vadd.f32 %v5899, %v5915
    %v5932 = vadd.f32 %v5900, %v5916
    %v5933 = vadd.f32 %v5901, %v5917
    %v5934 = vadd.f32 %v5902, %v5918
    %v5935 = vadd.f32 %v5903, %v5919
    %v5936 = vadd.f32 %v5904, %v5920
    %v5937 = vmul.f32 %v3811, %v5921
    %v5938 = vmul.f32 %v3817, %v5922
    %v5939 = vmul.f32 %v3823, %v5923
    %v5940 = vmul.f32 %v3829, %v5924
    %v5941 = vmul.f32 %v3835, %v5925
    %v5942 = vmul.f32 %v3841, %v5926
    %v5943 = vmul.f32 %v3847, %v5927
    %v5944 = vmul.f32 %v3853, %v5928
    %v5945 = vmul.f32 %v3859, %v5929
    %v5946 = vmul.f32 %v3865, %v5930
    %v5947 = vmul.f32 %v3871, %v5931
    %v5948 = vmul.f32 %v3877, %v5932
    %v5949 = vmul.f32 %v3883, %v5933
    %v5950 = vmul.f32 %v3889, %v5934
    %v5951 = vmul.f32 %v3895, %v5935
    %v5952 = vmul.f32 %v3901, %v5936
    %v5953 = vmul.f32 %v1941, %v5796
    %v5954 = vmul.f32 %v1947, %v5802
    %v5955 = vmul.f32 %v1953, %v5808
    %v5956 = vmul.f32 %v1959, %v5814
    %v5957 = vmul.f32 %v1965, %v5820
    %v5958 = vmul.f32 %v1971, %v5826
    %v5959 = vmul.f32 %v1977, %v5832
    %v5960 = vmul.f32 %v1983, %v5838
    %v5961 = vmul.f32 %v1989, %v5844
    %v5962 = vmul.f32 %v1995, %v5850
    %v5963 = vmul.f32 %v2001, %v5856
    %v5964 = vmul.f32 %v2007, %v5862
    %v5965 = vmul.f32 %v2013, %v5868
    %v5966 = vmul.f32 %v2019, %v5874
    %v5967 = vmul.f32 %v2025, %v5880
    %v5968 = vmul.f32 %v2031, %v5886
    %v5969 = vmul.f32 %v2037, %v5700
    %v5970 = vmul.f32 %v2043, %v5706
    %v5971 = vmul.f32 %v2049, %v5712
    %v5972 = vmul.f32 %v2055, %v5718
    %v5973 = vmul.f32 %v2061, %v5724
    %v5974 = vmul.f32 %v2067, %v5730
    %v5975 = vmul.f32 %v2073, %v5736
    %v5976 = vmul.f32 %v2079, %v5742
    %v5977 = vmul.f32 %v2085, %v5748
    %v5978 = vmul.f32 %v2091, %v5754
    %v5979 = vmul.f32 %v2097, %v5760
    %v5980 = vmul.f32 %v2103, %v5766
    %v5981 = vmul.f32 %v2109, %v5772
    %v5982 = vmul.f32 %v2115, %v5778
    %v5983 = vmul.f32 %v2121, %v5784
    %v5984 = vmul.f32 %v2127, %v5790
    %v5985 = vsub.f32 %v5953, %v5969
    %v5986 = vsub.f32 %v5954, %v5970
    %v5987 = vsub.f32 %v5955, %v5971
    %v5988 = vsub.f32 %v5956, %v5972
    %v5989 = vsub.f32 %v5957, %v5973
    %v5990 = vsub.f32 %v5958, %v5974
    %v5991 = vsub.f32 %v5959, %v5975
    %v5992 = vsub.f32 %v5960, %v5976
    %v5993 = vsub.f32 %v5961, %v5977
    %v5994 = vsub.f32 %v5962, %v5978
    %v5995 = vsub.f32 %v5963, %v5979
    %v5996 = vsub.f32 %v5964, %v5980
    %v5997 = vsub.f32 %v5965, %v5981
    %v5998 = vsub.f32 %v5966, %v5982
    %v5999 = vsub.f32 %v5967, %v5983
    %v6000 = vsub.f32 %v5968, %v5984
    %v6001 = vmul.f32 %v3907, %v5985
    %v6002 = vmul.f32 %v3913, %v5986
    %v6003 = vmul.f32 %v3919, %v5987
    %v6004 = vmul.f32 %v3925, %v5988
    %v6005 = vmul.f32 %v3931, %v5989
    %v6006 = vmul.f32 %v3937, %v5990
    %v6007 = vmul.f32 %v3943, %v5991
    %v6008 = vmul.f32 %v3949, %v5992
    %v6009 = vmul.f32 %v3955, %v5993
    %v6010 = vmul.f32 %v3961, %v5994
    %v6011 = vmul.f32 %v3967, %v5995
    %v6012 = vmul.f32 %v3973, %v5996
    %v6013 = vmul.f32 %v3979, %v5997
    %v6014 = vmul.f32 %v3985, %v5998
    %v6015 = vmul.f32 %v3991, %v5999
    %v6016 = vmul.f32 %v3997, %v6000
    %v6017 = vadd.f32 %v5937, %v6001
    %v6018 = vadd.f32 %v5938, %v6002
    %v6019 = vadd.f32 %v5939, %v6003
    %v6020 = vadd.f32 %v5940, %v6004
    %v6021 = vadd.f32 %v5941, %v6005
    %v6022 = vadd.f32 %v5942, %v6006
    %v6023 = vadd.f32 %v5943, %v6007
    %v6024 = vadd.f32 %v5944, %v6008
    %v6025 = vadd.f32 %v5945, %v6009
    %v6026 = vadd.f32 %v5946, %v6010
    %v6027 = vadd.f32 %v5947, %v6011
    %v6028 = vadd.f32 %v5948, %v6012
    %v6029 = vadd.f32 %v5949, %v6013
    %v6030 = vadd.f32 %v5950, %v6014
    %v6031 = vadd.f32 %v5951, %v6015
    %v6032 = vadd.f32 %v5952, %v6016
    %v6033 = vadd.f32 %v6017, %v6018
    %v6034 = vadd.f32 %v6033, %v6019
    %v6035 = vadd.f32 %v6034, %v6020
    %v6036 = vadd.f32 %v6035, %v6021
    %v6037 = vadd.f32 %v6036, %v6022
    %v6038 = vadd.f32 %v6037, %v6023
    %v6039 = vadd.f32 %v6038, %v6024
    %v6040 = vadd.f32 %v6039, %v6025
    %v6041 = vadd.f32 %v6040, %v6026
    %v6042 = vadd.f32 %v6041, %v6027
    %v6043 = vadd.f32 %v6042, %v6028
    %v6044 = vadd.f32 %v6043, %v6029
    %v6045 = vadd.f32 %v6044, %v6030
    %v6046 = vadd.f32 %v6045, %v6031
    %v6047 = vadd.f32 %v6046, %v6032
    %v6048 = vrot.slane %v6047, 4
    %v6049 = vadd.f32 %v6047, %v6048
    %v6050 = vrot.slane %v6049, 2
    %v6051 = vadd.f32 %v6049, %v6050
    %v6052 = vrot.slane %v6051, 1
    %v6053 = vadd.f32 %v6051, %v6052
    %6054 = vst [vmem:[#allocation2] sm:$0x1] %v6053
    // Predicated region
    $region22: #{tpu_custom_call.1} parent=1 // pred_check
      _
    $region23: #{tpu_custom_call.1} parent=1 // pred_check_branch
      %6056 = sbr.rel (0) target = $region25
    $region24: #{tpu_custom_call.1} parent=1 // pred_region
      %s6058 = ssub.s32 16, 16
      %6059 = vsyncadd [#allocation3], %s6058
      %s6061 = sshll.u32 [#allocation2], 4
      %s6062 = int_to_ptr.vmem [resolvable:$true] %s6061
      %6064 = dma.vmem_to_hbm [thread:$0]  %s6062, 16, %s5, [#allocation3]
    $region25: #{tpu_custom_call.1} parent=1 // pred_fallthru
      _
    // Predicated region
    $region26: #{tpu_custom_call.1} parent=1 // pred_check
      _
    $region27: #{tpu_custom_call.1} parent=1 // pred_check_branch
      %6066 = sbr.rel (0) target = $region29
    $region28: #{tpu_custom_call.1} parent=1 // pred_region
      %6067 = dma.done [#allocation3], 16
    $region29: #{tpu_custom_call.1} parent=1 // pred_fallthru
      _
    %6068 = vsyncpa [#allocation3], 1

</llo_original>
